<compile_context>
chip_gen: v6e
topology: v6e:2x2x1
jax: 0.10.0
libtpu: 0.0.40
codegen_flags: <defaults>
</compile_context>

<pallas_src>
import jax
import jax.numpy as jnp
from jax.experimental import pallas as pl
from jax.experimental.pallas import tpu as pltpu


def _compiler_params(**kwargs):
    cls = getattr(pltpu, "CompilerParams", None) or getattr(pltpu, "TPUCompilerParams")
    return cls(**kwargs)


def _round_up(v, m):
    return (v + m - 1) // m * m


# ----------------------------------------------------------------------------
# Conv layer = one fused Pallas kernel:  out_t = relu(W @ patches_t + b)
# W: (O, K) bf16, patches_t: (K, M) bf16, b: (O, 1) f32  ->  out_t: (O, M) bf16
# M = B*OH*OW is the lane (minor) dim -> dense, unmasked stores.
# ----------------------------------------------------------------------------
def _conv_mm_kernel(w_ref, b_ref, p_ref, o_ref):
    acc = jnp.dot(w_ref[...], p_ref[...], preferred_element_type=jnp.float32)
    acc = acc + b_ref[...]                       # (O, 1) broadcasts along lanes
    o_ref[...] = jnp.maximum(acc, 0.0).astype(o_ref.dtype)


def _im2col_t(x_cm, k, stride):
    """x_cm: (C, B, H, W) -> (C*k*k, B*OH*OW); row (feature) order = (c, kh, kw)."""
    C, B, H, W = x_cm.shape
    OH = (H - k) // stride + 1
    OW = (W - k) // stride + 1
    slabs = []
    for i in range(k):
        for j in range(k):
            slabs.append(x_cm[:, :, i:i + stride * OH:stride, j:j + stride * OW:stride])
    p = jnp.stack(slabs, axis=1)                 # (C, k*k, B, OH, OW)
    return p.reshape(C * k * k, B * OH * OW), OH, OW


def conv2d_relu_cm(x_cm, w, b, *, k, stride, tile_m=512):
    """Fused conv + bias + ReLU on channel-major activations.

    x_cm: (C, B, H, W) bf16;  w: (O, C*k*k) bf16;  b: (O, 1) f32
    returns (O, B, OH, OW) bf16 (channel-major, ready for the next layer).
    """
    C, B, H, W = x_cm.shape
    O, K = w.shape
    patches, OH, OW = _im2col_t(x_cm, k, stride)          # (K, M) bf16
    M = patches.shape[1]
    tm = min(tile_m, _round_up(M, 128))                   # lane-aligned M tile
    grid = (pl.cdiv(M, tm),)

    out_t = pl.pallas_call(
        _conv_mm_kernel,
        out_shape=jax.ShapeDtypeStruct((O, M), jnp.bfloat16),
        grid=grid,
        in_specs=[
            pl.BlockSpec((O, K), lambda m: (0, 0)),       # weights: resident across M tiles
            pl.BlockSpec((O, 1), lambda m: (0, 0)),       # bias: resident
            pl.BlockSpec((K, tm), lambda m: (0, m)),      # patch tile (lane-dense M)
        ],
        out_specs=pl.BlockSpec((O, tm), lambda m: (0, m)),
        compiler_params=_compiler_params(dimension_semantics=("parallel",)),
    )(w, b, patches)

    return out_t.reshape(O, B, OH, OW)


# ----------------------------------------------------------------------------
# Fused FC stack: fc1 (with folded concat) -> ReLU -> fc2 -> ReLU -> fc3
# ----------------------------------------------------------------------------
def _fc_stack_kernel(xs_ref, act_ref, w1s_ref, w1a_ref, b1_ref,
                     w2_ref, b2_ref, w3_ref, b3_ref, o_ref):
    h = jnp.dot(xs_ref[...], w1s_ref[...], preferred_element_type=jnp.float32)
    h = h + jnp.dot(act_ref[...], w1a_ref[...], preferred_element_type=jnp.float32)
    h = jnp.maximum(h + b1_ref[...], 0.0).astype(jnp.bfloat16)
    h = jnp.dot(h, w2_ref[...], preferred_element_type=jnp.float32) + b2_ref[...]
    h = jnp.maximum(h, 0.0).astype(jnp.bfloat16)
    o_ref[...] = jnp.dot(h, w3_ref[...], preferred_element_type=jnp.float32) + b3_ref[...]


def fc_stack(xs, action, p):
    """xs: (B, 1536) bf16, action: (B, A) bf16 -> (B, 1) f32, single kernel."""
    B, F = xs.shape
    A = action.shape[1]
    n1 = p["fc1_ws"].shape[1]
    n2 = p["fc2_w"].shape[1]

    def full(shape):
        return pl.BlockSpec(shape, lambda i: (0,) * len(shape))

    return pl.pallas_call(
        _fc_stack_kernel,
        out_shape=jax.ShapeDtypeStruct((B, 1), jnp.float32),
        grid=(1,),
        in_specs=[
            full((B, F)), full((B, A)),
            full((F, n1)), full((A, n1)), full((1, n1)),
            full((n1, n2)), full((1, n2)),
            full((n2, 1)), full((1, 1)),
        ],
        out_specs=full((B, 1)),
    )(xs, action, p["fc1_ws"], p["fc1_wa"], p["fc1_b"],
      p["fc2_w"], p["fc2_b"], p["fc3_w"], p["fc3_b"])


# ----------------------------------------------------------------------------
# Parameters (PyTorch-default-style uniform init; bf16 weights, f32 biases,
# all layout/dtype conversion hoisted to init).
# ----------------------------------------------------------------------------
def _uniform(key, shape, bound):
    return jax.random.uniform(key, shape, jnp.float32, -bound, bound)


def init_critic_params(key, state_size, action_size, fc1_units=128, fc2_units=128):
    keys = jax.random.split(key, 12)
    params = {}

    def conv_params(kw_key, kb_key, in_c, out_c, k):
        fan_in = in_c * k * k
        bound = 1.0 / (fan_in ** 0.5)
        w = _uniform(kw_key, (out_c, in_c, k, k), bound)            # torch (O, I, kh, kw)
        w = w.reshape(out_c, fan_in).astype(jnp.bfloat16)           # (O, K), K order (c,kh,kw)
        b = _uniform(kb_key, (out_c, 1), bound)                     # (O, 1) f32
        return w, b

    params["conv1_w"], params["conv1_b"] = conv_params(keys[0], keys[1], state_size, 6, 8)
    params["conv2_w"], params["conv2_b"] = conv_params(keys[2], keys[3], 6, 12, 5)
    params["conv3_w"], params["conv3_b"] = conv_params(keys[4], keys[5], 12, 24, 3)

    def fc_params(kw_key, kb_key, fan_in, fan_out):
        bound = 1.0 / (fan_in ** 0.5)
        w = _uniform(kw_key, (fan_in, fan_out), bound).astype(jnp.bfloat16)
        b = _uniform(kb_key, (1, fan_out), bound)
        return w, b

    flat = 8 * 8 * 24
    w1, params["fc1_b"] = fc_params(keys[6], keys[7], flat + action_size, fc1_units)
    params["fc1_ws"] = w1[:flat]        # multiplies the flattened conv features
    params["fc1_wa"] = w1[flat:]        # multiplies the action (concat folded into kernel)
    params["fc2_w"], params["fc2_b"] = fc_params(keys[8], keys[9], fc1_units, fc2_units)
    params["fc3_w"], params["fc3_b"] = fc_params(keys[10], keys[11], fc2_units, 1)
    return params


# ----------------------------------------------------------------------------
# Forward pass (matches Critic.forward).
# ----------------------------------------------------------------------------
def critic_forward(params, state, action):
    # state: (B, state_size, 80, 80) NCHW f32 ; action: (B, action_size) f32
    B = state.shape[0]
    # Single boundary layout/dtype change: NCHW -> channel-major (C, B, H, W) bf16.
    x = jnp.transpose(state, (1, 0, 2, 3)).astype(jnp.bfloat16)
    x = conv2d_relu_cm(x, params["conv1_w"], params["conv1_b"], k=8, stride=2)   # (6,  B, 37, 37)
    x = conv2d_relu_cm(x, params["conv2_w"], params["conv2_b"], k=5, stride=2)   # (12, B, 17, 17)
    x = conv2d_relu_cm(x, params["conv3_w"], params["conv3_b"], k=3, stride=2)   # (24, B,  8,  8)
    # PyTorch flattens NCHW -> xs[b, c*64 + y*8 + x]; tiny (B,1536) transpose.
    xs = jnp.transpose(x, (1, 0, 2, 3)).reshape(B, -1)                           # (B, 1536) bf16
    return fc_stack(xs, action.astype(jnp.bfloat16), params)                     # (B, 1) f32


if __name__ == "__main__":
    # The dense4 layer requires the conv stack to flatten to 8*8*24, which
    # forces an 80x80 spatial input (valid convs with k=8,5,3 / stride 2).
    B, state_size, action_size = 2, 3, 4

    root = jax.random.PRNGKey(0)
    k_params, k_state, k_action = jax.random.split(root, 3)

    params = init_critic_params(k_params, state_size, action_size)
    state = jax.random.normal(k_state, (B, state_size, 80, 80), jnp.float32)
    action = jax.random.normal(k_action, (B, action_size), jnp.float32)

    fwd = jax.jit(critic_forward)
    out = jax.block_until_ready(fwd(params, state, action))

    assert out.shape == (B, 1), out.shape
    assert bool(jnp.all(jnp.isfinite(out)))
    print("KERNEL_OK")
</pallas_src>

<mosaic_0001>
module attributes {stable_mosaic.version = 11 : i64} {
  func.func @_conv_mm_kernel(%arg0: i32, %arg1: memref<6x192xbf16, #tpu.memory_space<vmem>>, %arg2: memref<6x1xf32, #tpu.memory_space<vmem>>, %arg3: memref<192x512xbf16, #tpu.memory_space<vmem>>, %arg4: memref<6x512xbf16, #tpu.memory_space<vmem>>) attributes {dimension_semantics = [#tpu.dimension_semantics<parallel>], iteration_bounds = array<i64: 6>, scalar_prefetch = 0 : i64, scratch_operands = 0 : i64, tpu.core_type = #tpu.core_type<tc>, window_params = [{pipeline_mode = #tpu.pipeline_mode<synchronous>, transform_indices = @transform_0, window_bounds = array<i64: 6, 192>}, {pipeline_mode = #tpu.pipeline_mode<synchronous>, transform_indices = @transform_1, window_bounds = array<i64: 6, 1>}, {transform_indices = @transform_2, window_bounds = array<i64: 192, 512>}, {transform_indices = @transform_3, window_bounds = array<i64: 6, 512>}]} {
    %c0 = arith.constant 0 : index
    %c0_0 = arith.constant 0 : index
    %0 = vector.load %arg1[%c0, %c0_0] : memref<6x192xbf16, #tpu.memory_space<vmem>>, vector<6x192xbf16>
    %c0_1 = arith.constant 0 : index
    %c0_2 = arith.constant 0 : index
    %1 = vector.load %arg3[%c0_1, %c0_2] : memref<192x512xbf16, #tpu.memory_space<vmem>>, vector<192x512xbf16>
    %cst = arith.constant dense<0.000000e+00> : vector<6x512xf32>
    %2 = tpu.matmul %0, %1, %cst {dimension_numbers = #tpu.dot_dimension_numbers<[1], [0], [0], [1], [0, 0, 1, 1], [], []>} : vector<6x192xbf16>, vector<192x512xbf16>, vector<6x512xf32> -> vector<6x512xf32>
    %c0_3 = arith.constant 0 : index
    %c0_4 = arith.constant 0 : index
    %3 = vector.load %arg2[%c0_3, %c0_4] : memref<6x1xf32, #tpu.memory_space<vmem>>, vector<6x1xf32>
    %4 = vector.broadcast %3 : vector<6x1xf32> to vector<6x512xf32>
    %5 = arith.addf %2, %4 : vector<6x512xf32>
    %cst_5 = arith.constant 0.000000e+00 : f32
    %6 = vector.broadcast %cst_5 : f32 to vector<6x512xf32>
    %7 = arith.maximumf %5, %6 : vector<6x512xf32>
    %8 = arith.truncf %7 : vector<6x512xf32> to vector<6x512xbf16>
    %c0_6 = arith.constant 0 : index
    %c0_7 = arith.constant 0 : index
    %9 = vector.load %arg4[%c0_6, %c0_7] : memref<6x512xbf16, #tpu.memory_space<vmem>>, vector<6x512xbf16>
    tpu.vector_store %arg4[%c0_6, %c0_7], %8 {strides = array<i32>} : memref<6x512xbf16, #tpu.memory_space<vmem>>, vector<6x512xbf16>,
    return
  }
  func.func @transform_0(%arg0: i32) -> (i32, i32) {
    %c0_i32 = arith.constant 0 : i32
    %c0_i32_0 = arith.constant 0 : i32
    %c0_i32_1 = arith.constant 0 : i32
    return %c0_i32, %c0_i32_0 : i32, i32
  }
  func.func @transform_1(%arg0: i32) -> (i32, i32) {
    %c0_i32 = arith.constant 0 : i32
    %c0_i32_0 = arith.constant 0 : i32
    %c0_i32_1 = arith.constant 0 : i32
    return %c0_i32, %c0_i32_0 : i32, i32
  }
  func.func @transform_2(%arg0: i32) -> (i32, i32) {
    %c0_i32 = arith.constant 0 : i32
    %c0_i32_0 = arith.constant 0 : i32
    return %c0_i32, %arg0 : i32, i32
  }
  func.func @transform_3(%arg0: i32) -> (i32, i32) {
    %c0_i32 = arith.constant 0 : i32
    %c0_i32_0 = arith.constant 0 : i32
    return %c0_i32, %arg0 : i32, i32
  }
}

module attributes {stable_mosaic.version = 11 : i64} {
  func.func @_conv_mm_kernel(%arg0: i32, %arg1: memref<12x150xbf16, #tpu.memory_space<vmem>>, %arg2: memref<12x1xf32, #tpu.memory_space<vmem>>, %arg3: memref<150x512xbf16, #tpu.memory_space<vmem>>, %arg4: memref<12x512xbf16, #tpu.memory_space<vmem>>) attributes {dimension_semantics = [#tpu.dimension_semantics<parallel>], iteration_bounds = array<i64: 2>, scalar_prefetch = 0 : i64, scratch_operands = 0 : i64, tpu.core_type = #tpu.core_type<tc>, window_params = [{pipeline_mode = #tpu.pipeline_mode<synchronous>, transform_indices = @transform_0, window_bounds = array<i64: 12, 150>}, {pipeline_mode = #tpu.pipeline_mode<synchronous>, transform_indices = @transform_1, window_bounds = array<i64: 12, 1>}, {transform_indices = @transform_2, window_bounds = array<i64: 150, 512>}, {transform_indices = @transform_3, window_bounds = array<i64: 12, 512>}]} {
    %c0 = arith.constant 0 : index
    %c0_0 = arith.constant 0 : index
    %0 = vector.load %arg1[%c0, %c0_0] : memref<12x150xbf16, #tpu.memory_space<vmem>>, vector<12x150xbf16>
    %c0_1 = arith.constant 0 : index
    %c0_2 = arith.constant 0 : index
    %1 = vector.load %arg3[%c0_1, %c0_2] : memref<150x512xbf16, #tpu.memory_space<vmem>>, vector<150x512xbf16>
    %cst = arith.constant dense<0.000000e+00> : vector<12x512xf32>
    %2 = tpu.matmul %0, %1, %cst {dimension_numbers = #tpu.dot_dimension_numbers<[1], [0], [0], [1], [0, 0, 1, 1], [], []>} : vector<12x150xbf16>, vector<150x512xbf16>, vector<12x512xf32> -> vector<12x512xf32>
    %c0_3 = arith.constant 0 : index
    %c0_4 = arith.constant 0 : index
    %3 = vector.load %arg2[%c0_3, %c0_4] : memref<12x1xf32, #tpu.memory_space<vmem>>, vector<12x1xf32>
    %4 = vector.broadcast %3 : vector<12x1xf32> to vector<12x512xf32>
    %5 = arith.addf %2, %4 : vector<12x512xf32>
    %cst_5 = arith.constant 0.000000e+00 : f32
    %6 = vector.broadcast %cst_5 : f32 to vector<12x512xf32>
    %7 = arith.maximumf %5, %6 : vector<12x512xf32>
    %8 = arith.truncf %7 : vector<12x512xf32> to vector<12x512xbf16>
    %c0_6 = arith.constant 0 : index
    %c0_7 = arith.constant 0 : index
    %9 = vector.load %arg4[%c0_6, %c0_7] : memref<12x512xbf16, #tpu.memory_space<vmem>>, vector<12x512xbf16>
    tpu.vector_store %arg4[%c0_6, %c0_7], %8 {strides = array<i32>} : memref<12x512xbf16, #tpu.memory_space<vmem>>, vector<12x512xbf16>,
    return
  }
  func.func @transform_0(%arg0: i32) -> (i32, i32) {
    %c0_i32 = arith.constant 0 : i32
    %c0_i32_0 = arith.constant 0 : i32
    %c0_i32_1 = arith.constant 0 : i32
    return %c0_i32, %c0_i32_0 : i32, i32
  }
  func.func @transform_1(%arg0: i32) -> (i32, i32) {
    %c0_i32 = arith.constant 0 : i32
    %c0_i32_0 = arith.constant 0 : i32
    %c0_i32_1 = arith.constant 0 : i32
    return %c0_i32, %c0_i32_0 : i32, i32
  }
  func.func @transform_2(%arg0: i32) -> (i32, i32) {
    %c0_i32 = arith.constant 0 : i32
    %c0_i32_0 = arith.constant 0 : i32
    return %c0_i32, %arg0 : i32, i32
  }
  func.func @transform_3(%arg0: i32) -> (i32, i32) {
    %c0_i32 = arith.constant 0 : i32
    %c0_i32_0 = arith.constant 0 : i32
    return %c0_i32, %arg0 : i32, i32
  }
}

module attributes {stable_mosaic.version = 11 : i64} {
  func.func @_conv_mm_kernel(%arg0: i32, %arg1: memref<24x108xbf16, #tpu.memory_space<vmem>>, %arg2: memref<24x1xf32, #tpu.memory_space<vmem>>, %arg3: memref<108x128xbf16, #tpu.memory_space<vmem>>, %arg4: memref<24x128xbf16, #tpu.memory_space<vmem>>) attributes {dimension_semantics = [#tpu.dimension_semantics<parallel>], iteration_bounds = array<i64: 1>, scalar_prefetch = 0 : i64, scratch_operands = 0 : i64, tpu.core_type = #tpu.core_type<tc>, window_params = [{pipeline_mode = #tpu.pipeline_mode<synchronous>, transform_indices = @transform_0, window_bounds = array<i64: 24, 108>}, {pipeline_mode = #tpu.pipeline_mode<synchronous>, transform_indices = @transform_1, window_bounds = array<i64: 24, 1>}, {transform_indices = @transform_2, window_bounds = array<i64: 108, 128>}, {transform_indices = @transform_3, window_bounds = array<i64: 24, 128>}]} {
    %c0 = arith.constant 0 : index
    %c0_0 = arith.constant 0 : index
    %0 = vector.load %arg1[%c0, %c0_0] : memref<24x108xbf16, #tpu.memory_space<vmem>>, vector<24x108xbf16>
    %c0_1 = arith.constant 0 : index
    %c0_2 = arith.constant 0 : index
    %1 = vector.load %arg3[%c0_1, %c0_2] : memref<108x128xbf16, #tpu.memory_space<vmem>>, vector<108x128xbf16>
    %cst = arith.constant dense<0.000000e+00> : vector<24x128xf32>
    %2 = tpu.matmul %0, %1, %cst {dimension_numbers = #tpu.dot_dimension_numbers<[1], [0], [0], [1], [0, 0, 1, 1], [], []>} : vector<24x108xbf16>, vector<108x128xbf16>, vector<24x128xf32> -> vector<24x128xf32>
    %c0_3 = arith.constant 0 : index
    %c0_4 = arith.constant 0 : index
    %3 = vector.load %arg2[%c0_3, %c0_4] : memref<24x1xf32, #tpu.memory_space<vmem>>, vector<24x1xf32>
    %4 = vector.broadcast %3 : vector<24x1xf32> to vector<24x128xf32>
    %5 = arith.addf %2, %4 : vector<24x128xf32>
    %cst_5 = arith.constant 0.000000e+00 : f32
    %6 = vector.broadcast %cst_5 : f32 to vector<24x128xf32>
    %7 = arith.maximumf %5, %6 : vector<24x128xf32>
    %8 = arith.truncf %7 : vector<24x128xf32> to vector<24x128xbf16>
    %c0_6 = arith.constant 0 : index
    %c0_7 = arith.constant 0 : index
    %9 = vector.load %arg4[%c0_6, %c0_7] : memref<24x128xbf16, #tpu.memory_space<vmem>>, vector<24x128xbf16>
    tpu.vector_store %arg4[%c0_6, %c0_7], %8 {strides = array<i32>} : memref<24x128xbf16, #tpu.memory_space<vmem>>, vector<24x128xbf16>,
    return
  }
  func.func @transform_0(%arg0: i32) -> (i32, i32) {
    %c0_i32 = arith.constant 0 : i32
    %c0_i32_0 = arith.constant 0 : i32
    %c0_i32_1 = arith.constant 0 : i32
    return %c0_i32, %c0_i32_0 : i32, i32
  }
  func.func @transform_1(%arg0: i32) -> (i32, i32) {
    %c0_i32 = arith.constant 0 : i32
    %c0_i32_0 = arith.constant 0 : i32
    %c0_i32_1 = arith.constant 0 : i32
    return %c0_i32, %c0_i32_0 : i32, i32
  }
  func.func @transform_2(%arg0: i32) -> (i32, i32) {
    %c0_i32 = arith.constant 0 : i32
    %c0_i32_0 = arith.constant 0 : i32
    return %c0_i32, %arg0 : i32, i32
  }
  func.func @transform_3(%arg0: i32) -> (i32, i32) {
    %c0_i32 = arith.constant 0 : i32
    %c0_i32_0 = arith.constant 0 : i32
    return %c0_i32, %arg0 : i32, i32
  }
}

module attributes {stable_mosaic.version = 11 : i64} {
  func.func @_fc_stack_kernel(%arg0: i32, %arg1: memref<2x1536xbf16, #tpu.memory_space<vmem>>, %arg2: memref<2x4xbf16, #tpu.memory_space<vmem>>, %arg3: memref<1536x128xbf16, #tpu.memory_space<vmem>>, %arg4: memref<4x128xbf16, #tpu.memory_space<vmem>>, %arg5: memref<1x128xf32, #tpu.memory_space<vmem>>, %arg6: memref<128x128xbf16, #tpu.memory_space<vmem>>, %arg7: memref<1x128xf32, #tpu.memory_space<vmem>>, %arg8: memref<128x1xbf16, #tpu.memory_space<vmem>>, %arg9: memref<1x1xf32, #tpu.memory_space<vmem>>, %arg10: memref<2x1xf32, #tpu.memory_space<vmem>>) attributes {dimension_semantics = [#tpu.dimension_semantics<arbitrary>], iteration_bounds = array<i64: 1>, scalar_prefetch = 0 : i64, scratch_operands = 0 : i64, tpu.core_type = #tpu.core_type<tc>, window_params = [{pipeline_mode = #tpu.pipeline_mode<synchronous>, transform_indices = @transform_0, window_bounds = array<i64: 2, 1536>}, {pipeline_mode = #tpu.pipeline_mode<synchronous>, transform_indices = @transform_1, window_bounds = array<i64: 2, 4>}, {pipeline_mode = #tpu.pipeline_mode<synchronous>, transform_indices = @transform_2, window_bounds = array<i64: 1536, 128>}, {pipeline_mode = #tpu.pipeline_mode<synchronous>, transform_indices = @transform_3, window_bounds = array<i64: 4, 128>}, {pipeline_mode = #tpu.pipeline_mode<synchronous>, transform_indices = @transform_4, window_bounds = array<i64: 1, 128>}, {pipeline_mode = #tpu.pipeline_mode<synchronous>, transform_indices = @transform_5, window_bounds = array<i64: 128, 128>}, {pipeline_mode = #tpu.pipeline_mode<synchronous>, transform_indices = @transform_6, window_bounds = array<i64: 1, 128>}, {pipeline_mode = #tpu.pipeline_mode<synchronous>, transform_indices = @transform_7, window_bounds = array<i64: 128, 1>}, {pipeline_mode = #tpu.pipeline_mode<synchronous>, transform_indices = @transform_8, window_bounds = array<i64: 1, 1>}, {pipeline_mode = #tpu.pipeline_mode<synchronous>, transform_indices = @transform_9, window_bounds = array<i64: 2, 1>}]} {
    %c0 = arith.constant 0 : index
    %c0_0 = arith.constant 0 : index
    %0 = vector.load %arg1[%c0, %c0_0] : memref<2x1536xbf16, #tpu.memory_space<vmem>>, vector<2x1536xbf16>
    %c0_1 = arith.constant 0 : index
    %c0_2 = arith.constant 0 : index
    %1 = vector.load %arg3[%c0_1, %c0_2] : memref<1536x128xbf16, #tpu.memory_space<vmem>>, vector<1536x128xbf16>
    %cst = arith.constant dense<0.000000e+00> : vector<2x128xf32>
    %2 = tpu.matmul %0, %1, %cst {dimension_numbers = #tpu.dot_dimension_numbers<[1], [0], [0], [1], [0, 0, 1, 1], [], []>} : vector<2x1536xbf16>, vector<1536x128xbf16>, vector<2x128xf32> -> vector<2x128xf32>
    %c0_3 = arith.constant 0 : index
    %c0_4 = arith.constant 0 : index
    %3 = vector.load %arg2[%c0_3, %c0_4] : memref<2x4xbf16, #tpu.memory_space<vmem>>, vector<2x4xbf16>
    %c0_5 = arith.constant 0 : index
    %c0_6 = arith.constant 0 : index
    %4 = vector.load %arg4[%c0_5, %c0_6] : memref<4x128xbf16, #tpu.memory_space<vmem>>, vector<4x128xbf16>
    %cst_7 = arith.constant dense<0.000000e+00> : vector<2x128xf32>
    %5 = tpu.matmul %3, %4, %cst_7 {dimension_numbers = #tpu.dot_dimension_numbers<[1], [0], [0], [1], [0, 0, 1, 1], [], []>} : vector<2x4xbf16>, vector<4x128xbf16>, vector<2x128xf32> -> vector<2x128xf32>
    %6 = arith.addf %2, %5 : vector<2x128xf32>
    %c0_8 = arith.constant 0 : index
    %c0_9 = arith.constant 0 : index
    %7 = vector.load %arg5[%c0_8, %c0_9] : memref<1x128xf32, #tpu.memory_space<vmem>>, vector<1x128xf32>
    %8 = vector.broadcast %7 : vector<1x128xf32> to vector<2x128xf32>
    %9 = arith.addf %6, %8 : vector<2x128xf32>
    %cst_10 = arith.constant 0.000000e+00 : f32
    %10 = vector.broadcast %cst_10 : f32 to vector<2x128xf32>
    %11 = arith.maximumf %9, %10 : vector<2x128xf32>
    %12 = arith.truncf %11 : vector<2x128xf32> to vector<2x128xbf16>
    %c0_11 = arith.constant 0 : index
    %c0_12 = arith.constant 0 : index
    %13 = vector.load %arg6[%c0_11, %c0_12] : memref<128x128xbf16, #tpu.memory_space<vmem>>, vector<128x128xbf16>
    %cst_13 = arith.constant dense<0.000000e+00> : vector<2x128xf32>
    %14 = tpu.matmul %12, %13, %cst_13 {dimension_numbers = #tpu.dot_dimension_numbers<[1], [0], [0], [1], [0, 0, 1, 1], [], []>} : vector<2x128xbf16>, vector<128x128xbf16>, vector<2x128xf32> -> vector<2x128xf32>
    %c0_14 = arith.constant 0 : index
    %c0_15 = arith.constant 0 : index
    %15 = vector.load %arg7[%c0_14, %c0_15] : memref<1x128xf32, #tpu.memory_space<vmem>>, vector<1x128xf32>
    %16 = vector.broadcast %15 : vector<1x128xf32> to vector<2x128xf32>
    %17 = arith.addf %14, %16 : vector<2x128xf32>
    %cst_16 = arith.constant 0.000000e+00 : f32
    %18 = vector.broadcast %cst_16 : f32 to vector<2x128xf32>
    %19 = arith.maximumf %17, %18 : vector<2x128xf32>
    %20 = arith.truncf %19 : vector<2x128xf32> to vector<2x128xbf16>
    %c0_17 = arith.constant 0 : index
    %c0_18 = arith.constant 0 : index
    %21 = vector.load %arg8[%c0_17, %c0_18] : memref<128x1xbf16, #tpu.memory_space<vmem>>, vector<128x1xbf16>
    %cst_19 = arith.constant dense<0.000000e+00> : vector<2x1xf32>
    %22 = tpu.matmul %20, %21, %cst_19 {dimension_numbers = #tpu.dot_dimension_numbers<[1], [0], [0], [1], [0, 0, 1, 1], [], []>} : vector<2x128xbf16>, vector<128x1xbf16>, vector<2x1xf32> -> vector<2x1xf32>
    %c0_20 = arith.constant 0 : index
    %c0_21 = arith.constant 0 : index
    %23 = vector.load %arg9[%c0_20, %c0_21] : memref<1x1xf32, #tpu.memory_space<vmem>>, vector<1x1xf32>
    %24 = vector.broadcast %23 : vector<1x1xf32> to vector<2x1xf32>
    %25 = arith.addf %22, %24 : vector<2x1xf32>
    %c0_22 = arith.constant 0 : index
    %c0_23 = arith.constant 0 : index
    %26 = vector.load %arg10[%c0_22, %c0_23] : memref<2x1xf32, #tpu.memory_space<vmem>>, vector<2x1xf32>
    tpu.vector_store %arg10[%c0_22, %c0_23], %25 {strides = array<i32>} : memref<2x1xf32, #tpu.memory_space<vmem>>, vector<2x1xf32>,
    return
  }
  func.func @transform_0(%arg0: i32) -> (i32, i32) {
    %c0_i32 = arith.constant 0 : i32
    %c0_i32_0 = arith.constant 0 : i32
    %c0_i32_1 = arith.constant 0 : i32
    return %c0_i32, %c0_i32_0 : i32, i32
  }
  func.func @transform_1(%arg0: i32) -> (i32, i32) {
    %c0_i32 = arith.constant 0 : i32
    %c0_i32_0 = arith.constant 0 : i32
    %c0_i32_1 = arith.constant 0 : i32
    return %c0_i32, %c0_i32_0 : i32, i32
  }
  func.func @transform_2(%arg0: i32) -> (i32, i32) {
    %c0_i32 = arith.constant 0 : i32
    %c0_i32_0 = arith.constant 0 : i32
    %c0_i32_1 = arith.constant 0 : i32
    return %c0_i32, %c0_i32_0 : i32, i32
  }
  func.func @transform_3(%arg0: i32) -> (i32, i32) {
    %c0_i32 = arith.constant 0 : i32
    %c0_i32_0 = arith.constant 0 : i32
    %c0_i32_1 = arith.constant 0 : i32
    return %c0_i32, %c0_i32_0 : i32, i32
  }
  func.func @transform_4(%arg0: i32) -> (i32, i32) {
    %c0_i32 = arith.constant 0 : i32
    %c0_i32_0 = arith.constant 0 : i32
    %c0_i32_1 = arith.constant 0 : i32
    return %c0_i32, %c0_i32_0 : i32, i32
  }
  func.func @transform_5(%arg0: i32) -> (i32, i32) {
    %c0_i32 = arith.constant 0 : i32
    %c0_i32_0 = arith.constant 0 : i32
    %c0_i32_1 = arith.constant 0 : i32
    return %c0_i32, %c0_i32_0 : i32, i32
  }
  func.func @transform_6(%arg0: i32) -> (i32, i32) {
    %c0_i32 = arith.constant 0 : i32
    %c0_i32_0 = arith.constant 0 : i32
    %c0_i32_1 = arith.constant 0 : i32
    return %c0_i32, %c0_i32_0 : i32, i32
  }
  func.func @transform_7(%arg0: i32) -> (i32, i32) {
    %c0_i32 = arith.constant 0 : i32
    %c0_i32_0 = arith.constant 0 : i32
    %c0_i32_1 = arith.constant 0 : i32
    return %c0_i32, %c0_i32_0 : i32, i32
  }
  func.func @transform_8(%arg0: i32) -> (i32, i32) {
    %c0_i32 = arith.constant 0 : i32
    %c0_i32_0 = arith.constant 0 : i32
    %c0_i32_1 = arith.constant 0 : i32
    return %c0_i32, %c0_i32_0 : i32, i32
  }
  func.func @transform_9(%arg0: i32) -> (i32, i32) {
    %c0_i32 = arith.constant 0 : i32
    %c0_i32_0 = arith.constant 0 : i32
    %c0_i32_1 = arith.constant 0 : i32
    return %c0_i32, %c0_i32_0 : i32, i32
  }
}

</mosaic_0001>

<llo_original>
// kernel: critic_forward.4
$region0: #{critic_forward.4}
  #allocation0 [shape = 'u32[]', space=smem, size = 0x4, offset = 0x4, fixed_abs, tag = 'smem constant byte address 0x4 - core index']
  #allocation1 [shape = 'u32[144,128]{1,0:T(1,128)}', space=vmem, size = 0x12000, scoped, tag = 'internal scratch']
  %s0 = inlined_call_operand.vmem [shape: bf16[6,192], index: 0, kind: input, shape index: {}]
  %s1 = inlined_call_operand.vmem [shape: f32[6,1], index: 1, kind: input, shape index: {}]
  %s2 = inlined_call_operand.vmem [shape: bf16[192,2738], index: 2, kind: input, shape index: {}]
  %s3 = inlined_call_operand.vmem [shape: bf16[6,2738], index: 3, kind: output, shape index: {}]
  %s4 = sld [smem:[#allocation0]]
  $region173: #{critic_forward.4} parent=0
    _
  %s6 = ssub.s32 1, %s4
  %s7 = scalar_select 0, %s6, %s4
  $region1: #{critic_forward.4} parent=0
    #allocation2 [shape = 'u8[393216]{0}', space=vmem, size = 0x60000, scoped, tag = 'input window, operand 2']
    #allocation3 [shape = 'u8[16384]{0}', space=vmem, size = 0x4000, scoped, tag = 'output window, operand 0']
    loop: start=0, step=1, limit=8
    $region2: #{critic_forward.4} parent=1 // loop_pre_header
      _
    $region3: #{critic_forward.4} parent=1 // loop_header
      %s9 = sphi 0, %s13
      %p10 = scmp.ge.s32.totalorder %s9, 8
      %s17 = sphi 0, %s17
      %s19 = sphi 0, %s17
      %s20 = sphi 0, %s19
      %s34 = sphi 0, %s20
      %s38 = sphi 0, %s38
      %s40 = sphi 0, %s38
      %s41 = sphi 0, %s40
      %s55 = sphi 0, %s41
      %s61 = sphi 0, %s63
      %s64 = sphi 0, %s61
      %s65 = sphi 0, %s64
      %s81 = sphi 0, %s65
      %s87 = sphi 0, %s89
      %s90 = sphi 0, %s87
      %s91 = sphi 0, %s90
      %s107 = sphi 0, %s91
    $region4: #{critic_forward.4} parent=1 // loop_header_branch
      %12 = sbr.rel (%p10) target = $region8
    $region5: #{critic_forward.4} parent=1 // loop_body
      %s14 = ssub.s32 %s9, 1
      %s15 = ssub.s32 %s9, 2
      %s16 = sadd.s32 %s9, 1
      %s18 = sadd.s32 %s17, 1
      %p21 = scmp.eq.s32.totalorder %s9, 5
      %p22 = scmp.ne.s32.totalorder %s17, %s19
      %p23 = scmp.eq.s32.totalorder %s9, 0
      %p24 = por %p22, %p23
      %p25 = scmp.ne.s32.totalorder %s17, %s19
      %p26 = scmp.eq.s32.totalorder %s14, 5
      %p27 = por %p25, %p26
      %p28 = scmp.ne.s32.totalorder %s19, %s20
      %p29 = scmp.eq.s32.totalorder %s14, 0
      %p30 = por %p28, %p29
      %p31 = scmp.ne.s32.totalorder %s19, %s20
      %p32 = scmp.eq.s32.totalorder %s15, 5
      %p33 = por %p31, %p32
      %p35 = scmp.ne.s32.totalorder %s20, %s34
      %p36 = scmp.eq.s32.totalorder %s15, 0
      %p37 = por %p35, %p36
      %s39 = sadd.s32 %s38, 1
      %p42 = scmp.eq.s32.totalorder %s9, 5
      %p43 = scmp.ne.s32.totalorder %s38, %s40
      %p44 = scmp.eq.s32.totalorder %s9, 0
      %p45 = por %p43, %p44
      %p46 = scmp.ne.s32.totalorder %s38, %s40
      %p47 = scmp.eq.s32.totalorder %s14, 5
      %p48 = por %p46, %p47
      %p49 = scmp.ne.s32.totalorder %s40, %s41
      %p50 = scmp.eq.s32.totalorder %s14, 0
      %p51 = por %p49, %p50
      %p52 = scmp.ne.s32.totalorder %s40, %s41
      %p53 = scmp.eq.s32.totalorder %s15, 5
      %p54 = por %p52, %p53
      %p56 = scmp.ne.s32.totalorder %s41, %s55
      %p57 = scmp.eq.s32.totalorder %s15, 0
      %p58 = por %p56, %p57
      %s59 = ssub.s32 %s9, %s16
      %p60 = scmp.eq.s32.totalorder %s59, 0
      %s62 = sadd.s32 %s61, 1
      %s63 = scalar_select %p60, %s61, %s62
      %p66 = pneg %p60
      %p67 = scmp.eq.s32.totalorder %s9, 5
      %p68 = por %p66, %p67
      %p69 = scmp.ne.s32.totalorder %s61, %s64
      %p70 = scmp.eq.s32.totalorder %s9, 0
      %p71 = por %p69, %p70
      %p72 = scmp.ne.s32.totalorder %s61, %s64
      %p73 = scmp.eq.s32.totalorder %s14, 5
      %p74 = por %p72, %p73
      %p75 = scmp.ne.s32.totalorder %s64, %s65
      %p76 = scmp.eq.s32.totalorder %s14, 0
      %p77 = por %p75, %p76
      %p78 = scmp.ne.s32.totalorder %s64, %s65
      %p79 = scmp.eq.s32.totalorder %s15, 5
      %p80 = por %p78, %p79
      %p82 = scmp.ne.s32.totalorder %s65, %s81
      %p83 = scmp.eq.s32.totalorder %s15, 0
      %p84 = por %p82, %p83
      %s85 = ssub.s32 %s9, %s16
      %p86 = scmp.eq.s32.totalorder %s85, 0
      %s88 = sadd.s32 %s87, 1
      %s89 = scalar_select %p86, %s87, %s88
      %p92 = pneg %p86
      %p93 = scmp.eq.s32.totalorder %s9, 5
      %p94 = por %p92, %p93
      %p95 = scmp.ne.s32.totalorder %s87, %s90
      %p96 = scmp.eq.s32.totalorder %s9, 0
      %p97 = por %p95, %p96
      %p98 = scmp.ne.s32.totalorder %s87, %s90
      %p99 = scmp.eq.s32.totalorder %s14, 5
      %p100 = por %p98, %p99
      %p101 = scmp.ne.s32.totalorder %s90, %s91
      %p102 = scmp.eq.s32.totalorder %s14, 0
      %p103 = por %p101, %p102
      %p104 = scmp.ne.s32.totalorder %s90, %s91
      %p105 = scmp.eq.s32.totalorder %s15, 5
      %p106 = por %p104, %p105
      %p108 = scmp.ne.s32.totalorder %s91, %s107
      %p109 = scmp.eq.s32.totalorder %s15, 0
      %p110 = por %p108, %p109
      %p111 = scmp.le.s32.totalorder 1, %s9
      %p112 = scmp.lt.s32.totalorder %s9, 7
      %p113 = pnand %p111, %p112
      %p114 = pneg %p113
      // Predicated region
      $region9: #{critic_forward.4} parent=5 // pred_check
        _
      $region10: #{critic_forward.4} parent=5 // pred_check_branch
        %116 = sbr.rel (%p113) target = $region12
      $region11: #{critic_forward.4} parent=5 // pred_region
        %s117 = ssub.s32 %s9, 1
        // Predicated region
        $region13: #{critic_forward.4} parent=11 // pred_check
          %p118 = pneg %p30
        $region14: #{critic_forward.4} parent=11 // pred_check_branch
          %120 = sbr.rel (%p118) target = $region16
        $region15: #{critic_forward.4} parent=11 // pred_region
          _
        $region16: #{critic_forward.4} parent=11 // pred_fallthru
          _
        // Predicated region
        $region17: #{critic_forward.4} parent=11 // pred_check
          %p121 = pneg %p51
        $region18: #{critic_forward.4} parent=11 // pred_check_branch
          %123 = sbr.rel (%p121) target = $region20
        $region19: #{critic_forward.4} parent=11 // pred_region
          _
        $region20: #{critic_forward.4} parent=11 // pred_fallthru
          _
      $region12: #{critic_forward.4} parent=5 // pred_fallthru
        _
      %p124 = scmp.lt.s32.totalorder %s9, 6
      // Predicated region
      $region21: #{critic_forward.4} parent=5 // pred_check
        %p125 = pneg %p124
      $region22: #{critic_forward.4} parent=5 // pred_check_branch
        %127 = sbr.rel (%p125) target = $region24
      $region23: #{critic_forward.4} parent=5 // pred_region
        // Predicated region
        $region25: #{critic_forward.4} parent=23 // pred_check
          %p128 = pneg %p71
        $region26: #{critic_forward.4} parent=23 // pred_check_branch
          %130 = sbr.rel (%p128) target = $region28
        $region27: #{critic_forward.4} parent=23 // pred_region
          %s131 = sand.u32 %s61, 1
          %s132 = sand.u32 %s61, 1
          %s133 = smul.addr %s132, 384
          %s134 = scalar_lea.vmem [#allocation2], %s133
          %s135 = smul.u32 4, %s9
          %s136 = ssub.s32 22, %s135
          %p137 = scmp.lt.s32.totalorder %s136, 4
          %s138 = scalar_select %p137, %s136, 4
          %s139 = smul.u32 1536, %s138
          %p140 = scmp.ne.s32.totalorder 0, %s139
          %s141 = smul.addr %s135, 4
          %s142 = scalar_lea.vmem %s2, %s141
          %s143 = smul.u32 %s138, 4
          // Predicated region
          $region29: #{critic_forward.4} parent=27 // pred_check
            %p144 = pneg %p140
          $region30: #{critic_forward.4} parent=27 // pred_check_branch
            %146 = sbr.rel (%p144) target = $region32
          $region31: #{critic_forward.4} parent=27 // pred_region
            %p147 = scmp.lt.u32.totalorder %s143, 8
            %p148 = pneg %p147
            // Predicated region
            $region33: #{critic_forward.4} parent=31 // pred_check
              _
            $region34: #{critic_forward.4} parent=31 // pred_check_branch
              %150 = sbr.rel (%p147) target = $region36
            $region35: #{critic_forward.4} parent=31 // pred_region
              %s212 = sand.u32 %s143, 7
              %p213 = scmp.eq.s32.totalorder %s212, 0
              // Predicated region
              $region48: #{critic_forward.4} parent=35 // pred_check
                %p214 = pneg %p213
              $region49: #{critic_forward.4} parent=35 // pred_check_branch
                %216 = sbr.rel (%p214) target = $region51
              $region50: #{critic_forward.4} parent=35 // pred_region
                %s217 = sshrl.u32 %s143, 3
                %s218 = sdiv.u32.pop %s217, 3
                %s219 = srem.u32.pop %s217, 3
                // While loop
                $region52: #{critic_forward.4} parent=50 // loop_pre_header
                  _
                $region53: #{critic_forward.4} parent=50 // loop_header
                  %s223 = sphi 0, %s225
                  %p224 = scmp.ge.s32.totalorder %s223, %s218
                  %s228 = sphi 0, %s377
                  %s229 = sphi %s142, %s380
                  %s230 = sphi %s134, %s381
                $region54: #{critic_forward.4} parent=50 // loop_header_branch
                  %227 = sbr.rel (%p224) target = $region58
                $region55: #{critic_forward.4} parent=50 // loop_body
                  %v231 = vld [vmem:[%s229] sm:$0xff]
                  %232 = vst [vmem:[%s230] sm:$0xff] %v231
                  %v233 = vld [vmem:[%s229 + $0x8] sm:$0xff]
                  %234 = vst [vmem:[%s230 + $0x8] sm:$0xff] %v233
                  %v235 = vld [vmem:[%s229 + $0x10] sm:$0xff]
                  %236 = vst [vmem:[%s230 + $0x10] sm:$0xff] %v235
                  %v237 = vld [vmem:[%s229 + $0x58] sm:$0xff]
                  %238 = vst [vmem:[%s230 + $0x10] sm:$0xff] %v237
                  %v239 = vld [vmem:[%s229 + $0x60] sm:$0xff]
                  %240 = vst [vmem:[%s230 + $0x18] sm:$0xff] %v239
                  %v241 = vld [vmem:[%s229 + $0x68] sm:$0xff]
                  %242 = vst [vmem:[%s230 + $0x20] sm:$0xff] %v241
                  %v243 = vld [vmem:[%s229 + $0xb0] sm:$0xff]
                  %244 = vst [vmem:[%s230 + $0x20] sm:$0xff] %v243
                  %v245 = vld [vmem:[%s229 + $0xb8] sm:$0xff]
                  %246 = vst [vmem:[%s230 + $0x28] sm:$0xff] %v245
                  %v247 = vld [vmem:[%s229 + $0xc0] sm:$0xff]
                  %248 = vst [vmem:[%s230 + $0x30] sm:$0xff] %v247
                  %v249 = vld [vmem:[%s229 + $0x108] sm:$0xff]
                  %250 = vst [vmem:[%s230 + $0x30] sm:$0xff] %v249
                  %v251 = vld [vmem:[%s229 + $0x110] sm:$0xff]
                  %252 = vst [vmem:[%s230 + $0x38] sm:$0xff] %v251
                  %v253 = vld [vmem:[%s229 + $0x118] sm:$0xff]
                  %254 = vst [vmem:[%s230 + $0x40] sm:$0xff] %v253
                  %v255 = vld [vmem:[%s229 + $0x160] sm:$0xff]
                  %256 = vst [vmem:[%s230 + $0x40] sm:$0xff] %v255
                  %v257 = vld [vmem:[%s229 + $0x168] sm:$0xff]
                  %258 = vst [vmem:[%s230 + $0x48] sm:$0xff] %v257
                  %v259 = vld [vmem:[%s229 + $0x170] sm:$0xff]
                  %260 = vst [vmem:[%s230 + $0x50] sm:$0xff] %v259
                  %v261 = vld [vmem:[%s229 + $0x1b8] sm:$0xff]
                  %262 = vst [vmem:[%s230 + $0x50] sm:$0xff] %v261
                  %v263 = vld [vmem:[%s229 + $0x1c0] sm:$0xff]
                  %264 = vst [vmem:[%s230 + $0x58] sm:$0xff] %v263
                  %v265 = vld [vmem:[%s229 + $0x1c8] sm:$0xff]
                  %266 = vst [vmem:[%s230 + $0x60] sm:$0xff] %v265
                  %v267 = vld [vmem:[%s229 + $0x210] sm:$0xff]
                  %268 = vst [vmem:[%s230 + $0x60] sm:$0xff] %v267
                  %v269 = vld [vmem:[%s229 + $0x218] sm:$0xff]
                  %270 = vst [vmem:[%s230 + $0x68] sm:$0xff] %v269
                  %v271 = vld [vmem:[%s229 + $0x220] sm:$0xff]
                  %272 = vst [vmem:[%s230 + $0x70] sm:$0xff] %v271
                  %v273 = vld [vmem:[%s229 + $0x268] sm:$0xff]
                  %274 = vst [vmem:[%s230 + $0x70] sm:$0xff] %v273
                  %v275 = vld [vmem:[%s229 + $0x270] sm:$0xff]
                  %276 = vst [vmem:[%s230 + $0x78] sm:$0xff] %v275
                  %v277 = vld [vmem:[%s229 + $0x278] sm:$0xff]
                  %278 = vst [vmem:[%s230 + $0x80] sm:$0xff] %v277
                  %v279 = vld [vmem:[%s229 + $0x2c0] sm:$0xff]
                  %280 = vst [vmem:[%s230 + $0x80] sm:$0xff] %v279
                  %v281 = vld [vmem:[%s229 + $0x2c8] sm:$0xff]
                  %282 = vst [vmem:[%s230 + $0x88] sm:$0xff] %v281
                  %v283 = vld [vmem:[%s229 + $0x2d0] sm:$0xff]
                  %284 = vst [vmem:[%s230 + $0x90] sm:$0xff] %v283
                  %v285 = vld [vmem:[%s229 + $0x318] sm:$0xff]
                  %286 = vst [vmem:[%s230 + $0x90] sm:$0xff] %v285
                  %v287 = vld [vmem:[%s229 + $0x320] sm:$0xff]
                  %288 = vst [vmem:[%s230 + $0x98] sm:$0xff] %v287
                  %v289 = vld [vmem:[%s229 + $0x328] sm:$0xff]
                  %290 = vst [vmem:[%s230 + $0xa0] sm:$0xff] %v289
                  %v291 = vld [vmem:[%s229 + $0x370] sm:$0xff]
                  %292 = vst [vmem:[%s230 + $0xa0] sm:$0xff] %v291
                  %v293 = vld [vmem:[%s229 + $0x378] sm:$0xff]
                  %294 = vst [vmem:[%s230 + $0xa8] sm:$0xff] %v293
                  %v295 = vld [vmem:[%s229 + $0x380] sm:$0xff]
                  %296 = vst [vmem:[%s230 + $0xb0] sm:$0xff] %v295
                  %v297 = vld [vmem:[%s229 + $0x3c8] sm:$0xff]
                  %298 = vst [vmem:[%s230 + $0xb0] sm:$0xff] %v297
                  %v299 = vld [vmem:[%s229 + $0x3d0] sm:$0xff]
                  %300 = vst [vmem:[%s230 + $0xb8] sm:$0xff] %v299
                  %v301 = vld [vmem:[%s229 + $0x3d8] sm:$0xff]
                  %302 = vst [vmem:[%s230 + $0xc0] sm:$0xff] %v301
                  %v303 = vld [vmem:[%s229 + $0x420] sm:$0xff]
                  %304 = vst [vmem:[%s230 + $0xc0] sm:$0xff] %v303
                  %v305 = vld [vmem:[%s229 + $0x428] sm:$0xff]
                  %306 = vst [vmem:[%s230 + $0xc8] sm:$0xff] %v305
                  %v307 = vld [vmem:[%s229 + $0x430] sm:$0xff]
                  %308 = vst [vmem:[%s230 + $0xd0] sm:$0xff] %v307
                  %v309 = vld [vmem:[%s229 + $0x478] sm:$0xff]
                  %310 = vst [vmem:[%s230 + $0xd0] sm:$0xff] %v309
                  %v311 = vld [vmem:[%s229 + $0x480] sm:$0xff]
                  %312 = vst [vmem:[%s230 + $0xd8] sm:$0xff] %v311
                  %v313 = vld [vmem:[%s229 + $0x488] sm:$0xff]
                  %314 = vst [vmem:[%s230 + $0xe0] sm:$0xff] %v313
                  %v315 = vld [vmem:[%s229 + $0x4d0] sm:$0xff]
                  %316 = vst [vmem:[%s230 + $0xe0] sm:$0xff] %v315
                  %v317 = vld [vmem:[%s229 + $0x4d8] sm:$0xff]
                  %318 = vst [vmem:[%s230 + $0xe8] sm:$0xff] %v317
                  %v319 = vld [vmem:[%s229 + $0x4e0] sm:$0xff]
                  %320 = vst [vmem:[%s230 + $0xf0] sm:$0xff] %v319
                  %v321 = vld [vmem:[%s229 + $0x528] sm:$0xff]
                  %322 = vst [vmem:[%s230 + $0xf0] sm:$0xff] %v321
                  %v323 = vld [vmem:[%s229 + $0x530] sm:$0xff]
                  %324 = vst [vmem:[%s230 + $0xf8] sm:$0xff] %v323
                  %v325 = vld [vmem:[%s229 + $0x538] sm:$0xff]
                  %326 = vst [vmem:[%s230 + $0x100] sm:$0xff] %v325
                  %v327 = vld [vmem:[%s229 + $0x580] sm:$0xff]
                  %328 = vst [vmem:[%s230 + $0x100] sm:$0xff] %v327
                  %v329 = vld [vmem:[%s229 + $0x588] sm:$0xff]
                  %330 = vst [vmem:[%s230 + $0x108] sm:$0xff] %v329
                  %v331 = vld [vmem:[%s229 + $0x590] sm:$0xff]
                  %332 = vst [vmem:[%s230 + $0x110] sm:$0xff] %v331
                  %v333 = vld [vmem:[%s229 + $0x5d8] sm:$0xff]
                  %334 = vst [vmem:[%s230 + $0x110] sm:$0xff] %v333
                  %v335 = vld [vmem:[%s229 + $0x5e0] sm:$0xff]
                  %336 = vst [vmem:[%s230 + $0x118] sm:$0xff] %v335
                  %v337 = vld [vmem:[%s229 + $0x5e8] sm:$0xff]
                  %338 = vst [vmem:[%s230 + $0x120] sm:$0xff] %v337
                  %v339 = vld [vmem:[%s229 + $0x630] sm:$0xff]
                  %340 = vst [vmem:[%s230 + $0x120] sm:$0xff] %v339
                  %v341 = vld [vmem:[%s229 + $0x638] sm:$0xff]
                  %342 = vst [vmem:[%s230 + $0x128] sm:$0xff] %v341
                  %v343 = vld [vmem:[%s229 + $0x640] sm:$0xff]
                  %344 = vst [vmem:[%s230 + $0x130] sm:$0xff] %v343
                  %v345 = vld [vmem:[%s229 + $0x688] sm:$0xff]
                  %346 = vst [vmem:[%s230 + $0x130] sm:$0xff] %v345
                  %v347 = vld [vmem:[%s229 + $0x690] sm:$0xff]
                  %348 = vst [vmem:[%s230 + $0x138] sm:$0xff] %v347
                  %v349 = vld [vmem:[%s229 + $0x698] sm:$0xff]
                  %350 = vst [vmem:[%s230 + $0x140] sm:$0xff] %v349
                  %v351 = vld [vmem:[%s229 + $0x6e0] sm:$0xff]
                  %352 = vst [vmem:[%s230 + $0x140] sm:$0xff] %v351
                  %v353 = vld [vmem:[%s229 + $0x6e8] sm:$0xff]
                  %354 = vst [vmem:[%s230 + $0x148] sm:$0xff] %v353
                  %v355 = vld [vmem:[%s229 + $0x6f0] sm:$0xff]
                  %356 = vst [vmem:[%s230 + $0x150] sm:$0xff] %v355
                  %v357 = vld [vmem:[%s229 + $0x738] sm:$0xff]
                  %358 = vst [vmem:[%s230 + $0x150] sm:$0xff] %v357
                  %v359 = vld [vmem:[%s229 + $0x740] sm:$0xff]
                  %360 = vst [vmem:[%s230 + $0x158] sm:$0xff] %v359
                  %v361 = vld [vmem:[%s229 + $0x748] sm:$0xff]
                  %362 = vst [vmem:[%s230 + $0x160] sm:$0xff] %v361
                  %v363 = vld [vmem:[%s229 + $0x790] sm:$0xff]
                  %364 = vst [vmem:[%s230 + $0x160] sm:$0xff] %v363
                  %v365 = vld [vmem:[%s229 + $0x798] sm:$0xff]
                  %366 = vst [vmem:[%s230 + $0x168] sm:$0xff] %v365
                  %v367 = vld [vmem:[%s229 + $0x7a0] sm:$0xff]
                  %368 = vst [vmem:[%s230 + $0x170] sm:$0xff] %v367
                  %v369 = vld [vmem:[%s229 + $0x7e8] sm:$0xff]
                  %370 = vst [vmem:[%s230 + $0x170] sm:$0xff] %v369
                  %v371 = vld [vmem:[%s229 + $0x7f0] sm:$0xff]
                  %372 = vst [vmem:[%s230 + $0x178] sm:$0xff] %v371
                  %v373 = vld [vmem:[%s229 + $0x7f8] sm:$0xff]
                  %374 = vst [vmem:[%s230 + $0x180] sm:$0xff] %v373
                  %s375 = sadd.s32 1, %s228
                  %p376 = scmp.ge.s32.totalorder %s375, %s218
                  %s377 = scalar_select %p376, 0, %s375
                  %s378 = smul.u32 %s377, 24
                  %s379 = smul.u32 %s377, 24
                  %s380 = scalar_lea.vmem %s142, %s378
                  %s381 = scalar_lea.vmem %s134, %s379 [#allocation2]
                $region56: #{critic_forward.4} parent=50 // loop_footer
                  %s225 = sadd.s32 %s223, 1
                $region57: #{critic_forward.4} parent=50 // loop_footer_branch
                  %222 = sbr.rel target = $region53
                $region58: #{critic_forward.4} parent=50 // loop_exit
                  _
                %s382 = sdiv.u32.pop %s217, 3
                %s383 = srem.u32.pop %s217, 3
                %s384 = smul.u32 %s382, 3
                %s385 = smul.u32 128, %s384
                %s386 = sshra.s32 %s385, 4
                %s387 = scalar_lea.vmem %s142, %s386
                %s388 = smul.u32 128, %s384
                %s389 = sshra.s32 %s388, 4
                %s390 = scalar_lea.vmem %s134, %s389 [#allocation2]
                // While loop
                $region59: #{critic_forward.4} parent=50 // loop_pre_header
                  _
                $region60: #{critic_forward.4} parent=50 // loop_header
                  %s394 = sphi 0, %s396
                  %p395 = scmp.ge.s32.totalorder %s394, %s383
                  %s399 = sphi 0, %s452
                  %s400 = sphi %s387, %s455
                  %s401 = sphi %s390, %s456
                $region61: #{critic_forward.4} parent=50 // loop_header_branch
                  %398 = sbr.rel (%p395) target = $region65
                $region62: #{critic_forward.4} parent=50 // loop_body
                  %v402 = vld [vmem:[%s400] sm:$0xff]
                  %403 = vst [vmem:[%s401] sm:$0xff] %v402
                  %v404 = vld [vmem:[%s400 + $0x58] sm:$0xff]
                  %405 = vst [vmem:[%s401 + $0x10] sm:$0xff] %v404
                  %v406 = vld [vmem:[%s400 + $0xb0] sm:$0xff]
                  %407 = vst [vmem:[%s401 + $0x20] sm:$0xff] %v406
                  %v408 = vld [vmem:[%s400 + $0x108] sm:$0xff]
                  %409 = vst [vmem:[%s401 + $0x30] sm:$0xff] %v408
                  %v410 = vld [vmem:[%s400 + $0x160] sm:$0xff]
                  %411 = vst [vmem:[%s401 + $0x40] sm:$0xff] %v410
                  %v412 = vld [vmem:[%s400 + $0x1b8] sm:$0xff]
                  %413 = vst [vmem:[%s401 + $0x50] sm:$0xff] %v412
                  %v414 = vld [vmem:[%s400 + $0x210] sm:$0xff]
                  %415 = vst [vmem:[%s401 + $0x60] sm:$0xff] %v414
                  %v416 = vld [vmem:[%s400 + $0x268] sm:$0xff]
                  %417 = vst [vmem:[%s401 + $0x70] sm:$0xff] %v416
                  %v418 = vld [vmem:[%s400 + $0x2c0] sm:$0xff]
                  %419 = vst [vmem:[%s401 + $0x80] sm:$0xff] %v418
                  %v420 = vld [vmem:[%s400 + $0x318] sm:$0xff]
                  %421 = vst [vmem:[%s401 + $0x90] sm:$0xff] %v420
                  %v422 = vld [vmem:[%s400 + $0x370] sm:$0xff]
                  %423 = vst [vmem:[%s401 + $0xa0] sm:$0xff] %v422
                  %v424 = vld [vmem:[%s400 + $0x3c8] sm:$0xff]
                  %425 = vst [vmem:[%s401 + $0xb0] sm:$0xff] %v424
                  %v426 = vld [vmem:[%s400 + $0x420] sm:$0xff]
                  %427 = vst [vmem:[%s401 + $0xc0] sm:$0xff] %v426
                  %v428 = vld [vmem:[%s400 + $0x478] sm:$0xff]
                  %429 = vst [vmem:[%s401 + $0xd0] sm:$0xff] %v428
                  %v430 = vld [vmem:[%s400 + $0x4d0] sm:$0xff]
                  %431 = vst [vmem:[%s401 + $0xe0] sm:$0xff] %v430
                  %v432 = vld [vmem:[%s400 + $0x528] sm:$0xff]
                  %433 = vst [vmem:[%s401 + $0xf0] sm:$0xff] %v432
                  %v434 = vld [vmem:[%s400 + $0x580] sm:$0xff]
                  %435 = vst [vmem:[%s401 + $0x100] sm:$0xff] %v434
                  %v436 = vld [vmem:[%s400 + $0x5d8] sm:$0xff]
                  %437 = vst [vmem:[%s401 + $0x110] sm:$0xff] %v436
                  %v438 = vld [vmem:[%s400 + $0x630] sm:$0xff]
                  %439 = vst [vmem:[%s401 + $0x120] sm:$0xff] %v438
                  %v440 = vld [vmem:[%s400 + $0x688] sm:$0xff]
                  %441 = vst [vmem:[%s401 + $0x130] sm:$0xff] %v440
                  %v442 = vld [vmem:[%s400 + $0x6e0] sm:$0xff]
                  %443 = vst [vmem:[%s401 + $0x140] sm:$0xff] %v442
                  %v444 = vld [vmem:[%s400 + $0x738] sm:$0xff]
                  %445 = vst [vmem:[%s401 + $0x150] sm:$0xff] %v444
                  %v446 = vld [vmem:[%s400 + $0x790] sm:$0xff]
                  %447 = vst [vmem:[%s401 + $0x160] sm:$0xff] %v446
                  %v448 = vld [vmem:[%s400 + $0x7e8] sm:$0xff]
                  %449 = vst [vmem:[%s401 + $0x170] sm:$0xff] %v448
                  %s450 = sadd.s32 1, %s399
                  %p451 = scmp.ge.s32.totalorder %s450, %s383
                  %s452 = scalar_select %p451, 0, %s450
                  %s453 = smul.u32 %s452, 8
                  %s454 = smul.u32 %s452, 8
                  %s455 = scalar_lea.vmem %s387, %s453
                  %s456 = scalar_lea.vmem %s390, %s454 [#allocation2]
                $region63: #{critic_forward.4} parent=50 // loop_footer
                  %s396 = sadd.s32 %s394, 1
                $region64: #{critic_forward.4} parent=50 // loop_footer_branch
                  %393 = sbr.rel target = $region60
                $region65: #{critic_forward.4} parent=50 // loop_exit
                  _
              $region51: #{critic_forward.4} parent=35 // pred_fallthru
                _
              %p457 = pneg %p213
              // Predicated region
              $region66: #{critic_forward.4} parent=35 // pred_check
                _
              $region67: #{critic_forward.4} parent=35 // pred_check_branch
                %459 = sbr.rel (%p213) target = $region69
              $region68: #{critic_forward.4} parent=35 // pred_region
                %s460 = sand.u32 %s143, 7
                %s461 = ssub.s32 %s143, %s460
                %s462 = scalar_lea.vmem %s142, %s461
                %s463 = ssub.s32 %s143, %s460
                %s464 = scalar_lea.vmem %s134, %s463 [#allocation2]
                %s465 = sshrl.u32 %s143, 3
                %s466 = sdiv.u32.pop %s465, 3
                %s467 = srem.u32.pop %s465, 3
                // While loop
                $region70: #{critic_forward.4} parent=68 // loop_pre_header
                  _
                $region71: #{critic_forward.4} parent=68 // loop_header
                  %s471 = sphi 0, %s473
                  %p472 = scmp.ge.s32.totalorder %s471, %s466
                  %s476 = sphi 0, %s625
                  %s477 = sphi %s142, %s628
                  %s478 = sphi %s134, %s629
                $region72: #{critic_forward.4} parent=68 // loop_header_branch
                  %475 = sbr.rel (%p472) target = $region76
                $region73: #{critic_forward.4} parent=68 // loop_body
                  %v479 = vld [vmem:[%s477] sm:$0xff]
                  %480 = vst [vmem:[%s478] sm:$0xff] %v479
                  %v481 = vld [vmem:[%s477 + $0x8] sm:$0xff]
                  %482 = vst [vmem:[%s478 + $0x8] sm:$0xff] %v481
                  %v483 = vld [vmem:[%s477 + $0x10] sm:$0xff]
                  %484 = vst [vmem:[%s478 + $0x10] sm:$0xff] %v483
                  %v485 = vld [vmem:[%s477 + $0x58] sm:$0xff]
                  %486 = vst [vmem:[%s478 + $0x10] sm:$0xff] %v485
                  %v487 = vld [vmem:[%s477 + $0x60] sm:$0xff]
                  %488 = vst [vmem:[%s478 + $0x18] sm:$0xff] %v487
                  %v489 = vld [vmem:[%s477 + $0x68] sm:$0xff]
                  %490 = vst [vmem:[%s478 + $0x20] sm:$0xff] %v489
                  %v491 = vld [vmem:[%s477 + $0xb0] sm:$0xff]
                  %492 = vst [vmem:[%s478 + $0x20] sm:$0xff] %v491
                  %v493 = vld [vmem:[%s477 + $0xb8] sm:$0xff]
                  %494 = vst [vmem:[%s478 + $0x28] sm:$0xff] %v493
                  %v495 = vld [vmem:[%s477 + $0xc0] sm:$0xff]
                  %496 = vst [vmem:[%s478 + $0x30] sm:$0xff] %v495
                  %v497 = vld [vmem:[%s477 + $0x108] sm:$0xff]
                  %498 = vst [vmem:[%s478 + $0x30] sm:$0xff] %v497
                  %v499 = vld [vmem:[%s477 + $0x110] sm:$0xff]
                  %500 = vst [vmem:[%s478 + $0x38] sm:$0xff] %v499
                  %v501 = vld [vmem:[%s477 + $0x118] sm:$0xff]
                  %502 = vst [vmem:[%s478 + $0x40] sm:$0xff] %v501
                  %v503 = vld [vmem:[%s477 + $0x160] sm:$0xff]
                  %504 = vst [vmem:[%s478 + $0x40] sm:$0xff] %v503
                  %v505 = vld [vmem:[%s477 + $0x168] sm:$0xff]
                  %506 = vst [vmem:[%s478 + $0x48] sm:$0xff] %v505
                  %v507 = vld [vmem:[%s477 + $0x170] sm:$0xff]
                  %508 = vst [vmem:[%s478 + $0x50] sm:$0xff] %v507
                  %v509 = vld [vmem:[%s477 + $0x1b8] sm:$0xff]
                  %510 = vst [vmem:[%s478 + $0x50] sm:$0xff] %v509
                  %v511 = vld [vmem:[%s477 + $0x1c0] sm:$0xff]
                  %512 = vst [vmem:[%s478 + $0x58] sm:$0xff] %v511
                  %v513 = vld [vmem:[%s477 + $0x1c8] sm:$0xff]
                  %514 = vst [vmem:[%s478 + $0x60] sm:$0xff] %v513
                  %v515 = vld [vmem:[%s477 + $0x210] sm:$0xff]
                  %516 = vst [vmem:[%s478 + $0x60] sm:$0xff] %v515
                  %v517 = vld [vmem:[%s477 + $0x218] sm:$0xff]
                  %518 = vst [vmem:[%s478 + $0x68] sm:$0xff] %v517
                  %v519 = vld [vmem:[%s477 + $0x220] sm:$0xff]
                  %520 = vst [vmem:[%s478 + $0x70] sm:$0xff] %v519
                  %v521 = vld [vmem:[%s477 + $0x268] sm:$0xff]
                  %522 = vst [vmem:[%s478 + $0x70] sm:$0xff] %v521
                  %v523 = vld [vmem:[%s477 + $0x270] sm:$0xff]
                  %524 = vst [vmem:[%s478 + $0x78] sm:$0xff] %v523
                  %v525 = vld [vmem:[%s477 + $0x278] sm:$0xff]
                  %526 = vst [vmem:[%s478 + $0x80] sm:$0xff] %v525
                  %v527 = vld [vmem:[%s477 + $0x2c0] sm:$0xff]
                  %528 = vst [vmem:[%s478 + $0x80] sm:$0xff] %v527
                  %v529 = vld [vmem:[%s477 + $0x2c8] sm:$0xff]
                  %530 = vst [vmem:[%s478 + $0x88] sm:$0xff] %v529
                  %v531 = vld [vmem:[%s477 + $0x2d0] sm:$0xff]
                  %532 = vst [vmem:[%s478 + $0x90] sm:$0xff] %v531
                  %v533 = vld [vmem:[%s477 + $0x318] sm:$0xff]
                  %534 = vst [vmem:[%s478 + $0x90] sm:$0xff] %v533
                  %v535 = vld [vmem:[%s477 + $0x320] sm:$0xff]
                  %536 = vst [vmem:[%s478 + $0x98] sm:$0xff] %v535
                  %v537 = vld [vmem:[%s477 + $0x328] sm:$0xff]
                  %538 = vst [vmem:[%s478 + $0xa0] sm:$0xff] %v537
                  %v539 = vld [vmem:[%s477 + $0x370] sm:$0xff]
                  %540 = vst [vmem:[%s478 + $0xa0] sm:$0xff] %v539
                  %v541 = vld [vmem:[%s477 + $0x378] sm:$0xff]
                  %542 = vst [vmem:[%s478 + $0xa8] sm:$0xff] %v541
                  %v543 = vld [vmem:[%s477 + $0x380] sm:$0xff]
                  %544 = vst [vmem:[%s478 + $0xb0] sm:$0xff] %v543
                  %v545 = vld [vmem:[%s477 + $0x3c8] sm:$0xff]
                  %546 = vst [vmem:[%s478 + $0xb0] sm:$0xff] %v545
                  %v547 = vld [vmem:[%s477 + $0x3d0] sm:$0xff]
                  %548 = vst [vmem:[%s478 + $0xb8] sm:$0xff] %v547
                  %v549 = vld [vmem:[%s477 + $0x3d8] sm:$0xff]
                  %550 = vst [vmem:[%s478 + $0xc0] sm:$0xff] %v549
                  %v551 = vld [vmem:[%s477 + $0x420] sm:$0xff]
                  %552 = vst [vmem:[%s478 + $0xc0] sm:$0xff] %v551
                  %v553 = vld [vmem:[%s477 + $0x428] sm:$0xff]
                  %554 = vst [vmem:[%s478 + $0xc8] sm:$0xff] %v553
                  %v555 = vld [vmem:[%s477 + $0x430] sm:$0xff]
                  %556 = vst [vmem:[%s478 + $0xd0] sm:$0xff] %v555
                  %v557 = vld [vmem:[%s477 + $0x478] sm:$0xff]
                  %558 = vst [vmem:[%s478 + $0xd0] sm:$0xff] %v557
                  %v559 = vld [vmem:[%s477 + $0x480] sm:$0xff]
                  %560 = vst [vmem:[%s478 + $0xd8] sm:$0xff] %v559
                  %v561 = vld [vmem:[%s477 + $0x488] sm:$0xff]
                  %562 = vst [vmem:[%s478 + $0xe0] sm:$0xff] %v561
                  %v563 = vld [vmem:[%s477 + $0x4d0] sm:$0xff]
                  %564 = vst [vmem:[%s478 + $0xe0] sm:$0xff] %v563
                  %v565 = vld [vmem:[%s477 + $0x4d8] sm:$0xff]
                  %566 = vst [vmem:[%s478 + $0xe8] sm:$0xff] %v565
                  %v567 = vld [vmem:[%s477 + $0x4e0] sm:$0xff]
                  %568 = vst [vmem:[%s478 + $0xf0] sm:$0xff] %v567
                  %v569 = vld [vmem:[%s477 + $0x528] sm:$0xff]
                  %570 = vst [vmem:[%s478 + $0xf0] sm:$0xff] %v569
                  %v571 = vld [vmem:[%s477 + $0x530] sm:$0xff]
                  %572 = vst [vmem:[%s478 + $0xf8] sm:$0xff] %v571
                  %v573 = vld [vmem:[%s477 + $0x538] sm:$0xff]
                  %574 = vst [vmem:[%s478 + $0x100] sm:$0xff] %v573
                  %v575 = vld [vmem:[%s477 + $0x580] sm:$0xff]
                  %576 = vst [vmem:[%s478 + $0x100] sm:$0xff] %v575
                  %v577 = vld [vmem:[%s477 + $0x588] sm:$0xff]
                  %578 = vst [vmem:[%s478 + $0x108] sm:$0xff] %v577
                  %v579 = vld [vmem:[%s477 + $0x590] sm:$0xff]
                  %580 = vst [vmem:[%s478 + $0x110] sm:$0xff] %v579
                  %v581 = vld [vmem:[%s477 + $0x5d8] sm:$0xff]
                  %582 = vst [vmem:[%s478 + $0x110] sm:$0xff] %v581
                  %v583 = vld [vmem:[%s477 + $0x5e0] sm:$0xff]
                  %584 = vst [vmem:[%s478 + $0x118] sm:$0xff] %v583
                  %v585 = vld [vmem:[%s477 + $0x5e8] sm:$0xff]
                  %586 = vst [vmem:[%s478 + $0x120] sm:$0xff] %v585
                  %v587 = vld [vmem:[%s477 + $0x630] sm:$0xff]
                  %588 = vst [vmem:[%s478 + $0x120] sm:$0xff] %v587
                  %v589 = vld [vmem:[%s477 + $0x638] sm:$0xff]
                  %590 = vst [vmem:[%s478 + $0x128] sm:$0xff] %v589
                  %v591 = vld [vmem:[%s477 + $0x640] sm:$0xff]
                  %592 = vst [vmem:[%s478 + $0x130] sm:$0xff] %v591
                  %v593 = vld [vmem:[%s477 + $0x688] sm:$0xff]
                  %594 = vst [vmem:[%s478 + $0x130] sm:$0xff] %v593
                  %v595 = vld [vmem:[%s477 + $0x690] sm:$0xff]
                  %596 = vst [vmem:[%s478 + $0x138] sm:$0xff] %v595
                  %v597 = vld [vmem:[%s477 + $0x698] sm:$0xff]
                  %598 = vst [vmem:[%s478 + $0x140] sm:$0xff] %v597
                  %v599 = vld [vmem:[%s477 + $0x6e0] sm:$0xff]
                  %600 = vst [vmem:[%s478 + $0x140] sm:$0xff] %v599
                  %v601 = vld [vmem:[%s477 + $0x6e8] sm:$0xff]
                  %602 = vst [vmem:[%s478 + $0x148] sm:$0xff] %v601
                  %v603 = vld [vmem:[%s477 + $0x6f0] sm:$0xff]
                  %604 = vst [vmem:[%s478 + $0x150] sm:$0xff] %v603
                  %v605 = vld [vmem:[%s477 + $0x738] sm:$0xff]
                  %606 = vst [vmem:[%s478 + $0x150] sm:$0xff] %v605
                  %v607 = vld [vmem:[%s477 + $0x740] sm:$0xff]
                  %608 = vst [vmem:[%s478 + $0x158] sm:$0xff] %v607
                  %v609 = vld [vmem:[%s477 + $0x748] sm:$0xff]
                  %610 = vst [vmem:[%s478 + $0x160] sm:$0xff] %v609
                  %v611 = vld [vmem:[%s477 + $0x790] sm:$0xff]
                  %612 = vst [vmem:[%s478 + $0x160] sm:$0xff] %v611
                  %v613 = vld [vmem:[%s477 + $0x798] sm:$0xff]
                  %614 = vst [vmem:[%s478 + $0x168] sm:$0xff] %v613
                  %v615 = vld [vmem:[%s477 + $0x7a0] sm:$0xff]
                  %616 = vst [vmem:[%s478 + $0x170] sm:$0xff] %v615
                  %v617 = vld [vmem:[%s477 + $0x7e8] sm:$0xff]
                  %618 = vst [vmem:[%s478 + $0x170] sm:$0xff] %v617
                  %v619 = vld [vmem:[%s477 + $0x7f0] sm:$0xff]
                  %620 = vst [vmem:[%s478 + $0x178] sm:$0xff] %v619
                  %v621 = vld [vmem:[%s477 + $0x7f8] sm:$0xff]
                  %622 = vst [vmem:[%s478 + $0x180] sm:$0xff] %v621
                  %s623 = sadd.s32 1, %s476
                  %p624 = scmp.ge.s32.totalorder %s623, %s466
                  %s625 = scalar_select %p624, 0, %s623
                  %s626 = smul.u32 %s625, 24
                  %s627 = smul.u32 %s625, 24
                  %s628 = scalar_lea.vmem %s142, %s626
                  %s629 = scalar_lea.vmem %s134, %s627 [#allocation2]
                $region74: #{critic_forward.4} parent=68 // loop_footer
                  %s473 = sadd.s32 %s471, 1
                $region75: #{critic_forward.4} parent=68 // loop_footer_branch
                  %470 = sbr.rel target = $region71
                $region76: #{critic_forward.4} parent=68 // loop_exit
                  _
                %s630 = sdiv.u32.pop %s465, 3
                %s631 = srem.u32.pop %s465, 3
                %s632 = smul.u32 %s630, 3
                %s633 = smul.u32 128, %s632
                %s634 = sshra.s32 %s633, 4
                %s635 = scalar_lea.vmem %s142, %s634
                %s636 = smul.u32 128, %s632
                %s637 = sshra.s32 %s636, 4
                %s638 = scalar_lea.vmem %s134, %s637 [#allocation2]
                // While loop
                $region77: #{critic_forward.4} parent=68 // loop_pre_header
                  _
                $region78: #{critic_forward.4} parent=68 // loop_header
                  %s642 = sphi 0, %s644
                  %p643 = scmp.ge.s32.totalorder %s642, %s631
                  %s647 = sphi 0, %s700
                  %s648 = sphi %s635, %s703
                  %s649 = sphi %s638, %s704
                $region79: #{critic_forward.4} parent=68 // loop_header_branch
                  %646 = sbr.rel (%p643) target = $region83
                $region80: #{critic_forward.4} parent=68 // loop_body
                  %v650 = vld [vmem:[%s648] sm:$0xff]
                  %651 = vst [vmem:[%s649] sm:$0xff] %v650
                  %v652 = vld [vmem:[%s648 + $0x58] sm:$0xff]
                  %653 = vst [vmem:[%s649 + $0x10] sm:$0xff] %v652
                  %v654 = vld [vmem:[%s648 + $0xb0] sm:$0xff]
                  %655 = vst [vmem:[%s649 + $0x20] sm:$0xff] %v654
                  %v656 = vld [vmem:[%s648 + $0x108] sm:$0xff]
                  %657 = vst [vmem:[%s649 + $0x30] sm:$0xff] %v656
                  %v658 = vld [vmem:[%s648 + $0x160] sm:$0xff]
                  %659 = vst [vmem:[%s649 + $0x40] sm:$0xff] %v658
                  %v660 = vld [vmem:[%s648 + $0x1b8] sm:$0xff]
                  %661 = vst [vmem:[%s649 + $0x50] sm:$0xff] %v660
                  %v662 = vld [vmem:[%s648 + $0x210] sm:$0xff]
                  %663 = vst [vmem:[%s649 + $0x60] sm:$0xff] %v662
                  %v664 = vld [vmem:[%s648 + $0x268] sm:$0xff]
                  %665 = vst [vmem:[%s649 + $0x70] sm:$0xff] %v664
                  %v666 = vld [vmem:[%s648 + $0x2c0] sm:$0xff]
                  %667 = vst [vmem:[%s649 + $0x80] sm:$0xff] %v666
                  %v668 = vld [vmem:[%s648 + $0x318] sm:$0xff]
                  %669 = vst [vmem:[%s649 + $0x90] sm:$0xff] %v668
                  %v670 = vld [vmem:[%s648 + $0x370] sm:$0xff]
                  %671 = vst [vmem:[%s649 + $0xa0] sm:$0xff] %v670
                  %v672 = vld [vmem:[%s648 + $0x3c8] sm:$0xff]
                  %673 = vst [vmem:[%s649 + $0xb0] sm:$0xff] %v672
                  %v674 = vld [vmem:[%s648 + $0x420] sm:$0xff]
                  %675 = vst [vmem:[%s649 + $0xc0] sm:$0xff] %v674
                  %v676 = vld [vmem:[%s648 + $0x478] sm:$0xff]
                  %677 = vst [vmem:[%s649 + $0xd0] sm:$0xff] %v676
                  %v678 = vld [vmem:[%s648 + $0x4d0] sm:$0xff]
                  %679 = vst [vmem:[%s649 + $0xe0] sm:$0xff] %v678
                  %v680 = vld [vmem:[%s648 + $0x528] sm:$0xff]
                  %681 = vst [vmem:[%s649 + $0xf0] sm:$0xff] %v680
                  %v682 = vld [vmem:[%s648 + $0x580] sm:$0xff]
                  %683 = vst [vmem:[%s649 + $0x100] sm:$0xff] %v682
                  %v684 = vld [vmem:[%s648 + $0x5d8] sm:$0xff]
                  %685 = vst [vmem:[%s649 + $0x110] sm:$0xff] %v684
                  %v686 = vld [vmem:[%s648 + $0x630] sm:$0xff]
                  %687 = vst [vmem:[%s649 + $0x120] sm:$0xff] %v686
                  %v688 = vld [vmem:[%s648 + $0x688] sm:$0xff]
                  %689 = vst [vmem:[%s649 + $0x130] sm:$0xff] %v688
                  %v690 = vld [vmem:[%s648 + $0x6e0] sm:$0xff]
                  %691 = vst [vmem:[%s649 + $0x140] sm:$0xff] %v690
                  %v692 = vld [vmem:[%s648 + $0x738] sm:$0xff]
                  %693 = vst [vmem:[%s649 + $0x150] sm:$0xff] %v692
                  %v694 = vld [vmem:[%s648 + $0x790] sm:$0xff]
                  %695 = vst [vmem:[%s649 + $0x160] sm:$0xff] %v694
                  %v696 = vld [vmem:[%s648 + $0x7e8] sm:$0xff]
                  %697 = vst [vmem:[%s649 + $0x170] sm:$0xff] %v696
                  %s698 = sadd.s32 1, %s647
                  %p699 = scmp.ge.s32.totalorder %s698, %s631
                  %s700 = scalar_select %p699, 0, %s698
                  %s701 = smul.u32 %s700, 8
                  %s702 = smul.u32 %s700, 8
                  %s703 = scalar_lea.vmem %s635, %s701
                  %s704 = scalar_lea.vmem %s638, %s702 [#allocation2]
                $region81: #{critic_forward.4} parent=68 // loop_footer
                  %s644 = sadd.s32 %s642, 1
                $region82: #{critic_forward.4} parent=68 // loop_footer_branch
                  %641 = sbr.rel target = $region78
                $region83: #{critic_forward.4} parent=68 // loop_exit
                  _
                %s705 = sshll.u32 1, %s460
                %s706 = ssub.s32 %s705, 1
                loop: start=0, step=1, limit=1
                $region84: #{critic_forward.4} parent=68 // loop_pre_header
                  _
                $region85: #{critic_forward.4} parent=68 // loop_header
                  %s708 = sphi 0, %s712
                  %p709 = scmp.ge.s32.totalorder %s708, 1
                  %s713 = sphi %s462, %s462
                  %s714 = sphi %s464, %s464
                $region86: #{critic_forward.4} parent=68 // loop_header_branch
                  %711 = sbr.rel (%p709) target = $region90
                $region87: #{critic_forward.4} parent=68 // loop_body
                  %v715 = vld [vmem:[%s713] sm:%s706]
                  %716 = vst [vmem:[%s714] sm:%s706] %v715
                  %v717 = vld [vmem:[%s713 + $0x58] sm:%s706]
                  %718 = vst [vmem:[%s714 + $0x10] sm:%s706] %v717
                  %v719 = vld [vmem:[%s713 + $0xb0] sm:%s706]
                  %720 = vst [vmem:[%s714 + $0x20] sm:%s706] %v719
                  %v721 = vld [vmem:[%s713 + $0x108] sm:%s706]
                  %722 = vst [vmem:[%s714 + $0x30] sm:%s706] %v721
                  %v723 = vld [vmem:[%s713 + $0x160] sm:%s706]
                  %724 = vst [vmem:[%s714 + $0x40] sm:%s706] %v723
                  %v725 = vld [vmem:[%s713 + $0x1b8] sm:%s706]
                  %726 = vst [vmem:[%s714 + $0x50] sm:%s706] %v725
                  %v727 = vld [vmem:[%s713 + $0x210] sm:%s706]
                  %728 = vst [vmem:[%s714 + $0x60] sm:%s706] %v727
                  %v729 = vld [vmem:[%s713 + $0x268] sm:%s706]
                  %730 = vst [vmem:[%s714 + $0x70] sm:%s706] %v729
                  %v731 = vld [vmem:[%s713 + $0x2c0] sm:%s706]
                  %732 = vst [vmem:[%s714 + $0x80] sm:%s706] %v731
                  %v733 = vld [vmem:[%s713 + $0x318] sm:%s706]
                  %734 = vst [vmem:[%s714 + $0x90] sm:%s706] %v733
                  %v735 = vld [vmem:[%s713 + $0x370] sm:%s706]
                  %736 = vst [vmem:[%s714 + $0xa0] sm:%s706] %v735
                  %v737 = vld [vmem:[%s713 + $0x3c8] sm:%s706]
                  %738 = vst [vmem:[%s714 + $0xb0] sm:%s706] %v737
                  %v739 = vld [vmem:[%s713 + $0x420] sm:%s706]
                  %740 = vst [vmem:[%s714 + $0xc0] sm:%s706] %v739
                  %v741 = vld [vmem:[%s713 + $0x478] sm:%s706]
                  %742 = vst [vmem:[%s714 + $0xd0] sm:%s706] %v741
                  %v743 = vld [vmem:[%s713 + $0x4d0] sm:%s706]
                  %744 = vst [vmem:[%s714 + $0xe0] sm:%s706] %v743
                  %v745 = vld [vmem:[%s713 + $0x528] sm:%s706]
                  %746 = vst [vmem:[%s714 + $0xf0] sm:%s706] %v745
                  %v747 = vld [vmem:[%s713 + $0x580] sm:%s706]
                  %748 = vst [vmem:[%s714 + $0x100] sm:%s706] %v747
                  %v749 = vld [vmem:[%s713 + $0x5d8] sm:%s706]
                  %750 = vst [vmem:[%s714 + $0x110] sm:%s706] %v749
                  %v751 = vld [vmem:[%s713 + $0x630] sm:%s706]
                  %752 = vst [vmem:[%s714 + $0x120] sm:%s706] %v751
                  %v753 = vld [vmem:[%s713 + $0x688] sm:%s706]
                  %754 = vst [vmem:[%s714 + $0x130] sm:%s706] %v753
                  %v755 = vld [vmem:[%s713 + $0x6e0] sm:%s706]
                  %756 = vst [vmem:[%s714 + $0x140] sm:%s706] %v755
                  %v757 = vld [vmem:[%s713 + $0x738] sm:%s706]
                  %758 = vst [vmem:[%s714 + $0x150] sm:%s706] %v757
                  %v759 = vld [vmem:[%s713 + $0x790] sm:%s706]
                  %760 = vst [vmem:[%s714 + $0x160] sm:%s706] %v759
                  %v761 = vld [vmem:[%s713 + $0x7e8] sm:%s706]
                  %762 = vst [vmem:[%s714 + $0x170] sm:%s706] %v761
                $region88: #{critic_forward.4} parent=68 // loop_footer
                  %s712 = sadd.s32 1, %s708
                $region89: #{critic_forward.4} parent=68 // loop_footer_branch
                  %707 = sbr.rel target = $region85
                $region90: #{critic_forward.4} parent=68 // loop_exit
                  _
              $region69: #{critic_forward.4} parent=35 // pred_fallthru
                _
            $region36: #{critic_forward.4} parent=31 // pred_fallthru
              _
            // Predicated region
            $region37: #{critic_forward.4} parent=31 // pred_check
              %p151 = pneg %p147
            $region38: #{critic_forward.4} parent=31 // pred_check_branch
              %153 = sbr.rel (%p151) target = $region40
            $region39: #{critic_forward.4} parent=31 // pred_region
              %s154 = sshll.u32 1, %s143
              %s155 = ssub.s32 %s154, 1
              loop: start=0, step=1, limit=1
              $region41: #{critic_forward.4} parent=39 // loop_pre_header
                _
              $region42: #{critic_forward.4} parent=39 // loop_header
                %s157 = sphi 0, %s161
                %p158 = scmp.ge.s32.totalorder %s157, 1
                %s162 = sphi %s142, %s142
                %s163 = sphi %s134, %s134
              $region43: #{critic_forward.4} parent=39 // loop_header_branch
                %160 = sbr.rel (%p158) target = $region47
              $region44: #{critic_forward.4} parent=39 // loop_body
                %v164 = vld [vmem:[%s162] sm:%s155]
                %165 = vst [vmem:[%s163] sm:%s155] %v164
                %v166 = vld [vmem:[%s162 + $0x58] sm:%s155]
                %167 = vst [vmem:[%s163 + $0x10] sm:%s155] %v166
                %v168 = vld [vmem:[%s162 + $0xb0] sm:%s155]
                %169 = vst [vmem:[%s163 + $0x20] sm:%s155] %v168
                %v170 = vld [vmem:[%s162 + $0x108] sm:%s155]
                %171 = vst [vmem:[%s163 + $0x30] sm:%s155] %v170
                %v172 = vld [vmem:[%s162 + $0x160] sm:%s155]
                %173 = vst [vmem:[%s163 + $0x40] sm:%s155] %v172
                %v174 = vld [vmem:[%s162 + $0x1b8] sm:%s155]
                %175 = vst [vmem:[%s163 + $0x50] sm:%s155] %v174
                %v176 = vld [vmem:[%s162 + $0x210] sm:%s155]
                %177 = vst [vmem:[%s163 + $0x60] sm:%s155] %v176
                %v178 = vld [vmem:[%s162 + $0x268] sm:%s155]
                %179 = vst [vmem:[%s163 + $0x70] sm:%s155] %v178
                %v180 = vld [vmem:[%s162 + $0x2c0] sm:%s155]
                %181 = vst [vmem:[%s163 + $0x80] sm:%s155] %v180
                %v182 = vld [vmem:[%s162 + $0x318] sm:%s155]
                %183 = vst [vmem:[%s163 + $0x90] sm:%s155] %v182
                %v184 = vld [vmem:[%s162 + $0x370] sm:%s155]
                %185 = vst [vmem:[%s163 + $0xa0] sm:%s155] %v184
                %v186 = vld [vmem:[%s162 + $0x3c8] sm:%s155]
                %187 = vst [vmem:[%s163 + $0xb0] sm:%s155] %v186
                %v188 = vld [vmem:[%s162 + $0x420] sm:%s155]
                %189 = vst [vmem:[%s163 + $0xc0] sm:%s155] %v188
                %v190 = vld [vmem:[%s162 + $0x478] sm:%s155]
                %191 = vst [vmem:[%s163 + $0xd0] sm:%s155] %v190
                %v192 = vld [vmem:[%s162 + $0x4d0] sm:%s155]
                %193 = vst [vmem:[%s163 + $0xe0] sm:%s155] %v192
                %v194 = vld [vmem:[%s162 + $0x528] sm:%s155]
                %195 = vst [vmem:[%s163 + $0xf0] sm:%s155] %v194
                %v196 = vld [vmem:[%s162 + $0x580] sm:%s155]
                %197 = vst [vmem:[%s163 + $0x100] sm:%s155] %v196
                %v198 = vld [vmem:[%s162 + $0x5d8] sm:%s155]
                %199 = vst [vmem:[%s163 + $0x110] sm:%s155] %v198
                %v200 = vld [vmem:[%s162 + $0x630] sm:%s155]
                %201 = vst [vmem:[%s163 + $0x120] sm:%s155] %v200
                %v202 = vld [vmem:[%s162 + $0x688] sm:%s155]
                %203 = vst [vmem:[%s163 + $0x130] sm:%s155] %v202
                %v204 = vld [vmem:[%s162 + $0x6e0] sm:%s155]
                %205 = vst [vmem:[%s163 + $0x140] sm:%s155] %v204
                %v206 = vld [vmem:[%s162 + $0x738] sm:%s155]
                %207 = vst [vmem:[%s163 + $0x150] sm:%s155] %v206
                %v208 = vld [vmem:[%s162 + $0x790] sm:%s155]
                %209 = vst [vmem:[%s163 + $0x160] sm:%s155] %v208
                %v210 = vld [vmem:[%s162 + $0x7e8] sm:%s155]
                %211 = vst [vmem:[%s163 + $0x170] sm:%s155] %v210
              $region45: #{critic_forward.4} parent=39 // loop_footer
                %s161 = sadd.s32 1, %s157
              $region46: #{critic_forward.4} parent=39 // loop_footer_branch
                %156 = sbr.rel target = $region42
              $region47: #{critic_forward.4} parent=39 // loop_exit
                _
            $region40: #{critic_forward.4} parent=31 // pred_fallthru
              _
          $region32: #{critic_forward.4} parent=27 // pred_fallthru
            _
          %763 = vnop
        $region28: #{critic_forward.4} parent=23 // pred_fallthru
          _
      $region24: #{critic_forward.4} parent=5 // pred_fallthru
        _
      %p764 = scmp.le.s32.totalorder 1, %s9
      %p765 = scmp.lt.s32.totalorder %s9, 7
      %p766 = pnand %p764, %p765
      %p767 = pneg %p766
      // Predicated region
      $region91: #{critic_forward.4} parent=5 // pred_check
        _
      $region92: #{critic_forward.4} parent=5 // pred_check_branch
        %769 = sbr.rel (%p766) target = $region94
      $region93: #{critic_forward.4} parent=5 // pred_region
        %s770 = ssub.s32 %s9, 1
        %s771 = sand.u32 %s64, 1
        %s772 = sand.u32 %s64, 1
        %s773 = smul.addr %s772, 384
        %s774 = scalar_lea.vmem [#allocation2], %s773
        // Predicated region
        $region95: #{critic_forward.4} parent=93 // pred_check
          %p775 = pneg %p77
        $region96: #{critic_forward.4} parent=93 // pred_check_branch
          %777 = sbr.rel (%p775) target = $region98
        $region97: #{critic_forward.4} parent=93 // pred_region
          _
        $region98: #{critic_forward.4} parent=93 // pred_fallthru
          _
        %p778 = pneg %p30
        %p779 = pneg %p27
        %p780 = pneg %p51
        %p781 = pneg %p48
        %s782 = sand.u32 %s64, 1
        %s783 = sand.u32 %s64, 1
        %s784 = smul.addr %s783, 384
        %s785 = scalar_lea.vmem [#allocation2], %s784
        %p786 = pneg %p77
        %p787 = pneg %p74
        %p788 = pneg %p103
        %p789 = pneg %p100
        %s790 = sand.u32 %s90, 1
        %s791 = sand.u32 %s90, 1
        %s792 = smul.addr %s791, 16
        %s793 = scalar_lea.vmem [#allocation3], %s792
        %s794 = smul.u32 4, %s14
        %s795 = ssub.s32 22, %s794
        %p796 = scmp.lt.s32.totalorder %s795, 4
        %s797 = scalar_select %p796, %s795, 4
        %s798 = smul.u32 1536, %s797
        %s799 = smul.u32 4, %s14
        %s800 = ssub.s32 22, %s799
        %p801 = scmp.lt.s32.totalorder %s800, 4
        %s802 = scalar_select %p801, %s800, 4
        %s803 = smul.u32 64, %s802
        %v805 = vld [vmem:[%s0] sm:$0x77]
        %v806 = vld [vmem:[%s774] sm:$0xff]
        %v807 = vld [vmem:[%s774 + $0x8] sm:$0xff]
        %v808 = vld [vmem:[%s774 + $0x10] sm:$0xff]
        %v809 = vld [vmem:[%s774 + $0x18] sm:$0xff]
        %v810 = vld [vmem:[%s774 + $0x20] sm:$0xff]
        %v811 = vld [vmem:[%s774 + $0x28] sm:$0xff]
        %v812 = vld [vmem:[%s774 + $0x30] sm:$0xff]
        %v813 = vld [vmem:[%s774 + $0x38] sm:$0xff]
        %v814 = vld [vmem:[%s774 + $0x40] sm:$0xff]
        %v815 = vld [vmem:[%s774 + $0x48] sm:$0xff]
        %v816 = vld [vmem:[%s774 + $0x50] sm:$0xff]
        %v817 = vld [vmem:[%s774 + $0x58] sm:$0xff]
        %v818 = vld [vmem:[%s774 + $0x60] sm:$0xff]
        %v819 = vld [vmem:[%s774 + $0x68] sm:$0xff]
        %v820 = vld [vmem:[%s774 + $0x70] sm:$0xff]
        %v821 = vld [vmem:[%s774 + $0x78] sm:$0xff]
        %v822 = vld [vmem:[%s774 + $0x80] sm:$0xff]
        %v823 = vld [vmem:[%s774 + $0x88] sm:$0xff]
        %v824 = vld [vmem:[%s774 + $0x90] sm:$0xff]
        %v825 = vld [vmem:[%s774 + $0x98] sm:$0xff]
        %v826 = vld [vmem:[%s774 + $0xa0] sm:$0xff]
        %v827 = vld [vmem:[%s774 + $0xa8] sm:$0xff]
        %v828 = vld [vmem:[%s774 + $0xb0] sm:$0xff]
        %v829 = vld [vmem:[%s774 + $0xb8] sm:$0xff]
        %v830 = vld [vmem:[%s774 + $0xc0] sm:$0xff]
        %v831 = vld [vmem:[%s774 + $0xc8] sm:$0xff]
        %v832 = vld [vmem:[%s774 + $0xd0] sm:$0xff]
        %v833 = vld [vmem:[%s774 + $0xd8] sm:$0xff]
        %v834 = vld [vmem:[%s774 + $0xe0] sm:$0xff]
        %v835 = vld [vmem:[%s774 + $0xe8] sm:$0xff]
        %v836 = vld [vmem:[%s774 + $0xf0] sm:$0xff]
        %v837 = vld [vmem:[%s774 + $0xf8] sm:$0xff]
        %v838 = vld [vmem:[%s774 + $0x100] sm:$0xff]
        %v839 = vld [vmem:[%s774 + $0x108] sm:$0xff]
        %v840 = vld [vmem:[%s774 + $0x110] sm:$0xff]
        %v841 = vld [vmem:[%s774 + $0x118] sm:$0xff]
        %v842 = vld [vmem:[%s774 + $0x120] sm:$0xff]
        %v843 = vld [vmem:[%s774 + $0x128] sm:$0xff]
        %v844 = vld [vmem:[%s774 + $0x130] sm:$0xff]
        %v845 = vld [vmem:[%s774 + $0x138] sm:$0xff]
        %v846 = vld [vmem:[%s774 + $0x140] sm:$0xff]
        %v847 = vld [vmem:[%s774 + $0x148] sm:$0xff]
        %v848 = vld [vmem:[%s774 + $0x150] sm:$0xff]
        %v849 = vld [vmem:[%s774 + $0x158] sm:$0xff]
        %v850 = vld [vmem:[%s774 + $0x160] sm:$0xff]
        %v851 = vld [vmem:[%s774 + $0x168] sm:$0xff]
        %v852 = vld [vmem:[%s774 + $0x170] sm:$0xff]
        %v853 = vld [vmem:[%s774 + $0x178] sm:$0xff]
        %v854 = vld [vmem:[%s1] sm:$0x3f]
        %856 = vset.pattern.permute.xlu0 0
        %857 = vperm.xlu0 %856, %v854
        %v858 = vpop.permute.xlu0 %857
        %v861 = vunpack.c.l.b16 %v805
        %v862 = vunpack.c.h.b16 %v805
        %v863 = vpack.c.b16 %v861, %v861
        %v864 = vpack.c.b16 %v862, %v862
        %v914 = vunpack.c.l.b16 %v806
        %v915 = vunpack.c.h.b16 %v806
        %v916 = vunpack.c.l.b16 %v807
        %v917 = vunpack.c.h.b16 %v807
        %v918 = vunpack.c.l.b16 %v808
        %v919 = vunpack.c.h.b16 %v808
        %v920 = vunpack.c.l.b16 %v809
        %v921 = vunpack.c.h.b16 %v809
        %v922 = vunpack.c.l.b16 %v810
        %v923 = vunpack.c.h.b16 %v810
        %v924 = vunpack.c.l.b16 %v811
        %v925 = vunpack.c.h.b16 %v811
        %v926 = vunpack.c.l.b16 %v812
        %v927 = vunpack.c.h.b16 %v812
        %v928 = vunpack.c.l.b16 %v813
        %v929 = vunpack.c.h.b16 %v813
        %v930 = vunpack.c.l.b16 %v814
        %v931 = vunpack.c.h.b16 %v814
        %v932 = vunpack.c.l.b16 %v815
        %v933 = vunpack.c.h.b16 %v815
        %v934 = vunpack.c.l.b16 %v816
        %v935 = vunpack.c.h.b16 %v816
        %v936 = vunpack.c.l.b16 %v817
        %v937 = vunpack.c.h.b16 %v817
        %v938 = vunpack.c.l.b16 %v818
        %v939 = vunpack.c.h.b16 %v818
        %v940 = vunpack.c.l.b16 %v819
        %v941 = vunpack.c.h.b16 %v819
        %v942 = vunpack.c.l.b16 %v820
        %v943 = vunpack.c.h.b16 %v820
        %v944 = vunpack.c.l.b16 %v821
        %v945 = vunpack.c.h.b16 %v821
        %v946 = vunpack.c.l.b16 %v822
        %v947 = vunpack.c.h.b16 %v822
        %v948 = vunpack.c.l.b16 %v823
        %v949 = vunpack.c.h.b16 %v823
        %v950 = vunpack.c.l.b16 %v824
        %v951 = vunpack.c.h.b16 %v824
        %v952 = vunpack.c.l.b16 %v825
        %v953 = vunpack.c.h.b16 %v825
        %v954 = vunpack.c.l.b16 %v826
        %v955 = vunpack.c.h.b16 %v826
        %v956 = vunpack.c.l.b16 %v827
        %v957 = vunpack.c.h.b16 %v827
        %v958 = vunpack.c.l.b16 %v828
        %v959 = vunpack.c.h.b16 %v828
        %v960 = vunpack.c.l.b16 %v829
        %v961 = vunpack.c.h.b16 %v829
        %v962 = vunpack.c.l.b16 %v830
        %v963 = vunpack.c.h.b16 %v830
        %v964 = vunpack.c.l.b16 %v831
        %v965 = vunpack.c.h.b16 %v831
        %v966 = vunpack.c.l.b16 %v832
        %v967 = vunpack.c.h.b16 %v832
        %v968 = vunpack.c.l.b16 %v833
        %v969 = vunpack.c.h.b16 %v833
        %v970 = vunpack.c.l.b16 %v834
        %v971 = vunpack.c.h.b16 %v834
        %v972 = vunpack.c.l.b16 %v835
        %v973 = vunpack.c.h.b16 %v835
        %v974 = vunpack.c.l.b16 %v836
        %v975 = vunpack.c.h.b16 %v836
        %v976 = vunpack.c.l.b16 %v837
        %v977 = vunpack.c.h.b16 %v837
        %v978 = vunpack.c.l.b16 %v838
        %v979 = vunpack.c.h.b16 %v838
        %v980 = vunpack.c.l.b16 %v839
        %v981 = vunpack.c.h.b16 %v839
        %v982 = vunpack.c.l.b16 %v840
        %v983 = vunpack.c.h.b16 %v840
        %v984 = vunpack.c.l.b16 %v841
        %v985 = vunpack.c.h.b16 %v841
        %v986 = vunpack.c.l.b16 %v842
        %v987 = vunpack.c.h.b16 %v842
        %v988 = vunpack.c.l.b16 %v843
        %v989 = vunpack.c.h.b16 %v843
        %v990 = vunpack.c.l.b16 %v844
        %v991 = vunpack.c.h.b16 %v844
        %v992 = vunpack.c.l.b16 %v845
        %v993 = vunpack.c.h.b16 %v845
        %v994 = vunpack.c.l.b16 %v846
        %v995 = vunpack.c.h.b16 %v846
        %v996 = vunpack.c.l.b16 %v847
        %v997 = vunpack.c.h.b16 %v847
        %v998 = vunpack.c.l.b16 %v848
        %v999 = vunpack.c.h.b16 %v848
        %v1000 = vunpack.c.l.b16 %v849
        %v1001 = vunpack.c.h.b16 %v849
        %v1002 = vunpack.c.l.b16 %v850
        %v1003 = vunpack.c.h.b16 %v850
        %v1004 = vunpack.c.l.b16 %v851
        %v1005 = vunpack.c.h.b16 %v851
        %v1006 = vunpack.c.l.b16 %v852
        %v1007 = vunpack.c.h.b16 %v852
        %v1008 = vunpack.c.l.b16 %v853
        %v1009 = vunpack.c.h.b16 %v853
        %v1010 = vpack.c.b16 %v918, %v914
        %v1011 = vpack.c.b16 %v919, %v915
        %v1012 = vpack.c.b16 %v920, %v916
        %v1013 = vpack.c.b16 %v921, %v917
        %v1014 = vpack.c.b16 %v926, %v922
        %v1015 = vpack.c.b16 %v927, %v923
        %v1016 = vpack.c.b16 %v928, %v924
        %v1017 = vpack.c.b16 %v929, %v925
        %v1018 = vpack.c.b16 %v934, %v930
        %v1019 = vpack.c.b16 %v935, %v931
        %v1020 = vpack.c.b16 %v936, %v932
        %v1021 = vpack.c.b16 %v937, %v933
        %v1022 = vpack.c.b16 %v942, %v938
        %v1023 = vpack.c.b16 %v943, %v939
        %v1024 = vpack.c.b16 %v944, %v940
        %v1025 = vpack.c.b16 %v945, %v941
        %v1026 = vpack.c.b16 %v950, %v946
        %v1027 = vpack.c.b16 %v951, %v947
        %v1028 = vpack.c.b16 %v952, %v948
        %v1029 = vpack.c.b16 %v953, %v949
        %v1030 = vpack.c.b16 %v958, %v954
        %v1031 = vpack.c.b16 %v959, %v955
        %v1032 = vpack.c.b16 %v960, %v956
        %v1033 = vpack.c.b16 %v961, %v957
        %v1034 = vpack.c.b16 %v966, %v962
        %v1035 = vpack.c.b16 %v967, %v963
        %v1036 = vpack.c.b16 %v968, %v964
        %v1037 = vpack.c.b16 %v969, %v965
        %v1038 = vpack.c.b16 %v974, %v970
        %v1039 = vpack.c.b16 %v975, %v971
        %v1040 = vpack.c.b16 %v976, %v972
        %v1041 = vpack.c.b16 %v977, %v973
        %v1042 = vpack.c.b16 %v982, %v978
        %v1043 = vpack.c.b16 %v983, %v979
        %v1044 = vpack.c.b16 %v984, %v980
        %v1045 = vpack.c.b16 %v985, %v981
        %v1046 = vpack.c.b16 %v990, %v986
        %v1047 = vpack.c.b16 %v991, %v987
        %v1048 = vpack.c.b16 %v992, %v988
        %v1049 = vpack.c.b16 %v993, %v989
        %v1050 = vpack.c.b16 %v998, %v994
        %v1051 = vpack.c.b16 %v999, %v995
        %v1052 = vpack.c.b16 %v1000, %v996
        %v1053 = vpack.c.b16 %v1001, %v997
        %v1054 = vpack.c.b16 %v1006, %v1002
        %v1055 = vpack.c.b16 %v1007, %v1003
        %v1056 = vpack.c.b16 %v1008, %v1004
        %v1057 = vpack.c.b16 %v1009, %v1005
        %vm1106 = vcmask 523264
        %v1108 = vsel %vm1106, %v864, 0
        %1110 = vmatprep.subr.bf16.mxu0 %v1039
        %1111 = vmatpush1.bf16.msra.mxu0 %v1038
        %1112 = vmatprep.subr.bf16.mxu0 %v1035
        %1113 = vmatpush1.bf16.msra.mxu0 %v1034
        %1114 = vmatprep.subr.bf16.mxu0 %v1031
        %1115 = vmatpush1.bf16.msra.mxu0 %v1030
        %1116 = vmatprep.subr.bf16.mxu0 %v1027
        %1117 = vmatpush1.bf16.msra.mxu0 %v1026
        %1118 = vmatprep.subr.bf16.mxu0 %v1023
        %1119 = vmatpush1.bf16.msra.mxu0 %v1022
        %1120 = vmatprep.subr.bf16.mxu0 %v1019
        %1121 = vmatpush1.bf16.msra.mxu0 %v1018
        %1122 = vmatprep.subr.bf16.mxu0 %v1015
        %1123 = vmatpush1.bf16.msra.mxu0 %v1014
        %1124 = vmatprep.subr.bf16.mxu0 %v1011
        %1125 = vmatpush1.bf16.msra.mxu0 %v1010
        %1126 = vmatprep.subr.bf16.mxu0 0
        %1127 = vmatpush2.bf16.msra.mxu0 0
        %1128 = vmatprep.subr.bf16.mxu0 0
        %1129 = vmatpush2.bf16.msra.mxu0 0
        %1130 = vmatprep.subr.bf16.mxu0 0
        %1131 = vmatpush2.bf16.msra.mxu0 0
        %1132 = vmatprep.subr.bf16.mxu0 0
        %1133 = vmatpush2.bf16.msra.mxu0 0
        %1134 = vmatprep.subr.bf16.mxu0 %v1055
        %1135 = vmatpush2.bf16.msra.mxu0 %v1054
        %1136 = vmatprep.subr.bf16.mxu0 %v1051
        %1137 = vmatpush2.bf16.msra.mxu0 %v1050
        %1138 = vmatprep.subr.bf16.mxu0 %v1047
        %1139 = vmatpush2.bf16.msra.mxu0 %v1046
        %1140 = vmatprep.subr.bf16.mxu0 %v1043
        %1141 = vmatpush2.bf16.msra.mxu0 %v1042
        %1142 = vmatprep.mubr.bf16.mxu0 %v1108
        %1143 = vmatmul.mubr.bf16.gmra.mxu0 %v863
        %v1144 = vpop.f32.mrf.mxu0
        %v1145 = vadd.f32 %v858, %v1144
        %v1146 = vpop.f32.mrf.mxu0
        %v1147 = vadd.f32 %v858, %v1146
        %v1148 = vpop.f32.mrf.mxu0
        %v1149 = vpop.f32.mrf.mxu0
        %1150 = vdwg.mxu0
        %1151 = vmatprep.subr.bf16.mxu0 %v1041
        %1152 = vmatpush1.bf16.msra.mxu0 %v1040
        %1153 = vmatprep.subr.bf16.mxu0 %v1037
        %1154 = vmatpush1.bf16.msra.mxu0 %v1036
        %1155 = vmatprep.subr.bf16.mxu0 %v1033
        %1156 = vmatpush1.bf16.msra.mxu0 %v1032
        %1157 = vmatprep.subr.bf16.mxu0 %v1029
        %1158 = vmatpush1.bf16.msra.mxu0 %v1028
        %1159 = vmatprep.subr.bf16.mxu0 %v1025
        %1160 = vmatpush1.bf16.msra.mxu0 %v1024
        %1161 = vmatprep.subr.bf16.mxu0 %v1021
        %1162 = vmatpush1.bf16.msra.mxu0 %v1020
        %1163 = vmatprep.subr.bf16.mxu0 %v1017
        %1164 = vmatpush1.bf16.msra.mxu0 %v1016
        %1165 = vmatprep.subr.bf16.mxu0 %v1013
        %1166 = vmatpush1.bf16.msra.mxu0 %v1012
        %1167 = vmatprep.subr.bf16.mxu0 0
        %1168 = vmatpush2.bf16.msra.mxu0 0
        %1169 = vmatprep.subr.bf16.mxu0 0
        %1170 = vmatpush2.bf16.msra.mxu0 0
        %1171 = vmatprep.subr.bf16.mxu0 0
        %1172 = vmatpush2.bf16.msra.mxu0 0
        %1173 = vmatprep.subr.bf16.mxu0 0
        %1174 = vmatpush2.bf16.msra.mxu0 0
        %1175 = vmatprep.subr.bf16.mxu0 %v1057
        %1176 = vmatpush2.bf16.msra.mxu0 %v1056
        %1177 = vmatprep.subr.bf16.mxu0 %v1053
        %1178 = vmatpush2.bf16.msra.mxu0 %v1052
        %1179 = vmatprep.subr.bf16.mxu0 %v1049
        %1180 = vmatpush2.bf16.msra.mxu0 %v1048
        %1181 = vmatprep.subr.bf16.mxu0 %v1045
        %1182 = vmatpush2.bf16.msra.mxu0 %v1044
        %1183 = vmatprep.mubr.bf16.mxu0 %v1108
        %1184 = vmatmul.mubr.bf16.gmra.mxu0 %v863
        %v1185 = vpop.f32.mrf.mxu0
        %v1186 = vadd.f32 %v858, %v1185
        %v1187 = vpop.f32.mrf.mxu0
        %v1188 = vadd.f32 %v858, %v1187
        %v1189 = vpop.f32.mrf.mxu0
        %v1190 = vpop.f32.mrf.mxu0
        %1191 = vdwg.mxu0
        %v1192 = vmax.f32 %v1145, 0.0
        %v1193 = vmax.f32 %v1147, 0.0
        %v1194 = vmax.f32 %v1186, 0.0
        %v1195 = vmax.f32 %v1188, 0.0
        %v1196 = vpack.c.bf16 %v1192, %v1192
        %v1197 = vpack.c.bf16 %v1193, %v1193
        %v1198 = vpack.c.bf16 %v1194, %v1194
        %v1199 = vpack.c.bf16 %v1195, %v1195
        %v1204 = vunpack.c.l.b16 %v1196
        %v1205 = vunpack.c.l.b16 %v1197
        %v1206 = vunpack.c.l.b16 %v1198
        %v1207 = vunpack.c.l.b16 %v1199
        %v1208 = vpack.c.b16 %v1205, %v1204
        %v1209 = vpack.c.b16 %v1207, %v1206
        %1212 = vst [vmem:[%s793] sm:$0x77] %v1208
        %1213 = vst [vmem:[%s793 + $0x8] sm:$0x77] %v1209
        %s1214 = sand.u32 %s90, 1
        %s1215 = sand.u32 %s90, 1
        %s1216 = smul.addr %s1215, 16
        %s1217 = scalar_lea.vmem [#allocation3], %s1216
        // Predicated region
        $region99: #{critic_forward.4} parent=93 // pred_check
          %p1218 = pneg %p100
        $region100: #{critic_forward.4} parent=93 // pred_check_branch
          %1220 = sbr.rel (%p1218) target = $region102
        $region101: #{critic_forward.4} parent=93 // pred_region
          %s1221 = smul.u32 4, %s14
          %s1222 = ssub.s32 22, %s1221
          %p1223 = scmp.lt.s32.totalorder %s1222, 4
          %s1224 = scalar_select %p1223, %s1222, 4
          %s1225 = smul.u32 64, %s1224
          %p1226 = scmp.ne.s32.totalorder 0, %s1225
          %s1227 = smul.addr %s1221, 4
          %s1228 = scalar_lea.vmem %s3, %s1227
          %s1229 = smul.u32 %s1224, 4
          // Predicated region
          $region103: #{critic_forward.4} parent=101 // pred_check
            %p1230 = pneg %p1226
          $region104: #{critic_forward.4} parent=101 // pred_check_branch
            %1232 = sbr.rel (%p1230) target = $region106
          $region105: #{critic_forward.4} parent=101 // pred_region
            %p1233 = scmp.lt.u32.totalorder %s1229, 8
            %p1234 = pneg %p1233
            // Predicated region
            $region107: #{critic_forward.4} parent=105 // pred_check
              _
            $region108: #{critic_forward.4} parent=105 // pred_check_branch
              %1236 = sbr.rel (%p1233) target = $region110
            $region109: #{critic_forward.4} parent=105 // pred_region
              %s1252 = sand.u32 %s1229, 7
              %p1253 = scmp.eq.s32.totalorder %s1252, 0
              // Predicated region
              $region122: #{critic_forward.4} parent=109 // pred_check
                %p1254 = pneg %p1253
              $region123: #{critic_forward.4} parent=109 // pred_check_branch
                %1256 = sbr.rel (%p1254) target = $region125
              $region124: #{critic_forward.4} parent=109 // pred_region
                %s1257 = sshrl.u32 %s1229, 3
                %s1258 = sshrl.u32 %s1257, 6
                // While loop
                $region126: #{critic_forward.4} parent=124 // loop_pre_header
                  _
                $region127: #{critic_forward.4} parent=124 // loop_header
                  %s1262 = sphi 0, %s1264
                  %p1263 = scmp.ge.s32.totalorder %s1262, %s1258
                  %s1267 = sphi 0, %s1400
                  %s1268 = sphi %s1217, %s1403
                  %s1269 = sphi %s1228, %s1404
                $region128: #{critic_forward.4} parent=124 // loop_header_branch
                  %1266 = sbr.rel (%p1263) target = $region132
                $region129: #{critic_forward.4} parent=124 // loop_body
                  %v1270 = vld [vmem:[%s1268] sm:$0xff]
                  %1271 = vst [vmem:[%s1269] sm:$0xff] %v1270
                  %v1272 = vld [vmem:[%s1268 + $0x8] sm:$0xff]
                  %1273 = vst [vmem:[%s1269 + $0x8] sm:$0xff] %v1272
                  %v1274 = vld [vmem:[%s1268 + $0x10] sm:$0xff]
                  %1275 = vst [vmem:[%s1269 + $0x10] sm:$0xff] %v1274
                  %v1276 = vld [vmem:[%s1268 + $0x18] sm:$0xff]
                  %1277 = vst [vmem:[%s1269 + $0x18] sm:$0xff] %v1276
                  %v1278 = vld [vmem:[%s1268 + $0x20] sm:$0xff]
                  %1279 = vst [vmem:[%s1269 + $0x20] sm:$0xff] %v1278
                  %v1280 = vld [vmem:[%s1268 + $0x28] sm:$0xff]
                  %1281 = vst [vmem:[%s1269 + $0x28] sm:$0xff] %v1280
                  %v1282 = vld [vmem:[%s1268 + $0x30] sm:$0xff]
                  %1283 = vst [vmem:[%s1269 + $0x30] sm:$0xff] %v1282
                  %v1284 = vld [vmem:[%s1268 + $0x38] sm:$0xff]
                  %1285 = vst [vmem:[%s1269 + $0x38] sm:$0xff] %v1284
                  %v1286 = vld [vmem:[%s1268 + $0x40] sm:$0xff]
                  %1287 = vst [vmem:[%s1269 + $0x40] sm:$0xff] %v1286
                  %v1288 = vld [vmem:[%s1268 + $0x48] sm:$0xff]
                  %1289 = vst [vmem:[%s1269 + $0x48] sm:$0xff] %v1288
                  %v1290 = vld [vmem:[%s1268 + $0x50] sm:$0xff]
                  %1291 = vst [vmem:[%s1269 + $0x50] sm:$0xff] %v1290
                  %v1292 = vld [vmem:[%s1268 + $0x58] sm:$0xff]
                  %1293 = vst [vmem:[%s1269 + $0x58] sm:$0xff] %v1292
                  %v1294 = vld [vmem:[%s1268 + $0x60] sm:$0xff]
                  %1295 = vst [vmem:[%s1269 + $0x60] sm:$0xff] %v1294
                  %v1296 = vld [vmem:[%s1268 + $0x68] sm:$0xff]
                  %1297 = vst [vmem:[%s1269 + $0x68] sm:$0xff] %v1296
                  %v1298 = vld [vmem:[%s1268 + $0x70] sm:$0xff]
                  %1299 = vst [vmem:[%s1269 + $0x70] sm:$0xff] %v1298
                  %v1300 = vld [vmem:[%s1268 + $0x78] sm:$0xff]
                  %1301 = vst [vmem:[%s1269 + $0x78] sm:$0xff] %v1300
                  %v1302 = vld [vmem:[%s1268 + $0x80] sm:$0xff]
                  %1303 = vst [vmem:[%s1269 + $0x80] sm:$0xff] %v1302
                  %v1304 = vld [vmem:[%s1268 + $0x88] sm:$0xff]
                  %1305 = vst [vmem:[%s1269 + $0x88] sm:$0xff] %v1304
                  %v1306 = vld [vmem:[%s1268 + $0x90] sm:$0xff]
                  %1307 = vst [vmem:[%s1269 + $0x90] sm:$0xff] %v1306
                  %v1308 = vld [vmem:[%s1268 + $0x98] sm:$0xff]
                  %1309 = vst [vmem:[%s1269 + $0x98] sm:$0xff] %v1308
                  %v1310 = vld [vmem:[%s1268 + $0xa0] sm:$0xff]
                  %1311 = vst [vmem:[%s1269 + $0xa0] sm:$0xff] %v1310
                  %v1312 = vld [vmem:[%s1268 + $0xa8] sm:$0xff]
                  %1313 = vst [vmem:[%s1269 + $0xa8] sm:$0xff] %v1312
                  %v1314 = vld [vmem:[%s1268 + $0xb0] sm:$0xff]
                  %1315 = vst [vmem:[%s1269 + $0xb0] sm:$0xff] %v1314
                  %v1316 = vld [vmem:[%s1268 + $0xb8] sm:$0xff]
                  %1317 = vst [vmem:[%s1269 + $0xb8] sm:$0xff] %v1316
                  %v1318 = vld [vmem:[%s1268 + $0xc0] sm:$0xff]
                  %1319 = vst [vmem:[%s1269 + $0xc0] sm:$0xff] %v1318
                  %v1320 = vld [vmem:[%s1268 + $0xc8] sm:$0xff]
                  %1321 = vst [vmem:[%s1269 + $0xc8] sm:$0xff] %v1320
                  %v1322 = vld [vmem:[%s1268 + $0xd0] sm:$0xff]
                  %1323 = vst [vmem:[%s1269 + $0xd0] sm:$0xff] %v1322
                  %v1324 = vld [vmem:[%s1268 + $0xd8] sm:$0xff]
                  %1325 = vst [vmem:[%s1269 + $0xd8] sm:$0xff] %v1324
                  %v1326 = vld [vmem:[%s1268 + $0xe0] sm:$0xff]
                  %1327 = vst [vmem:[%s1269 + $0xe0] sm:$0xff] %v1326
                  %v1328 = vld [vmem:[%s1268 + $0xe8] sm:$0xff]
                  %1329 = vst [vmem:[%s1269 + $0xe8] sm:$0xff] %v1328
                  %v1330 = vld [vmem:[%s1268 + $0xf0] sm:$0xff]
                  %1331 = vst [vmem:[%s1269 + $0xf0] sm:$0xff] %v1330
                  %v1332 = vld [vmem:[%s1268 + $0xf8] sm:$0xff]
                  %1333 = vst [vmem:[%s1269 + $0xf8] sm:$0xff] %v1332
                  %v1334 = vld [vmem:[%s1268 + $0x100] sm:$0xff]
                  %1335 = vst [vmem:[%s1269 + $0x100] sm:$0xff] %v1334
                  %v1336 = vld [vmem:[%s1268 + $0x108] sm:$0xff]
                  %1337 = vst [vmem:[%s1269 + $0x108] sm:$0xff] %v1336
                  %v1338 = vld [vmem:[%s1268 + $0x110] sm:$0xff]
                  %1339 = vst [vmem:[%s1269 + $0x110] sm:$0xff] %v1338
                  %v1340 = vld [vmem:[%s1268 + $0x118] sm:$0xff]
                  %1341 = vst [vmem:[%s1269 + $0x118] sm:$0xff] %v1340
                  %v1342 = vld [vmem:[%s1268 + $0x120] sm:$0xff]
                  %1343 = vst [vmem:[%s1269 + $0x120] sm:$0xff] %v1342
                  %v1344 = vld [vmem:[%s1268 + $0x128] sm:$0xff]
                  %1345 = vst [vmem:[%s1269 + $0x128] sm:$0xff] %v1344
                  %v1346 = vld [vmem:[%s1268 + $0x130] sm:$0xff]
                  %1347 = vst [vmem:[%s1269 + $0x130] sm:$0xff] %v1346
                  %v1348 = vld [vmem:[%s1268 + $0x138] sm:$0xff]
                  %1349 = vst [vmem:[%s1269 + $0x138] sm:$0xff] %v1348
                  %v1350 = vld [vmem:[%s1268 + $0x140] sm:$0xff]
                  %1351 = vst [vmem:[%s1269 + $0x140] sm:$0xff] %v1350
                  %v1352 = vld [vmem:[%s1268 + $0x148] sm:$0xff]
                  %1353 = vst [vmem:[%s1269 + $0x148] sm:$0xff] %v1352
                  %v1354 = vld [vmem:[%s1268 + $0x150] sm:$0xff]
                  %1355 = vst [vmem:[%s1269 + $0x150] sm:$0xff] %v1354
                  %v1356 = vld [vmem:[%s1268 + $0x158] sm:$0xff]
                  %1357 = vst [vmem:[%s1269 + $0x158] sm:$0xff] %v1356
                  %v1358 = vld [vmem:[%s1268 + $0x160] sm:$0xff]
                  %1359 = vst [vmem:[%s1269 + $0x160] sm:$0xff] %v1358
                  %v1360 = vld [vmem:[%s1268 + $0x168] sm:$0xff]
                  %1361 = vst [vmem:[%s1269 + $0x168] sm:$0xff] %v1360
                  %v1362 = vld [vmem:[%s1268 + $0x170] sm:$0xff]
                  %1363 = vst [vmem:[%s1269 + $0x170] sm:$0xff] %v1362
                  %v1364 = vld [vmem:[%s1268 + $0x178] sm:$0xff]
                  %1365 = vst [vmem:[%s1269 + $0x178] sm:$0xff] %v1364
                  %v1366 = vld [vmem:[%s1268 + $0x180] sm:$0xff]
                  %1367 = vst [vmem:[%s1269 + $0x180] sm:$0xff] %v1366
                  %v1368 = vld [vmem:[%s1268 + $0x188] sm:$0xff]
                  %1369 = vst [vmem:[%s1269 + $0x188] sm:$0xff] %v1368
                  %v1370 = vld [vmem:[%s1268 + $0x190] sm:$0xff]
                  %1371 = vst [vmem:[%s1269 + $0x190] sm:$0xff] %v1370
                  %v1372 = vld [vmem:[%s1268 + $0x198] sm:$0xff]
                  %1373 = vst [vmem:[%s1269 + $0x198] sm:$0xff] %v1372
                  %v1374 = vld [vmem:[%s1268 + $0x1a0] sm:$0xff]
                  %1375 = vst [vmem:[%s1269 + $0x1a0] sm:$0xff] %v1374
                  %v1376 = vld [vmem:[%s1268 + $0x1a8] sm:$0xff]
                  %1377 = vst [vmem:[%s1269 + $0x1a8] sm:$0xff] %v1376
                  %v1378 = vld [vmem:[%s1268 + $0x1b0] sm:$0xff]
                  %1379 = vst [vmem:[%s1269 + $0x1b0] sm:$0xff] %v1378
                  %v1380 = vld [vmem:[%s1268 + $0x1b8] sm:$0xff]
                  %1381 = vst [vmem:[%s1269 + $0x1b8] sm:$0xff] %v1380
                  %v1382 = vld [vmem:[%s1268 + $0x1c0] sm:$0xff]
                  %1383 = vst [vmem:[%s1269 + $0x1c0] sm:$0xff] %v1382
                  %v1384 = vld [vmem:[%s1268 + $0x1c8] sm:$0xff]
                  %1385 = vst [vmem:[%s1269 + $0x1c8] sm:$0xff] %v1384
                  %v1386 = vld [vmem:[%s1268 + $0x1d0] sm:$0xff]
                  %1387 = vst [vmem:[%s1269 + $0x1d0] sm:$0xff] %v1386
                  %v1388 = vld [vmem:[%s1268 + $0x1d8] sm:$0xff]
                  %1389 = vst [vmem:[%s1269 + $0x1d8] sm:$0xff] %v1388
                  %v1390 = vld [vmem:[%s1268 + $0x1e0] sm:$0xff]
                  %1391 = vst [vmem:[%s1269 + $0x1e0] sm:$0xff] %v1390
                  %v1392 = vld [vmem:[%s1268 + $0x1e8] sm:$0xff]
                  %1393 = vst [vmem:[%s1269 + $0x1e8] sm:$0xff] %v1392
                  %v1394 = vld [vmem:[%s1268 + $0x1f0] sm:$0xff]
                  %1395 = vst [vmem:[%s1269 + $0x1f0] sm:$0xff] %v1394
                  %v1396 = vld [vmem:[%s1268 + $0x1f8] sm:$0xff]
                  %1397 = vst [vmem:[%s1269 + $0x1f8] sm:$0xff] %v1396
                  %s1398 = sadd.s32 1, %s1267
                  %p1399 = scmp.ge.s32.totalorder %s1398, %s1258
                  %s1400 = scalar_select %p1399, 0, %s1398
                  %s1401 = smul.u32 %s1400, 512
                  %s1402 = smul.u32 %s1400, 512
                  %s1403 = scalar_lea.vmem %s1217, %s1401 [#allocation3]
                  %s1404 = scalar_lea.vmem %s1228, %s1402
                $region130: #{critic_forward.4} parent=124 // loop_footer
                  %s1264 = sadd.s32 %s1262, 1
                $region131: #{critic_forward.4} parent=124 // loop_footer_branch
                  %1261 = sbr.rel target = $region127
                $region132: #{critic_forward.4} parent=124 // loop_exit
                  _
                %s1405 = sshrl.u32 %s1257, 6
                %s1406 = sand.u32 %s1257, 63
                %s1407 = smul.u32 %s1405, 64
                %s1408 = smul.u32 128, %s1407
                %s1409 = sshra.s32 %s1408, 4
                %s1410 = scalar_lea.vmem %s1217, %s1409 [#allocation3]
                %s1411 = smul.u32 128, %s1407
                %s1412 = sshra.s32 %s1411, 4
                %s1413 = scalar_lea.vmem %s1228, %s1412
                // While loop
                $region133: #{critic_forward.4} parent=124 // loop_pre_header
                  _
                $region134: #{critic_forward.4} parent=124 // loop_header
                  %s1417 = sphi 0, %s1419
                  %p1418 = scmp.ge.s32.totalorder %s1417, %s1406
                  %s1422 = sphi 0, %s1429
                  %s1423 = sphi %s1410, %s1432
                  %s1424 = sphi %s1413, %s1433
                $region135: #{critic_forward.4} parent=124 // loop_header_branch
                  %1421 = sbr.rel (%p1418) target = $region139
                $region136: #{critic_forward.4} parent=124 // loop_body
                  %v1425 = vld [vmem:[%s1423] sm:$0xff]
                  %1426 = vst [vmem:[%s1424] sm:$0xff] %v1425
                  %s1427 = sadd.s32 1, %s1422
                  %p1428 = scmp.ge.s32.totalorder %s1427, %s1406
                  %s1429 = scalar_select %p1428, 0, %s1427
                  %s1430 = smul.u32 %s1429, 8
                  %s1431 = smul.u32 %s1429, 8
                  %s1432 = scalar_lea.vmem %s1410, %s1430 [#allocation3]
                  %s1433 = scalar_lea.vmem %s1413, %s1431
                $region137: #{critic_forward.4} parent=124 // loop_footer
                  %s1419 = sadd.s32 %s1417, 1
                $region138: #{critic_forward.4} parent=124 // loop_footer_branch
                  %1416 = sbr.rel target = $region134
                $region139: #{critic_forward.4} parent=124 // loop_exit
                  _
              $region125: #{critic_forward.4} parent=109 // pred_fallthru
                _
              %p1434 = pneg %p1253
              // Predicated region
              $region140: #{critic_forward.4} parent=109 // pred_check
                _
              $region141: #{critic_forward.4} parent=109 // pred_check_branch
                %1436 = sbr.rel (%p1253) target = $region143
              $region142: #{critic_forward.4} parent=109 // pred_region
                %s1437 = sand.u32 %s1229, 7
                %s1438 = ssub.s32 %s1229, %s1437
                %s1439 = scalar_lea.vmem %s1217, %s1438 [#allocation3]
                %s1440 = ssub.s32 %s1229, %s1437
                %s1441 = scalar_lea.vmem %s1228, %s1440
                %s1442 = sshrl.u32 %s1229, 3
                %s1443 = sshrl.u32 %s1442, 6
                // While loop
                $region144: #{critic_forward.4} parent=142 // loop_pre_header
                  _
                $region145: #{critic_forward.4} parent=142 // loop_header
                  %s1447 = sphi 0, %s1449
                  %p1448 = scmp.ge.s32.totalorder %s1447, %s1443
                  %s1452 = sphi 0, %s1585
                  %s1453 = sphi %s1217, %s1588
                  %s1454 = sphi %s1228, %s1589
                $region146: #{critic_forward.4} parent=142 // loop_header_branch
                  %1451 = sbr.rel (%p1448) target = $region150
                $region147: #{critic_forward.4} parent=142 // loop_body
                  %v1455 = vld [vmem:[%s1453] sm:$0xff]
                  %1456 = vst [vmem:[%s1454] sm:$0xff] %v1455
                  %v1457 = vld [vmem:[%s1453 + $0x8] sm:$0xff]
                  %1458 = vst [vmem:[%s1454 + $0x8] sm:$0xff] %v1457
                  %v1459 = vld [vmem:[%s1453 + $0x10] sm:$0xff]
                  %1460 = vst [vmem:[%s1454 + $0x10] sm:$0xff] %v1459
                  %v1461 = vld [vmem:[%s1453 + $0x18] sm:$0xff]
                  %1462 = vst [vmem:[%s1454 + $0x18] sm:$0xff] %v1461
                  %v1463 = vld [vmem:[%s1453 + $0x20] sm:$0xff]
                  %1464 = vst [vmem:[%s1454 + $0x20] sm:$0xff] %v1463
                  %v1465 = vld [vmem:[%s1453 + $0x28] sm:$0xff]
                  %1466 = vst [vmem:[%s1454 + $0x28] sm:$0xff] %v1465
                  %v1467 = vld [vmem:[%s1453 + $0x30] sm:$0xff]
                  %1468 = vst [vmem:[%s1454 + $0x30] sm:$0xff] %v1467
                  %v1469 = vld [vmem:[%s1453 + $0x38] sm:$0xff]
                  %1470 = vst [vmem:[%s1454 + $0x38] sm:$0xff] %v1469
                  %v1471 = vld [vmem:[%s1453 + $0x40] sm:$0xff]
                  %1472 = vst [vmem:[%s1454 + $0x40] sm:$0xff] %v1471
                  %v1473 = vld [vmem:[%s1453 + $0x48] sm:$0xff]
                  %1474 = vst [vmem:[%s1454 + $0x48] sm:$0xff] %v1473
                  %v1475 = vld [vmem:[%s1453 + $0x50] sm:$0xff]
                  %1476 = vst [vmem:[%s1454 + $0x50] sm:$0xff] %v1475
                  %v1477 = vld [vmem:[%s1453 + $0x58] sm:$0xff]
                  %1478 = vst [vmem:[%s1454 + $0x58] sm:$0xff] %v1477
                  %v1479 = vld [vmem:[%s1453 + $0x60] sm:$0xff]
                  %1480 = vst [vmem:[%s1454 + $0x60] sm:$0xff] %v1479
                  %v1481 = vld [vmem:[%s1453 + $0x68] sm:$0xff]
                  %1482 = vst [vmem:[%s1454 + $0x68] sm:$0xff] %v1481
                  %v1483 = vld [vmem:[%s1453 + $0x70] sm:$0xff]
                  %1484 = vst [vmem:[%s1454 + $0x70] sm:$0xff] %v1483
                  %v1485 = vld [vmem:[%s1453 + $0x78] sm:$0xff]
                  %1486 = vst [vmem:[%s1454 + $0x78] sm:$0xff] %v1485
                  %v1487 = vld [vmem:[%s1453 + $0x80] sm:$0xff]
                  %1488 = vst [vmem:[%s1454 + $0x80] sm:$0xff] %v1487
                  %v1489 = vld [vmem:[%s1453 + $0x88] sm:$0xff]
                  %1490 = vst [vmem:[%s1454 + $0x88] sm:$0xff] %v1489
                  %v1491 = vld [vmem:[%s1453 + $0x90] sm:$0xff]
                  %1492 = vst [vmem:[%s1454 + $0x90] sm:$0xff] %v1491
                  %v1493 = vld [vmem:[%s1453 + $0x98] sm:$0xff]
                  %1494 = vst [vmem:[%s1454 + $0x98] sm:$0xff] %v1493
                  %v1495 = vld [vmem:[%s1453 + $0xa0] sm:$0xff]
                  %1496 = vst [vmem:[%s1454 + $0xa0] sm:$0xff] %v1495
                  %v1497 = vld [vmem:[%s1453 + $0xa8] sm:$0xff]
                  %1498 = vst [vmem:[%s1454 + $0xa8] sm:$0xff] %v1497
                  %v1499 = vld [vmem:[%s1453 + $0xb0] sm:$0xff]
                  %1500 = vst [vmem:[%s1454 + $0xb0] sm:$0xff] %v1499
                  %v1501 = vld [vmem:[%s1453 + $0xb8] sm:$0xff]
                  %1502 = vst [vmem:[%s1454 + $0xb8] sm:$0xff] %v1501
                  %v1503 = vld [vmem:[%s1453 + $0xc0] sm:$0xff]
                  %1504 = vst [vmem:[%s1454 + $0xc0] sm:$0xff] %v1503
                  %v1505 = vld [vmem:[%s1453 + $0xc8] sm:$0xff]
                  %1506 = vst [vmem:[%s1454 + $0xc8] sm:$0xff] %v1505
                  %v1507 = vld [vmem:[%s1453 + $0xd0] sm:$0xff]
                  %1508 = vst [vmem:[%s1454 + $0xd0] sm:$0xff] %v1507
                  %v1509 = vld [vmem:[%s1453 + $0xd8] sm:$0xff]
                  %1510 = vst [vmem:[%s1454 + $0xd8] sm:$0xff] %v1509
                  %v1511 = vld [vmem:[%s1453 + $0xe0] sm:$0xff]
                  %1512 = vst [vmem:[%s1454 + $0xe0] sm:$0xff] %v1511
                  %v1513 = vld [vmem:[%s1453 + $0xe8] sm:$0xff]
                  %1514 = vst [vmem:[%s1454 + $0xe8] sm:$0xff] %v1513
                  %v1515 = vld [vmem:[%s1453 + $0xf0] sm:$0xff]
                  %1516 = vst [vmem:[%s1454 + $0xf0] sm:$0xff] %v1515
                  %v1517 = vld [vmem:[%s1453 + $0xf8] sm:$0xff]
                  %1518 = vst [vmem:[%s1454 + $0xf8] sm:$0xff] %v1517
                  %v1519 = vld [vmem:[%s1453 + $0x100] sm:$0xff]
                  %1520 = vst [vmem:[%s1454 + $0x100] sm:$0xff] %v1519
                  %v1521 = vld [vmem:[%s1453 + $0x108] sm:$0xff]
                  %1522 = vst [vmem:[%s1454 + $0x108] sm:$0xff] %v1521
                  %v1523 = vld [vmem:[%s1453 + $0x110] sm:$0xff]
                  %1524 = vst [vmem:[%s1454 + $0x110] sm:$0xff] %v1523
                  %v1525 = vld [vmem:[%s1453 + $0x118] sm:$0xff]
                  %1526 = vst [vmem:[%s1454 + $0x118] sm:$0xff] %v1525
                  %v1527 = vld [vmem:[%s1453 + $0x120] sm:$0xff]
                  %1528 = vst [vmem:[%s1454 + $0x120] sm:$0xff] %v1527
                  %v1529 = vld [vmem:[%s1453 + $0x128] sm:$0xff]
                  %1530 = vst [vmem:[%s1454 + $0x128] sm:$0xff] %v1529
                  %v1531 = vld [vmem:[%s1453 + $0x130] sm:$0xff]
                  %1532 = vst [vmem:[%s1454 + $0x130] sm:$0xff] %v1531
                  %v1533 = vld [vmem:[%s1453 + $0x138] sm:$0xff]
                  %1534 = vst [vmem:[%s1454 + $0x138] sm:$0xff] %v1533
                  %v1535 = vld [vmem:[%s1453 + $0x140] sm:$0xff]
                  %1536 = vst [vmem:[%s1454 + $0x140] sm:$0xff] %v1535
                  %v1537 = vld [vmem:[%s1453 + $0x148] sm:$0xff]
                  %1538 = vst [vmem:[%s1454 + $0x148] sm:$0xff] %v1537
                  %v1539 = vld [vmem:[%s1453 + $0x150] sm:$0xff]
                  %1540 = vst [vmem:[%s1454 + $0x150] sm:$0xff] %v1539
                  %v1541 = vld [vmem:[%s1453 + $0x158] sm:$0xff]
                  %1542 = vst [vmem:[%s1454 + $0x158] sm:$0xff] %v1541
                  %v1543 = vld [vmem:[%s1453 + $0x160] sm:$0xff]
                  %1544 = vst [vmem:[%s1454 + $0x160] sm:$0xff] %v1543
                  %v1545 = vld [vmem:[%s1453 + $0x168] sm:$0xff]
                  %1546 = vst [vmem:[%s1454 + $0x168] sm:$0xff] %v1545
                  %v1547 = vld [vmem:[%s1453 + $0x170] sm:$0xff]
                  %1548 = vst [vmem:[%s1454 + $0x170] sm:$0xff] %v1547
                  %v1549 = vld [vmem:[%s1453 + $0x178] sm:$0xff]
                  %1550 = vst [vmem:[%s1454 + $0x178] sm:$0xff] %v1549
                  %v1551 = vld [vmem:[%s1453 + $0x180] sm:$0xff]
                  %1552 = vst [vmem:[%s1454 + $0x180] sm:$0xff] %v1551
                  %v1553 = vld [vmem:[%s1453 + $0x188] sm:$0xff]
                  %1554 = vst [vmem:[%s1454 + $0x188] sm:$0xff] %v1553
                  %v1555 = vld [vmem:[%s1453 + $0x190] sm:$0xff]
                  %1556 = vst [vmem:[%s1454 + $0x190] sm:$0xff] %v1555
                  %v1557 = vld [vmem:[%s1453 + $0x198] sm:$0xff]
                  %1558 = vst [vmem:[%s1454 + $0x198] sm:$0xff] %v1557
                  %v1559 = vld [vmem:[%s1453 + $0x1a0] sm:$0xff]
                  %1560 = vst [vmem:[%s1454 + $0x1a0] sm:$0xff] %v1559
                  %v1561 = vld [vmem:[%s1453 + $0x1a8] sm:$0xff]
                  %1562 = vst [vmem:[%s1454 + $0x1a8] sm:$0xff] %v1561
                  %v1563 = vld [vmem:[%s1453 + $0x1b0] sm:$0xff]
                  %1564 = vst [vmem:[%s1454 + $0x1b0] sm:$0xff] %v1563
                  %v1565 = vld [vmem:[%s1453 + $0x1b8] sm:$0xff]
                  %1566 = vst [vmem:[%s1454 + $0x1b8] sm:$0xff] %v1565
                  %v1567 = vld [vmem:[%s1453 + $0x1c0] sm:$0xff]
                  %1568 = vst [vmem:[%s1454 + $0x1c0] sm:$0xff] %v1567
                  %v1569 = vld [vmem:[%s1453 + $0x1c8] sm:$0xff]
                  %1570 = vst [vmem:[%s1454 + $0x1c8] sm:$0xff] %v1569
                  %v1571 = vld [vmem:[%s1453 + $0x1d0] sm:$0xff]
                  %1572 = vst [vmem:[%s1454 + $0x1d0] sm:$0xff] %v1571
                  %v1573 = vld [vmem:[%s1453 + $0x1d8] sm:$0xff]
                  %1574 = vst [vmem:[%s1454 + $0x1d8] sm:$0xff] %v1573
                  %v1575 = vld [vmem:[%s1453 + $0x1e0] sm:$0xff]
                  %1576 = vst [vmem:[%s1454 + $0x1e0] sm:$0xff] %v1575
                  %v1577 = vld [vmem:[%s1453 + $0x1e8] sm:$0xff]
                  %1578 = vst [vmem:[%s1454 + $0x1e8] sm:$0xff] %v1577
                  %v1579 = vld [vmem:[%s1453 + $0x1f0] sm:$0xff]
                  %1580 = vst [vmem:[%s1454 + $0x1f0] sm:$0xff] %v1579
                  %v1581 = vld [vmem:[%s1453 + $0x1f8] sm:$0xff]
                  %1582 = vst [vmem:[%s1454 + $0x1f8] sm:$0xff] %v1581
                  %s1583 = sadd.s32 1, %s1452
                  %p1584 = scmp.ge.s32.totalorder %s1583, %s1443
                  %s1585 = scalar_select %p1584, 0, %s1583
                  %s1586 = smul.u32 %s1585, 512
                  %s1587 = smul.u32 %s1585, 512
                  %s1588 = scalar_lea.vmem %s1217, %s1586 [#allocation3]
                  %s1589 = scalar_lea.vmem %s1228, %s1587
                $region148: #{critic_forward.4} parent=142 // loop_footer
                  %s1449 = sadd.s32 %s1447, 1
                $region149: #{critic_forward.4} parent=142 // loop_footer_branch
                  %1446 = sbr.rel target = $region145
                $region150: #{critic_forward.4} parent=142 // loop_exit
                  _
                %s1590 = sshrl.u32 %s1442, 6
                %s1591 = sand.u32 %s1442, 63
                %s1592 = smul.u32 %s1590, 64
                %s1593 = smul.u32 128, %s1592
                %s1594 = sshra.s32 %s1593, 4
                %s1595 = scalar_lea.vmem %s1217, %s1594 [#allocation3]
                %s1596 = smul.u32 128, %s1592
                %s1597 = sshra.s32 %s1596, 4
                %s1598 = scalar_lea.vmem %s1228, %s1597
                // While loop
                $region151: #{critic_forward.4} parent=142 // loop_pre_header
                  _
                $region152: #{critic_forward.4} parent=142 // loop_header
                  %s1602 = sphi 0, %s1604
                  %p1603 = scmp.ge.s32.totalorder %s1602, %s1591
                  %s1607 = sphi 0, %s1614
                  %s1608 = sphi %s1595, %s1617
                  %s1609 = sphi %s1598, %s1618
                $region153: #{critic_forward.4} parent=142 // loop_header_branch
                  %1606 = sbr.rel (%p1603) target = $region157
                $region154: #{critic_forward.4} parent=142 // loop_body
                  %v1610 = vld [vmem:[%s1608] sm:$0xff]
                  %1611 = vst [vmem:[%s1609] sm:$0xff] %v1610
                  %s1612 = sadd.s32 1, %s1607
                  %p1613 = scmp.ge.s32.totalorder %s1612, %s1591
                  %s1614 = scalar_select %p1613, 0, %s1612
                  %s1615 = smul.u32 %s1614, 8
                  %s1616 = smul.u32 %s1614, 8
                  %s1617 = scalar_lea.vmem %s1595, %s1615 [#allocation3]
                  %s1618 = scalar_lea.vmem %s1598, %s1616
                $region155: #{critic_forward.4} parent=142 // loop_footer
                  %s1604 = sadd.s32 %s1602, 1
                $region156: #{critic_forward.4} parent=142 // loop_footer_branch
                  %1601 = sbr.rel target = $region152
                $region157: #{critic_forward.4} parent=142 // loop_exit
                  _
                %s1619 = sshll.u32 1, %s1437
                %s1620 = ssub.s32 %s1619, 1
                loop: start=0, step=1, limit=1
                $region158: #{critic_forward.4} parent=142 // loop_pre_header
                  _
                $region159: #{critic_forward.4} parent=142 // loop_header
                  %s1622 = sphi 0, %s1626
                  %p1623 = scmp.ge.s32.totalorder %s1622, 1
                  %s1627 = sphi %s1439, %s1439
                  %s1628 = sphi %s1441, %s1441
                $region160: #{critic_forward.4} parent=142 // loop_header_branch
                  %1625 = sbr.rel (%p1623) target = $region164
                $region161: #{critic_forward.4} parent=142 // loop_body
                  %v1629 = vld [vmem:[%s1627] sm:%s1620]
                  %1630 = vst [vmem:[%s1628] sm:%s1620] %v1629
                $region162: #{critic_forward.4} parent=142 // loop_footer
                  %s1626 = sadd.s32 1, %s1622
                $region163: #{critic_forward.4} parent=142 // loop_footer_branch
                  %1621 = sbr.rel target = $region159
                $region164: #{critic_forward.4} parent=142 // loop_exit
                  _
              $region143: #{critic_forward.4} parent=109 // pred_fallthru
                _
            $region110: #{critic_forward.4} parent=105 // pred_fallthru
              _
            // Predicated region
            $region111: #{critic_forward.4} parent=105 // pred_check
              %p1237 = pneg %p1233
            $region112: #{critic_forward.4} parent=105 // pred_check_branch
              %1239 = sbr.rel (%p1237) target = $region114
            $region113: #{critic_forward.4} parent=105 // pred_region
              %s1240 = sshll.u32 1, %s1229
              %s1241 = ssub.s32 %s1240, 1
              loop: start=0, step=1, limit=1
              $region115: #{critic_forward.4} parent=113 // loop_pre_header
                _
              $region116: #{critic_forward.4} parent=113 // loop_header
                %s1243 = sphi 0, %s1247
                %p1244 = scmp.ge.s32.totalorder %s1243, 1
                %s1248 = sphi %s1217, %s1217
                %s1249 = sphi %s1228, %s1228
              $region117: #{critic_forward.4} parent=113 // loop_header_branch
                %1246 = sbr.rel (%p1244) target = $region121
              $region118: #{critic_forward.4} parent=113 // loop_body
                %v1250 = vld [vmem:[%s1248] sm:%s1241]
                %1251 = vst [vmem:[%s1249] sm:%s1241] %v1250
              $region119: #{critic_forward.4} parent=113 // loop_footer
                %s1247 = sadd.s32 1, %s1243
              $region120: #{critic_forward.4} parent=113 // loop_footer_branch
                %1242 = sbr.rel target = $region116
              $region121: #{critic_forward.4} parent=113 // loop_exit
                _
            $region114: #{critic_forward.4} parent=105 // pred_fallthru
              _
          $region106: #{critic_forward.4} parent=101 // pred_fallthru
            _
          %1631 = vnop
        $region102: #{critic_forward.4} parent=93 // pred_fallthru
          _
      $region94: #{critic_forward.4} parent=5 // pred_fallthru
        _
      %p1632 = scmp.le.s32.totalorder 2, %s9
      // Predicated region
      $region165: #{critic_forward.4} parent=5 // pred_check
        %p1633 = pneg %p1632
      $region166: #{critic_forward.4} parent=5 // pred_check_branch
        %1635 = sbr.rel (%p1633) target = $region168
      $region167: #{critic_forward.4} parent=5 // pred_region
        %s1636 = ssub.s32 %s9, 2
        // Predicated region
        $region169: #{critic_forward.4} parent=167 // pred_check
          %p1637 = pneg %p106
        $region170: #{critic_forward.4} parent=167 // pred_check_branch
          %1639 = sbr.rel (%p1637) target = $region172
        $region171: #{critic_forward.4} parent=167 // pred_region
          %s1640 = sand.u32 %s91, 1
          %s1641 = sand.u32 %s91, 1
          %s1642 = smul.addr %s1641, 16
          %s1643 = scalar_lea.vmem [#allocation3], %s1642
        $region172: #{critic_forward.4} parent=167 // pred_fallthru
          _
      $region168: #{critic_forward.4} parent=5 // pred_fallthru
        _
    $region6: #{critic_forward.4} parent=1 // loop_footer
      %s13 = sadd.s32 1, %s9
    $region7: #{critic_forward.4} parent=1 // loop_footer_branch
      %8 = sbr.rel target = $region3
    $region8: #{critic_forward.4} parent=1 // loop_exit
      _

// kernel: critic_forward.5
$region0: #{critic_forward.5}
  #allocation0 [shape = 'u32[]', space=smem, size = 0x4, offset = 0x4, fixed_abs, tag = 'smem constant byte address 0x4 - core index']
  #allocation1 [shape = 'u32[144,128]{1,0:T(1,128)}', space=vmem, size = 0x12000, scoped, tag = 'internal scratch']
  %s0 = inlined_call_operand.vmem [shape: bf16[12,150], index: 0, kind: input, shape index: {}]
  %s1 = inlined_call_operand.vmem [shape: f32[12,1], index: 1, kind: input, shape index: {}]
  %s2 = inlined_call_operand.vmem [shape: bf16[150,578], index: 2, kind: input, shape index: {}]
  %s3 = inlined_call_operand.vmem [shape: bf16[12,578], index: 3, kind: output, shape index: {}]
  %s4 = sld [smem:[#allocation0]]
  $region173: #{critic_forward.5} parent=0
    _
  %s6 = ssub.s32 1, %s4
  %s7 = scalar_select 0, %s6, %s4
  $region1: #{critic_forward.5} parent=0
    #allocation2 [shape = 'u8[311296]{0}', space=vmem, size = 0x4c000, scoped, tag = 'input window, operand 2']
    #allocation3 [shape = 'u8[32768]{0}', space=vmem, size = 0x8000, scoped, tag = 'output window, operand 0']
    loop: start=0, step=1, limit=4
    $region2: #{critic_forward.5} parent=1 // loop_pre_header
      _
    $region3: #{critic_forward.5} parent=1 // loop_header
      %s9 = sphi 0, %s13
      %p10 = scmp.ge.s32.totalorder %s9, 4
      %s17 = sphi 0, %s17
      %s19 = sphi 0, %s17
      %s20 = sphi 0, %s19
      %s34 = sphi 0, %s20
      %s38 = sphi 0, %s38
      %s40 = sphi 0, %s38
      %s41 = sphi 0, %s40
      %s55 = sphi 0, %s41
      %s61 = sphi 0, %s63
      %s64 = sphi 0, %s61
      %s65 = sphi 0, %s64
      %s81 = sphi 0, %s65
      %s87 = sphi 0, %s89
      %s90 = sphi 0, %s87
      %s91 = sphi 0, %s90
      %s107 = sphi 0, %s91
    $region4: #{critic_forward.5} parent=1 // loop_header_branch
      %12 = sbr.rel (%p10) target = $region8
    $region5: #{critic_forward.5} parent=1 // loop_body
      %s14 = ssub.s32 %s9, 1
      %s15 = ssub.s32 %s9, 2
      %s16 = sadd.s32 %s9, 1
      %s18 = sadd.s32 %s17, 1
      %p21 = scmp.eq.s32.totalorder %s9, 1
      %p22 = scmp.ne.s32.totalorder %s17, %s19
      %p23 = scmp.eq.s32.totalorder %s9, 0
      %p24 = por %p22, %p23
      %p25 = scmp.ne.s32.totalorder %s17, %s19
      %p26 = scmp.eq.s32.totalorder %s14, 1
      %p27 = por %p25, %p26
      %p28 = scmp.ne.s32.totalorder %s19, %s20
      %p29 = scmp.eq.s32.totalorder %s14, 0
      %p30 = por %p28, %p29
      %p31 = scmp.ne.s32.totalorder %s19, %s20
      %p32 = scmp.eq.s32.totalorder %s15, 1
      %p33 = por %p31, %p32
      %p35 = scmp.ne.s32.totalorder %s20, %s34
      %p36 = scmp.eq.s32.totalorder %s15, 0
      %p37 = por %p35, %p36
      %s39 = sadd.s32 %s38, 1
      %p42 = scmp.eq.s32.totalorder %s9, 1
      %p43 = scmp.ne.s32.totalorder %s38, %s40
      %p44 = scmp.eq.s32.totalorder %s9, 0
      %p45 = por %p43, %p44
      %p46 = scmp.ne.s32.totalorder %s38, %s40
      %p47 = scmp.eq.s32.totalorder %s14, 1
      %p48 = por %p46, %p47
      %p49 = scmp.ne.s32.totalorder %s40, %s41
      %p50 = scmp.eq.s32.totalorder %s14, 0
      %p51 = por %p49, %p50
      %p52 = scmp.ne.s32.totalorder %s40, %s41
      %p53 = scmp.eq.s32.totalorder %s15, 1
      %p54 = por %p52, %p53
      %p56 = scmp.ne.s32.totalorder %s41, %s55
      %p57 = scmp.eq.s32.totalorder %s15, 0
      %p58 = por %p56, %p57
      %s59 = ssub.s32 %s9, %s16
      %p60 = scmp.eq.s32.totalorder %s59, 0
      %s62 = sadd.s32 %s61, 1
      %s63 = scalar_select %p60, %s61, %s62
      %p66 = pneg %p60
      %p67 = scmp.eq.s32.totalorder %s9, 1
      %p68 = por %p66, %p67
      %p69 = scmp.ne.s32.totalorder %s61, %s64
      %p70 = scmp.eq.s32.totalorder %s9, 0
      %p71 = por %p69, %p70
      %p72 = scmp.ne.s32.totalorder %s61, %s64
      %p73 = scmp.eq.s32.totalorder %s14, 1
      %p74 = por %p72, %p73
      %p75 = scmp.ne.s32.totalorder %s64, %s65
      %p76 = scmp.eq.s32.totalorder %s14, 0
      %p77 = por %p75, %p76
      %p78 = scmp.ne.s32.totalorder %s64, %s65
      %p79 = scmp.eq.s32.totalorder %s15, 1
      %p80 = por %p78, %p79
      %p82 = scmp.ne.s32.totalorder %s65, %s81
      %p83 = scmp.eq.s32.totalorder %s15, 0
      %p84 = por %p82, %p83
      %s85 = ssub.s32 %s9, %s16
      %p86 = scmp.eq.s32.totalorder %s85, 0
      %s88 = sadd.s32 %s87, 1
      %s89 = scalar_select %p86, %s87, %s88
      %p92 = pneg %p86
      %p93 = scmp.eq.s32.totalorder %s9, 1
      %p94 = por %p92, %p93
      %p95 = scmp.ne.s32.totalorder %s87, %s90
      %p96 = scmp.eq.s32.totalorder %s9, 0
      %p97 = por %p95, %p96
      %p98 = scmp.ne.s32.totalorder %s87, %s90
      %p99 = scmp.eq.s32.totalorder %s14, 1
      %p100 = por %p98, %p99
      %p101 = scmp.ne.s32.totalorder %s90, %s91
      %p102 = scmp.eq.s32.totalorder %s14, 0
      %p103 = por %p101, %p102
      %p104 = scmp.ne.s32.totalorder %s90, %s91
      %p105 = scmp.eq.s32.totalorder %s15, 1
      %p106 = por %p104, %p105
      %p108 = scmp.ne.s32.totalorder %s91, %s107
      %p109 = scmp.eq.s32.totalorder %s15, 0
      %p110 = por %p108, %p109
      %p111 = scmp.le.s32.totalorder 1, %s9
      %p112 = scmp.lt.s32.totalorder %s9, 3
      %p113 = pnand %p111, %p112
      %p114 = pneg %p113
      // Predicated region
      $region9: #{critic_forward.5} parent=5 // pred_check
        _
      $region10: #{critic_forward.5} parent=5 // pred_check_branch
        %116 = sbr.rel (%p113) target = $region12
      $region11: #{critic_forward.5} parent=5 // pred_region
        %s117 = ssub.s32 %s9, 1
        // Predicated region
        $region13: #{critic_forward.5} parent=11 // pred_check
          %p118 = pneg %p30
        $region14: #{critic_forward.5} parent=11 // pred_check_branch
          %120 = sbr.rel (%p118) target = $region16
        $region15: #{critic_forward.5} parent=11 // pred_region
          _
        $region16: #{critic_forward.5} parent=11 // pred_fallthru
          _
        // Predicated region
        $region17: #{critic_forward.5} parent=11 // pred_check
          %p121 = pneg %p51
        $region18: #{critic_forward.5} parent=11 // pred_check_branch
          %123 = sbr.rel (%p121) target = $region20
        $region19: #{critic_forward.5} parent=11 // pred_region
          _
        $region20: #{critic_forward.5} parent=11 // pred_fallthru
          _
      $region12: #{critic_forward.5} parent=5 // pred_fallthru
        _
      %p124 = scmp.lt.s32.totalorder %s9, 2
      // Predicated region
      $region21: #{critic_forward.5} parent=5 // pred_check
        %p125 = pneg %p124
      $region22: #{critic_forward.5} parent=5 // pred_check_branch
        %127 = sbr.rel (%p125) target = $region24
      $region23: #{critic_forward.5} parent=5 // pred_region
        // Predicated region
        $region25: #{critic_forward.5} parent=23 // pred_check
          %p128 = pneg %p71
        $region26: #{critic_forward.5} parent=23 // pred_check_branch
          %130 = sbr.rel (%p128) target = $region28
        $region27: #{critic_forward.5} parent=23 // pred_region
          %s131 = sand.u32 %s61, 1
          %s132 = sand.u32 %s61, 1
          %s133 = smul.addr %s132, 304
          %s134 = scalar_lea.vmem [#allocation2], %s133
          %s135 = smul.u32 4, %s9
          %s136 = ssub.s32 5, %s135
          %p137 = scmp.lt.s32.totalorder %s136, 4
          %s138 = scalar_select %p137, %s136, 4
          %s139 = smul.u32 1216, %s138
          %p140 = scmp.ne.s32.totalorder 0, %s139
          %s141 = smul.addr %s135, 4
          %s142 = scalar_lea.vmem %s2, %s141
          %s143 = smul.u32 %s138, 4
          // Predicated region
          $region29: #{critic_forward.5} parent=27 // pred_check
            %p144 = pneg %p140
          $region30: #{critic_forward.5} parent=27 // pred_check_branch
            %146 = sbr.rel (%p144) target = $region32
          $region31: #{critic_forward.5} parent=27 // pred_region
            %p147 = scmp.lt.u32.totalorder %s143, 8
            %p148 = pneg %p147
            // Predicated region
            $region33: #{critic_forward.5} parent=31 // pred_check
              _
            $region34: #{critic_forward.5} parent=31 // pred_check_branch
              %150 = sbr.rel (%p147) target = $region36
            $region35: #{critic_forward.5} parent=31 // pred_region
              %s202 = sand.u32 %s143, 7
              %p203 = scmp.eq.s32.totalorder %s202, 0
              // Predicated region
              $region48: #{critic_forward.5} parent=35 // pred_check
                %p204 = pneg %p203
              $region49: #{critic_forward.5} parent=35 // pred_check_branch
                %206 = sbr.rel (%p204) target = $region51
              $region50: #{critic_forward.5} parent=35 // pred_region
                %s207 = sshrl.u32 %s143, 3
                %s208 = sshrl.u32 %s207, 2
                // While loop
                $region52: #{critic_forward.5} parent=50 // loop_pre_header
                  _
                $region53: #{critic_forward.5} parent=50 // loop_header
                  %s212 = sphi 0, %s214
                  %p213 = scmp.ge.s32.totalorder %s212, %s208
                  %s217 = sphi 0, %s374
                  %s218 = sphi %s142, %s377
                  %s219 = sphi %s134, %s378
                $region54: #{critic_forward.5} parent=50 // loop_header_branch
                  %216 = sbr.rel (%p213) target = $region58
                $region55: #{critic_forward.5} parent=50 // loop_body
                  %v220 = vld [vmem:[%s218] sm:$0xff]
                  %221 = vst [vmem:[%s219] sm:$0xff] %v220
                  %v222 = vld [vmem:[%s218 + $0x8] sm:$0xff]
                  %223 = vst [vmem:[%s219 + $0x8] sm:$0xff] %v222
                  %v224 = vld [vmem:[%s218 + $0x10] sm:$0xff]
                  %225 = vst [vmem:[%s219 + $0x10] sm:$0xff] %v224
                  %v226 = vld [vmem:[%s218 + $0x18] sm:$0xff]
                  %227 = vst [vmem:[%s219 + $0x18] sm:$0xff] %v226
                  %v228 = vld [vmem:[%s218 + $0x14] sm:$0xff]
                  %229 = vst [vmem:[%s219 + $0x10] sm:$0xff] %v228
                  %v230 = vld [vmem:[%s218 + $0x1c] sm:$0xff]
                  %231 = vst [vmem:[%s219 + $0x18] sm:$0xff] %v230
                  %v232 = vld [vmem:[%s218 + $0x24] sm:$0xff]
                  %233 = vst [vmem:[%s219 + $0x20] sm:$0xff] %v232
                  %v234 = vld [vmem:[%s218 + $0x2c] sm:$0xff]
                  %235 = vst [vmem:[%s219 + $0x28] sm:$0xff] %v234
                  %v236 = vld [vmem:[%s218 + $0x28] sm:$0xff]
                  %237 = vst [vmem:[%s219 + $0x20] sm:$0xff] %v236
                  %v238 = vld [vmem:[%s218 + $0x30] sm:$0xff]
                  %239 = vst [vmem:[%s219 + $0x28] sm:$0xff] %v238
                  %v240 = vld [vmem:[%s218 + $0x38] sm:$0xff]
                  %241 = vst [vmem:[%s219 + $0x30] sm:$0xff] %v240
                  %v242 = vld [vmem:[%s218 + $0x40] sm:$0xff]
                  %243 = vst [vmem:[%s219 + $0x38] sm:$0xff] %v242
                  %v244 = vld [vmem:[%s218 + $0x3c] sm:$0xff]
                  %245 = vst [vmem:[%s219 + $0x30] sm:$0xff] %v244
                  %v246 = vld [vmem:[%s218 + $0x44] sm:$0xff]
                  %247 = vst [vmem:[%s219 + $0x38] sm:$0xff] %v246
                  %v248 = vld [vmem:[%s218 + $0x4c] sm:$0xff]
                  %249 = vst [vmem:[%s219 + $0x40] sm:$0xff] %v248
                  %v250 = vld [vmem:[%s218 + $0x54] sm:$0xff]
                  %251 = vst [vmem:[%s219 + $0x48] sm:$0xff] %v250
                  %v252 = vld [vmem:[%s218 + $0x50] sm:$0xff]
                  %253 = vst [vmem:[%s219 + $0x40] sm:$0xff] %v252
                  %v254 = vld [vmem:[%s218 + $0x58] sm:$0xff]
                  %255 = vst [vmem:[%s219 + $0x48] sm:$0xff] %v254
                  %v256 = vld [vmem:[%s218 + $0x60] sm:$0xff]
                  %257 = vst [vmem:[%s219 + $0x50] sm:$0xff] %v256
                  %v258 = vld [vmem:[%s218 + $0x68] sm:$0xff]
                  %259 = vst [vmem:[%s219 + $0x58] sm:$0xff] %v258
                  %v260 = vld [vmem:[%s218 + $0x64] sm:$0xff]
                  %261 = vst [vmem:[%s219 + $0x50] sm:$0xff] %v260
                  %v262 = vld [vmem:[%s218 + $0x6c] sm:$0xff]
                  %263 = vst [vmem:[%s219 + $0x58] sm:$0xff] %v262
                  %v264 = vld [vmem:[%s218 + $0x74] sm:$0xff]
                  %265 = vst [vmem:[%s219 + $0x60] sm:$0xff] %v264
                  %v266 = vld [vmem:[%s218 + $0x7c] sm:$0xff]
                  %267 = vst [vmem:[%s219 + $0x68] sm:$0xff] %v266
                  %v268 = vld [vmem:[%s218 + $0x78] sm:$0xff]
                  %269 = vst [vmem:[%s219 + $0x60] sm:$0xff] %v268
                  %v270 = vld [vmem:[%s218 + $0x80] sm:$0xff]
                  %271 = vst [vmem:[%s219 + $0x68] sm:$0xff] %v270
                  %v272 = vld [vmem:[%s218 + $0x88] sm:$0xff]
                  %273 = vst [vmem:[%s219 + $0x70] sm:$0xff] %v272
                  %v274 = vld [vmem:[%s218 + $0x90] sm:$0xff]
                  %275 = vst [vmem:[%s219 + $0x78] sm:$0xff] %v274
                  %v276 = vld [vmem:[%s218 + $0x8c] sm:$0xff]
                  %277 = vst [vmem:[%s219 + $0x70] sm:$0xff] %v276
                  %v278 = vld [vmem:[%s218 + $0x94] sm:$0xff]
                  %279 = vst [vmem:[%s219 + $0x78] sm:$0xff] %v278
                  %v280 = vld [vmem:[%s218 + $0x9c] sm:$0xff]
                  %281 = vst [vmem:[%s219 + $0x80] sm:$0xff] %v280
                  %v282 = vld [vmem:[%s218 + $0xa4] sm:$0xff]
                  %283 = vst [vmem:[%s219 + $0x88] sm:$0xff] %v282
                  %v284 = vld [vmem:[%s218 + $0xa0] sm:$0xff]
                  %285 = vst [vmem:[%s219 + $0x80] sm:$0xff] %v284
                  %v286 = vld [vmem:[%s218 + $0xa8] sm:$0xff]
                  %287 = vst [vmem:[%s219 + $0x88] sm:$0xff] %v286
                  %v288 = vld [vmem:[%s218 + $0xb0] sm:$0xff]
                  %289 = vst [vmem:[%s219 + $0x90] sm:$0xff] %v288
                  %v290 = vld [vmem:[%s218 + $0xb8] sm:$0xff]
                  %291 = vst [vmem:[%s219 + $0x98] sm:$0xff] %v290
                  %v292 = vld [vmem:[%s218 + $0xb4] sm:$0xff]
                  %293 = vst [vmem:[%s219 + $0x90] sm:$0xff] %v292
                  %v294 = vld [vmem:[%s218 + $0xbc] sm:$0xff]
                  %295 = vst [vmem:[%s219 + $0x98] sm:$0xff] %v294
                  %v296 = vld [vmem:[%s218 + $0xc4] sm:$0xff]
                  %297 = vst [vmem:[%s219 + $0xa0] sm:$0xff] %v296
                  %v298 = vld [vmem:[%s218 + $0xcc] sm:$0xff]
                  %299 = vst [vmem:[%s219 + $0xa8] sm:$0xff] %v298
                  %v300 = vld [vmem:[%s218 + $0xc8] sm:$0xff]
                  %301 = vst [vmem:[%s219 + $0xa0] sm:$0xff] %v300
                  %v302 = vld [vmem:[%s218 + $0xd0] sm:$0xff]
                  %303 = vst [vmem:[%s219 + $0xa8] sm:$0xff] %v302
                  %v304 = vld [vmem:[%s218 + $0xd8] sm:$0xff]
                  %305 = vst [vmem:[%s219 + $0xb0] sm:$0xff] %v304
                  %v306 = vld [vmem:[%s218 + $0xe0] sm:$0xff]
                  %307 = vst [vmem:[%s219 + $0xb8] sm:$0xff] %v306
                  %v308 = vld [vmem:[%s218 + $0xdc] sm:$0xff]
                  %309 = vst [vmem:[%s219 + $0xb0] sm:$0xff] %v308
                  %v310 = vld [vmem:[%s218 + $0xe4] sm:$0xff]
                  %311 = vst [vmem:[%s219 + $0xb8] sm:$0xff] %v310
                  %v312 = vld [vmem:[%s218 + $0xec] sm:$0xff]
                  %313 = vst [vmem:[%s219 + $0xc0] sm:$0xff] %v312
                  %v314 = vld [vmem:[%s218 + $0xf4] sm:$0xff]
                  %315 = vst [vmem:[%s219 + $0xc8] sm:$0xff] %v314
                  %v316 = vld [vmem:[%s218 + $0xf0] sm:$0xff]
                  %317 = vst [vmem:[%s219 + $0xc0] sm:$0xff] %v316
                  %v318 = vld [vmem:[%s218 + $0xf8] sm:$0xff]
                  %319 = vst [vmem:[%s219 + $0xc8] sm:$0xff] %v318
                  %v320 = vld [vmem:[%s218 + $0x100] sm:$0xff]
                  %321 = vst [vmem:[%s219 + $0xd0] sm:$0xff] %v320
                  %v322 = vld [vmem:[%s218 + $0x108] sm:$0xff]
                  %323 = vst [vmem:[%s219 + $0xd8] sm:$0xff] %v322
                  %v324 = vld [vmem:[%s218 + $0x104] sm:$0xff]
                  %325 = vst [vmem:[%s219 + $0xd0] sm:$0xff] %v324
                  %v326 = vld [vmem:[%s218 + $0x10c] sm:$0xff]
                  %327 = vst [vmem:[%s219 + $0xd8] sm:$0xff] %v326
                  %v328 = vld [vmem:[%s218 + $0x114] sm:$0xff]
                  %329 = vst [vmem:[%s219 + $0xe0] sm:$0xff] %v328
                  %v330 = vld [vmem:[%s218 + $0x11c] sm:$0xff]
                  %331 = vst [vmem:[%s219 + $0xe8] sm:$0xff] %v330
                  %v332 = vld [vmem:[%s218 + $0x118] sm:$0xff]
                  %333 = vst [vmem:[%s219 + $0xe0] sm:$0xff] %v332
                  %v334 = vld [vmem:[%s218 + $0x120] sm:$0xff]
                  %335 = vst [vmem:[%s219 + $0xe8] sm:$0xff] %v334
                  %v336 = vld [vmem:[%s218 + $0x128] sm:$0xff]
                  %337 = vst [vmem:[%s219 + $0xf0] sm:$0xff] %v336
                  %v338 = vld [vmem:[%s218 + $0x130] sm:$0xff]
                  %339 = vst [vmem:[%s219 + $0xf8] sm:$0xff] %v338
                  %v340 = vld [vmem:[%s218 + $0x12c] sm:$0xff]
                  %341 = vst [vmem:[%s219 + $0xf0] sm:$0xff] %v340
                  %v342 = vld [vmem:[%s218 + $0x134] sm:$0xff]
                  %343 = vst [vmem:[%s219 + $0xf8] sm:$0xff] %v342
                  %v344 = vld [vmem:[%s218 + $0x13c] sm:$0xff]
                  %345 = vst [vmem:[%s219 + $0x100] sm:$0xff] %v344
                  %v346 = vld [vmem:[%s218 + $0x144] sm:$0xff]
                  %347 = vst [vmem:[%s219 + $0x108] sm:$0xff] %v346
                  %v348 = vld [vmem:[%s218 + $0x140] sm:$0xff]
                  %349 = vst [vmem:[%s219 + $0x100] sm:$0xff] %v348
                  %v350 = vld [vmem:[%s218 + $0x148] sm:$0xff]
                  %351 = vst [vmem:[%s219 + $0x108] sm:$0xff] %v350
                  %v352 = vld [vmem:[%s218 + $0x150] sm:$0xff]
                  %353 = vst [vmem:[%s219 + $0x110] sm:$0xff] %v352
                  %v354 = vld [vmem:[%s218 + $0x158] sm:$0xff]
                  %355 = vst [vmem:[%s219 + $0x118] sm:$0xff] %v354
                  %v356 = vld [vmem:[%s218 + $0x154] sm:$0xff]
                  %357 = vst [vmem:[%s219 + $0x110] sm:$0xff] %v356
                  %v358 = vld [vmem:[%s218 + $0x15c] sm:$0xff]
                  %359 = vst [vmem:[%s219 + $0x118] sm:$0xff] %v358
                  %v360 = vld [vmem:[%s218 + $0x164] sm:$0xff]
                  %361 = vst [vmem:[%s219 + $0x120] sm:$0xff] %v360
                  %v362 = vld [vmem:[%s218 + $0x16c] sm:$0xff]
                  %363 = vst [vmem:[%s219 + $0x128] sm:$0xff] %v362
                  %v364 = vld [vmem:[%s218 + $0x168] sm:$0xff]
                  %365 = vst [vmem:[%s219 + $0x120] sm:$0xff] %v364
                  %v366 = vld [vmem:[%s218 + $0x170] sm:$0xff]
                  %367 = vst [vmem:[%s219 + $0x128] sm:$0xff] %v366
                  %v368 = vld [vmem:[%s218 + $0x178] sm:$0xff]
                  %369 = vst [vmem:[%s219 + $0x130] sm:$0xff] %v368
                  %v370 = vld [vmem:[%s218 + $0x180] sm:$0xff]
                  %371 = vst [vmem:[%s219 + $0x138] sm:$0xff] %v370
                  %s372 = sadd.s32 1, %s217
                  %p373 = scmp.ge.s32.totalorder %s372, %s208
                  %s374 = scalar_select %p373, 0, %s372
                  %s375 = smul.u32 %s374, 32
                  %s376 = smul.u32 %s374, 32
                  %s377 = scalar_lea.vmem %s142, %s375
                  %s378 = scalar_lea.vmem %s134, %s376 [#allocation2]
                $region56: #{critic_forward.5} parent=50 // loop_footer
                  %s214 = sadd.s32 %s212, 1
                $region57: #{critic_forward.5} parent=50 // loop_footer_branch
                  %211 = sbr.rel target = $region53
                $region58: #{critic_forward.5} parent=50 // loop_exit
                  _
                %s379 = sshrl.u32 %s207, 2
                %s380 = sand.u32 %s207, 3
                %s381 = smul.u32 %s379, 4
                %s382 = smul.u32 128, %s381
                %s383 = sshra.s32 %s382, 4
                %s384 = scalar_lea.vmem %s142, %s383
                %s385 = smul.u32 128, %s381
                %s386 = sshra.s32 %s385, 4
                %s387 = scalar_lea.vmem %s134, %s386 [#allocation2]
                // While loop
                $region59: #{critic_forward.5} parent=50 // loop_pre_header
                  _
                $region60: #{critic_forward.5} parent=50 // loop_header
                  %s391 = sphi 0, %s393
                  %p392 = scmp.ge.s32.totalorder %s391, %s380
                  %s396 = sphi 0, %s439
                  %s397 = sphi %s384, %s442
                  %s398 = sphi %s387, %s443
                $region61: #{critic_forward.5} parent=50 // loop_header_branch
                  %395 = sbr.rel (%p392) target = $region65
                $region62: #{critic_forward.5} parent=50 // loop_body
                  %v399 = vld [vmem:[%s397] sm:$0xff]
                  %400 = vst [vmem:[%s398] sm:$0xff] %v399
                  %v401 = vld [vmem:[%s397 + $0x14] sm:$0xff]
                  %402 = vst [vmem:[%s398 + $0x10] sm:$0xff] %v401
                  %v403 = vld [vmem:[%s397 + $0x28] sm:$0xff]
                  %404 = vst [vmem:[%s398 + $0x20] sm:$0xff] %v403
                  %v405 = vld [vmem:[%s397 + $0x3c] sm:$0xff]
                  %406 = vst [vmem:[%s398 + $0x30] sm:$0xff] %v405
                  %v407 = vld [vmem:[%s397 + $0x50] sm:$0xff]
                  %408 = vst [vmem:[%s398 + $0x40] sm:$0xff] %v407
                  %v409 = vld [vmem:[%s397 + $0x64] sm:$0xff]
                  %410 = vst [vmem:[%s398 + $0x50] sm:$0xff] %v409
                  %v411 = vld [vmem:[%s397 + $0x78] sm:$0xff]
                  %412 = vst [vmem:[%s398 + $0x60] sm:$0xff] %v411
                  %v413 = vld [vmem:[%s397 + $0x8c] sm:$0xff]
                  %414 = vst [vmem:[%s398 + $0x70] sm:$0xff] %v413
                  %v415 = vld [vmem:[%s397 + $0xa0] sm:$0xff]
                  %416 = vst [vmem:[%s398 + $0x80] sm:$0xff] %v415
                  %v417 = vld [vmem:[%s397 + $0xb4] sm:$0xff]
                  %418 = vst [vmem:[%s398 + $0x90] sm:$0xff] %v417
                  %v419 = vld [vmem:[%s397 + $0xc8] sm:$0xff]
                  %420 = vst [vmem:[%s398 + $0xa0] sm:$0xff] %v419
                  %v421 = vld [vmem:[%s397 + $0xdc] sm:$0xff]
                  %422 = vst [vmem:[%s398 + $0xb0] sm:$0xff] %v421
                  %v423 = vld [vmem:[%s397 + $0xf0] sm:$0xff]
                  %424 = vst [vmem:[%s398 + $0xc0] sm:$0xff] %v423
                  %v425 = vld [vmem:[%s397 + $0x104] sm:$0xff]
                  %426 = vst [vmem:[%s398 + $0xd0] sm:$0xff] %v425
                  %v427 = vld [vmem:[%s397 + $0x118] sm:$0xff]
                  %428 = vst [vmem:[%s398 + $0xe0] sm:$0xff] %v427
                  %v429 = vld [vmem:[%s397 + $0x12c] sm:$0xff]
                  %430 = vst [vmem:[%s398 + $0xf0] sm:$0xff] %v429
                  %v431 = vld [vmem:[%s397 + $0x140] sm:$0xff]
                  %432 = vst [vmem:[%s398 + $0x100] sm:$0xff] %v431
                  %v433 = vld [vmem:[%s397 + $0x154] sm:$0xff]
                  %434 = vst [vmem:[%s398 + $0x110] sm:$0xff] %v433
                  %v435 = vld [vmem:[%s397 + $0x168] sm:$0xff]
                  %436 = vst [vmem:[%s398 + $0x120] sm:$0xff] %v435
                  %s437 = sadd.s32 1, %s396
                  %p438 = scmp.ge.s32.totalorder %s437, %s380
                  %s439 = scalar_select %p438, 0, %s437
                  %s440 = smul.u32 %s439, 8
                  %s441 = smul.u32 %s439, 8
                  %s442 = scalar_lea.vmem %s384, %s440
                  %s443 = scalar_lea.vmem %s387, %s441 [#allocation2]
                $region63: #{critic_forward.5} parent=50 // loop_footer
                  %s393 = sadd.s32 %s391, 1
                $region64: #{critic_forward.5} parent=50 // loop_footer_branch
                  %390 = sbr.rel target = $region60
                $region65: #{critic_forward.5} parent=50 // loop_exit
                  _
              $region51: #{critic_forward.5} parent=35 // pred_fallthru
                _
              %p444 = pneg %p203
              // Predicated region
              $region66: #{critic_forward.5} parent=35 // pred_check
                _
              $region67: #{critic_forward.5} parent=35 // pred_check_branch
                %446 = sbr.rel (%p203) target = $region69
              $region68: #{critic_forward.5} parent=35 // pred_region
                %s447 = sand.u32 %s143, 7
                %s448 = ssub.s32 %s143, %s447
                %s449 = scalar_lea.vmem %s142, %s448
                %s450 = ssub.s32 %s143, %s447
                %s451 = scalar_lea.vmem %s134, %s450 [#allocation2]
                %s452 = sshrl.u32 %s143, 3
                %s453 = sshrl.u32 %s452, 2
                // While loop
                $region70: #{critic_forward.5} parent=68 // loop_pre_header
                  _
                $region71: #{critic_forward.5} parent=68 // loop_header
                  %s457 = sphi 0, %s459
                  %p458 = scmp.ge.s32.totalorder %s457, %s453
                  %s462 = sphi 0, %s619
                  %s463 = sphi %s142, %s622
                  %s464 = sphi %s134, %s623
                $region72: #{critic_forward.5} parent=68 // loop_header_branch
                  %461 = sbr.rel (%p458) target = $region76
                $region73: #{critic_forward.5} parent=68 // loop_body
                  %v465 = vld [vmem:[%s463] sm:$0xff]
                  %466 = vst [vmem:[%s464] sm:$0xff] %v465
                  %v467 = vld [vmem:[%s463 + $0x8] sm:$0xff]
                  %468 = vst [vmem:[%s464 + $0x8] sm:$0xff] %v467
                  %v469 = vld [vmem:[%s463 + $0x10] sm:$0xff]
                  %470 = vst [vmem:[%s464 + $0x10] sm:$0xff] %v469
                  %v471 = vld [vmem:[%s463 + $0x18] sm:$0xff]
                  %472 = vst [vmem:[%s464 + $0x18] sm:$0xff] %v471
                  %v473 = vld [vmem:[%s463 + $0x14] sm:$0xff]
                  %474 = vst [vmem:[%s464 + $0x10] sm:$0xff] %v473
                  %v475 = vld [vmem:[%s463 + $0x1c] sm:$0xff]
                  %476 = vst [vmem:[%s464 + $0x18] sm:$0xff] %v475
                  %v477 = vld [vmem:[%s463 + $0x24] sm:$0xff]
                  %478 = vst [vmem:[%s464 + $0x20] sm:$0xff] %v477
                  %v479 = vld [vmem:[%s463 + $0x2c] sm:$0xff]
                  %480 = vst [vmem:[%s464 + $0x28] sm:$0xff] %v479
                  %v481 = vld [vmem:[%s463 + $0x28] sm:$0xff]
                  %482 = vst [vmem:[%s464 + $0x20] sm:$0xff] %v481
                  %v483 = vld [vmem:[%s463 + $0x30] sm:$0xff]
                  %484 = vst [vmem:[%s464 + $0x28] sm:$0xff] %v483
                  %v485 = vld [vmem:[%s463 + $0x38] sm:$0xff]
                  %486 = vst [vmem:[%s464 + $0x30] sm:$0xff] %v485
                  %v487 = vld [vmem:[%s463 + $0x40] sm:$0xff]
                  %488 = vst [vmem:[%s464 + $0x38] sm:$0xff] %v487
                  %v489 = vld [vmem:[%s463 + $0x3c] sm:$0xff]
                  %490 = vst [vmem:[%s464 + $0x30] sm:$0xff] %v489
                  %v491 = vld [vmem:[%s463 + $0x44] sm:$0xff]
                  %492 = vst [vmem:[%s464 + $0x38] sm:$0xff] %v491
                  %v493 = vld [vmem:[%s463 + $0x4c] sm:$0xff]
                  %494 = vst [vmem:[%s464 + $0x40] sm:$0xff] %v493
                  %v495 = vld [vmem:[%s463 + $0x54] sm:$0xff]
                  %496 = vst [vmem:[%s464 + $0x48] sm:$0xff] %v495
                  %v497 = vld [vmem:[%s463 + $0x50] sm:$0xff]
                  %498 = vst [vmem:[%s464 + $0x40] sm:$0xff] %v497
                  %v499 = vld [vmem:[%s463 + $0x58] sm:$0xff]
                  %500 = vst [vmem:[%s464 + $0x48] sm:$0xff] %v499
                  %v501 = vld [vmem:[%s463 + $0x60] sm:$0xff]
                  %502 = vst [vmem:[%s464 + $0x50] sm:$0xff] %v501
                  %v503 = vld [vmem:[%s463 + $0x68] sm:$0xff]
                  %504 = vst [vmem:[%s464 + $0x58] sm:$0xff] %v503
                  %v505 = vld [vmem:[%s463 + $0x64] sm:$0xff]
                  %506 = vst [vmem:[%s464 + $0x50] sm:$0xff] %v505
                  %v507 = vld [vmem:[%s463 + $0x6c] sm:$0xff]
                  %508 = vst [vmem:[%s464 + $0x58] sm:$0xff] %v507
                  %v509 = vld [vmem:[%s463 + $0x74] sm:$0xff]
                  %510 = vst [vmem:[%s464 + $0x60] sm:$0xff] %v509
                  %v511 = vld [vmem:[%s463 + $0x7c] sm:$0xff]
                  %512 = vst [vmem:[%s464 + $0x68] sm:$0xff] %v511
                  %v513 = vld [vmem:[%s463 + $0x78] sm:$0xff]
                  %514 = vst [vmem:[%s464 + $0x60] sm:$0xff] %v513
                  %v515 = vld [vmem:[%s463 + $0x80] sm:$0xff]
                  %516 = vst [vmem:[%s464 + $0x68] sm:$0xff] %v515
                  %v517 = vld [vmem:[%s463 + $0x88] sm:$0xff]
                  %518 = vst [vmem:[%s464 + $0x70] sm:$0xff] %v517
                  %v519 = vld [vmem:[%s463 + $0x90] sm:$0xff]
                  %520 = vst [vmem:[%s464 + $0x78] sm:$0xff] %v519
                  %v521 = vld [vmem:[%s463 + $0x8c] sm:$0xff]
                  %522 = vst [vmem:[%s464 + $0x70] sm:$0xff] %v521
                  %v523 = vld [vmem:[%s463 + $0x94] sm:$0xff]
                  %524 = vst [vmem:[%s464 + $0x78] sm:$0xff] %v523
                  %v525 = vld [vmem:[%s463 + $0x9c] sm:$0xff]
                  %526 = vst [vmem:[%s464 + $0x80] sm:$0xff] %v525
                  %v527 = vld [vmem:[%s463 + $0xa4] sm:$0xff]
                  %528 = vst [vmem:[%s464 + $0x88] sm:$0xff] %v527
                  %v529 = vld [vmem:[%s463 + $0xa0] sm:$0xff]
                  %530 = vst [vmem:[%s464 + $0x80] sm:$0xff] %v529
                  %v531 = vld [vmem:[%s463 + $0xa8] sm:$0xff]
                  %532 = vst [vmem:[%s464 + $0x88] sm:$0xff] %v531
                  %v533 = vld [vmem:[%s463 + $0xb0] sm:$0xff]
                  %534 = vst [vmem:[%s464 + $0x90] sm:$0xff] %v533
                  %v535 = vld [vmem:[%s463 + $0xb8] sm:$0xff]
                  %536 = vst [vmem:[%s464 + $0x98] sm:$0xff] %v535
                  %v537 = vld [vmem:[%s463 + $0xb4] sm:$0xff]
                  %538 = vst [vmem:[%s464 + $0x90] sm:$0xff] %v537
                  %v539 = vld [vmem:[%s463 + $0xbc] sm:$0xff]
                  %540 = vst [vmem:[%s464 + $0x98] sm:$0xff] %v539
                  %v541 = vld [vmem:[%s463 + $0xc4] sm:$0xff]
                  %542 = vst [vmem:[%s464 + $0xa0] sm:$0xff] %v541
                  %v543 = vld [vmem:[%s463 + $0xcc] sm:$0xff]
                  %544 = vst [vmem:[%s464 + $0xa8] sm:$0xff] %v543
                  %v545 = vld [vmem:[%s463 + $0xc8] sm:$0xff]
                  %546 = vst [vmem:[%s464 + $0xa0] sm:$0xff] %v545
                  %v547 = vld [vmem:[%s463 + $0xd0] sm:$0xff]
                  %548 = vst [vmem:[%s464 + $0xa8] sm:$0xff] %v547
                  %v549 = vld [vmem:[%s463 + $0xd8] sm:$0xff]
                  %550 = vst [vmem:[%s464 + $0xb0] sm:$0xff] %v549
                  %v551 = vld [vmem:[%s463 + $0xe0] sm:$0xff]
                  %552 = vst [vmem:[%s464 + $0xb8] sm:$0xff] %v551
                  %v553 = vld [vmem:[%s463 + $0xdc] sm:$0xff]
                  %554 = vst [vmem:[%s464 + $0xb0] sm:$0xff] %v553
                  %v555 = vld [vmem:[%s463 + $0xe4] sm:$0xff]
                  %556 = vst [vmem:[%s464 + $0xb8] sm:$0xff] %v555
                  %v557 = vld [vmem:[%s463 + $0xec] sm:$0xff]
                  %558 = vst [vmem:[%s464 + $0xc0] sm:$0xff] %v557
                  %v559 = vld [vmem:[%s463 + $0xf4] sm:$0xff]
                  %560 = vst [vmem:[%s464 + $0xc8] sm:$0xff] %v559
                  %v561 = vld [vmem:[%s463 + $0xf0] sm:$0xff]
                  %562 = vst [vmem:[%s464 + $0xc0] sm:$0xff] %v561
                  %v563 = vld [vmem:[%s463 + $0xf8] sm:$0xff]
                  %564 = vst [vmem:[%s464 + $0xc8] sm:$0xff] %v563
                  %v565 = vld [vmem:[%s463 + $0x100] sm:$0xff]
                  %566 = vst [vmem:[%s464 + $0xd0] sm:$0xff] %v565
                  %v567 = vld [vmem:[%s463 + $0x108] sm:$0xff]
                  %568 = vst [vmem:[%s464 + $0xd8] sm:$0xff] %v567
                  %v569 = vld [vmem:[%s463 + $0x104] sm:$0xff]
                  %570 = vst [vmem:[%s464 + $0xd0] sm:$0xff] %v569
                  %v571 = vld [vmem:[%s463 + $0x10c] sm:$0xff]
                  %572 = vst [vmem:[%s464 + $0xd8] sm:$0xff] %v571
                  %v573 = vld [vmem:[%s463 + $0x114] sm:$0xff]
                  %574 = vst [vmem:[%s464 + $0xe0] sm:$0xff] %v573
                  %v575 = vld [vmem:[%s463 + $0x11c] sm:$0xff]
                  %576 = vst [vmem:[%s464 + $0xe8] sm:$0xff] %v575
                  %v577 = vld [vmem:[%s463 + $0x118] sm:$0xff]
                  %578 = vst [vmem:[%s464 + $0xe0] sm:$0xff] %v577
                  %v579 = vld [vmem:[%s463 + $0x120] sm:$0xff]
                  %580 = vst [vmem:[%s464 + $0xe8] sm:$0xff] %v579
                  %v581 = vld [vmem:[%s463 + $0x128] sm:$0xff]
                  %582 = vst [vmem:[%s464 + $0xf0] sm:$0xff] %v581
                  %v583 = vld [vmem:[%s463 + $0x130] sm:$0xff]
                  %584 = vst [vmem:[%s464 + $0xf8] sm:$0xff] %v583
                  %v585 = vld [vmem:[%s463 + $0x12c] sm:$0xff]
                  %586 = vst [vmem:[%s464 + $0xf0] sm:$0xff] %v585
                  %v587 = vld [vmem:[%s463 + $0x134] sm:$0xff]
                  %588 = vst [vmem:[%s464 + $0xf8] sm:$0xff] %v587
                  %v589 = vld [vmem:[%s463 + $0x13c] sm:$0xff]
                  %590 = vst [vmem:[%s464 + $0x100] sm:$0xff] %v589
                  %v591 = vld [vmem:[%s463 + $0x144] sm:$0xff]
                  %592 = vst [vmem:[%s464 + $0x108] sm:$0xff] %v591
                  %v593 = vld [vmem:[%s463 + $0x140] sm:$0xff]
                  %594 = vst [vmem:[%s464 + $0x100] sm:$0xff] %v593
                  %v595 = vld [vmem:[%s463 + $0x148] sm:$0xff]
                  %596 = vst [vmem:[%s464 + $0x108] sm:$0xff] %v595
                  %v597 = vld [vmem:[%s463 + $0x150] sm:$0xff]
                  %598 = vst [vmem:[%s464 + $0x110] sm:$0xff] %v597
                  %v599 = vld [vmem:[%s463 + $0x158] sm:$0xff]
                  %600 = vst [vmem:[%s464 + $0x118] sm:$0xff] %v599
                  %v601 = vld [vmem:[%s463 + $0x154] sm:$0xff]
                  %602 = vst [vmem:[%s464 + $0x110] sm:$0xff] %v601
                  %v603 = vld [vmem:[%s463 + $0x15c] sm:$0xff]
                  %604 = vst [vmem:[%s464 + $0x118] sm:$0xff] %v603
                  %v605 = vld [vmem:[%s463 + $0x164] sm:$0xff]
                  %606 = vst [vmem:[%s464 + $0x120] sm:$0xff] %v605
                  %v607 = vld [vmem:[%s463 + $0x16c] sm:$0xff]
                  %608 = vst [vmem:[%s464 + $0x128] sm:$0xff] %v607
                  %v609 = vld [vmem:[%s463 + $0x168] sm:$0xff]
                  %610 = vst [vmem:[%s464 + $0x120] sm:$0xff] %v609
                  %v611 = vld [vmem:[%s463 + $0x170] sm:$0xff]
                  %612 = vst [vmem:[%s464 + $0x128] sm:$0xff] %v611
                  %v613 = vld [vmem:[%s463 + $0x178] sm:$0xff]
                  %614 = vst [vmem:[%s464 + $0x130] sm:$0xff] %v613
                  %v615 = vld [vmem:[%s463 + $0x180] sm:$0xff]
                  %616 = vst [vmem:[%s464 + $0x138] sm:$0xff] %v615
                  %s617 = sadd.s32 1, %s462
                  %p618 = scmp.ge.s32.totalorder %s617, %s453
                  %s619 = scalar_select %p618, 0, %s617
                  %s620 = smul.u32 %s619, 32
                  %s621 = smul.u32 %s619, 32
                  %s622 = scalar_lea.vmem %s142, %s620
                  %s623 = scalar_lea.vmem %s134, %s621 [#allocation2]
                $region74: #{critic_forward.5} parent=68 // loop_footer
                  %s459 = sadd.s32 %s457, 1
                $region75: #{critic_forward.5} parent=68 // loop_footer_branch
                  %456 = sbr.rel target = $region71
                $region76: #{critic_forward.5} parent=68 // loop_exit
                  _
                %s624 = sshrl.u32 %s452, 2
                %s625 = sand.u32 %s452, 3
                %s626 = smul.u32 %s624, 4
                %s627 = smul.u32 128, %s626
                %s628 = sshra.s32 %s627, 4
                %s629 = scalar_lea.vmem %s142, %s628
                %s630 = smul.u32 128, %s626
                %s631 = sshra.s32 %s630, 4
                %s632 = scalar_lea.vmem %s134, %s631 [#allocation2]
                // While loop
                $region77: #{critic_forward.5} parent=68 // loop_pre_header
                  _
                $region78: #{critic_forward.5} parent=68 // loop_header
                  %s636 = sphi 0, %s638
                  %p637 = scmp.ge.s32.totalorder %s636, %s625
                  %s641 = sphi 0, %s684
                  %s642 = sphi %s629, %s687
                  %s643 = sphi %s632, %s688
                $region79: #{critic_forward.5} parent=68 // loop_header_branch
                  %640 = sbr.rel (%p637) target = $region83
                $region80: #{critic_forward.5} parent=68 // loop_body
                  %v644 = vld [vmem:[%s642] sm:$0xff]
                  %645 = vst [vmem:[%s643] sm:$0xff] %v644
                  %v646 = vld [vmem:[%s642 + $0x14] sm:$0xff]
                  %647 = vst [vmem:[%s643 + $0x10] sm:$0xff] %v646
                  %v648 = vld [vmem:[%s642 + $0x28] sm:$0xff]
                  %649 = vst [vmem:[%s643 + $0x20] sm:$0xff] %v648
                  %v650 = vld [vmem:[%s642 + $0x3c] sm:$0xff]
                  %651 = vst [vmem:[%s643 + $0x30] sm:$0xff] %v650
                  %v652 = vld [vmem:[%s642 + $0x50] sm:$0xff]
                  %653 = vst [vmem:[%s643 + $0x40] sm:$0xff] %v652
                  %v654 = vld [vmem:[%s642 + $0x64] sm:$0xff]
                  %655 = vst [vmem:[%s643 + $0x50] sm:$0xff] %v654
                  %v656 = vld [vmem:[%s642 + $0x78] sm:$0xff]
                  %657 = vst [vmem:[%s643 + $0x60] sm:$0xff] %v656
                  %v658 = vld [vmem:[%s642 + $0x8c] sm:$0xff]
                  %659 = vst [vmem:[%s643 + $0x70] sm:$0xff] %v658
                  %v660 = vld [vmem:[%s642 + $0xa0] sm:$0xff]
                  %661 = vst [vmem:[%s643 + $0x80] sm:$0xff] %v660
                  %v662 = vld [vmem:[%s642 + $0xb4] sm:$0xff]
                  %663 = vst [vmem:[%s643 + $0x90] sm:$0xff] %v662
                  %v664 = vld [vmem:[%s642 + $0xc8] sm:$0xff]
                  %665 = vst [vmem:[%s643 + $0xa0] sm:$0xff] %v664
                  %v666 = vld [vmem:[%s642 + $0xdc] sm:$0xff]
                  %667 = vst [vmem:[%s643 + $0xb0] sm:$0xff] %v666
                  %v668 = vld [vmem:[%s642 + $0xf0] sm:$0xff]
                  %669 = vst [vmem:[%s643 + $0xc0] sm:$0xff] %v668
                  %v670 = vld [vmem:[%s642 + $0x104] sm:$0xff]
                  %671 = vst [vmem:[%s643 + $0xd0] sm:$0xff] %v670
                  %v672 = vld [vmem:[%s642 + $0x118] sm:$0xff]
                  %673 = vst [vmem:[%s643 + $0xe0] sm:$0xff] %v672
                  %v674 = vld [vmem:[%s642 + $0x12c] sm:$0xff]
                  %675 = vst [vmem:[%s643 + $0xf0] sm:$0xff] %v674
                  %v676 = vld [vmem:[%s642 + $0x140] sm:$0xff]
                  %677 = vst [vmem:[%s643 + $0x100] sm:$0xff] %v676
                  %v678 = vld [vmem:[%s642 + $0x154] sm:$0xff]
                  %679 = vst [vmem:[%s643 + $0x110] sm:$0xff] %v678
                  %v680 = vld [vmem:[%s642 + $0x168] sm:$0xff]
                  %681 = vst [vmem:[%s643 + $0x120] sm:$0xff] %v680
                  %s682 = sadd.s32 1, %s641
                  %p683 = scmp.ge.s32.totalorder %s682, %s625
                  %s684 = scalar_select %p683, 0, %s682
                  %s685 = smul.u32 %s684, 8
                  %s686 = smul.u32 %s684, 8
                  %s687 = scalar_lea.vmem %s629, %s685
                  %s688 = scalar_lea.vmem %s632, %s686 [#allocation2]
                $region81: #{critic_forward.5} parent=68 // loop_footer
                  %s638 = sadd.s32 %s636, 1
                $region82: #{critic_forward.5} parent=68 // loop_footer_branch
                  %635 = sbr.rel target = $region78
                $region83: #{critic_forward.5} parent=68 // loop_exit
                  _
                %s689 = sshll.u32 1, %s447
                %s690 = ssub.s32 %s689, 1
                loop: start=0, step=1, limit=1
                $region84: #{critic_forward.5} parent=68 // loop_pre_header
                  _
                $region85: #{critic_forward.5} parent=68 // loop_header
                  %s692 = sphi 0, %s696
                  %p693 = scmp.ge.s32.totalorder %s692, 1
                  %s697 = sphi %s449, %s449
                  %s698 = sphi %s451, %s451
                $region86: #{critic_forward.5} parent=68 // loop_header_branch
                  %695 = sbr.rel (%p693) target = $region90
                $region87: #{critic_forward.5} parent=68 // loop_body
                  %v699 = vld [vmem:[%s697] sm:%s690]
                  %700 = vst [vmem:[%s698] sm:%s690] %v699
                  %v701 = vld [vmem:[%s697 + $0x14] sm:%s690]
                  %702 = vst [vmem:[%s698 + $0x10] sm:%s690] %v701
                  %v703 = vld [vmem:[%s697 + $0x28] sm:%s690]
                  %704 = vst [vmem:[%s698 + $0x20] sm:%s690] %v703
                  %v705 = vld [vmem:[%s697 + $0x3c] sm:%s690]
                  %706 = vst [vmem:[%s698 + $0x30] sm:%s690] %v705
                  %v707 = vld [vmem:[%s697 + $0x50] sm:%s690]
                  %708 = vst [vmem:[%s698 + $0x40] sm:%s690] %v707
                  %v709 = vld [vmem:[%s697 + $0x64] sm:%s690]
                  %710 = vst [vmem:[%s698 + $0x50] sm:%s690] %v709
                  %v711 = vld [vmem:[%s697 + $0x78] sm:%s690]
                  %712 = vst [vmem:[%s698 + $0x60] sm:%s690] %v711
                  %v713 = vld [vmem:[%s697 + $0x8c] sm:%s690]
                  %714 = vst [vmem:[%s698 + $0x70] sm:%s690] %v713
                  %v715 = vld [vmem:[%s697 + $0xa0] sm:%s690]
                  %716 = vst [vmem:[%s698 + $0x80] sm:%s690] %v715
                  %v717 = vld [vmem:[%s697 + $0xb4] sm:%s690]
                  %718 = vst [vmem:[%s698 + $0x90] sm:%s690] %v717
                  %v719 = vld [vmem:[%s697 + $0xc8] sm:%s690]
                  %720 = vst [vmem:[%s698 + $0xa0] sm:%s690] %v719
                  %v721 = vld [vmem:[%s697 + $0xdc] sm:%s690]
                  %722 = vst [vmem:[%s698 + $0xb0] sm:%s690] %v721
                  %v723 = vld [vmem:[%s697 + $0xf0] sm:%s690]
                  %724 = vst [vmem:[%s698 + $0xc0] sm:%s690] %v723
                  %v725 = vld [vmem:[%s697 + $0x104] sm:%s690]
                  %726 = vst [vmem:[%s698 + $0xd0] sm:%s690] %v725
                  %v727 = vld [vmem:[%s697 + $0x118] sm:%s690]
                  %728 = vst [vmem:[%s698 + $0xe0] sm:%s690] %v727
                  %v729 = vld [vmem:[%s697 + $0x12c] sm:%s690]
                  %730 = vst [vmem:[%s698 + $0xf0] sm:%s690] %v729
                  %v731 = vld [vmem:[%s697 + $0x140] sm:%s690]
                  %732 = vst [vmem:[%s698 + $0x100] sm:%s690] %v731
                  %v733 = vld [vmem:[%s697 + $0x154] sm:%s690]
                  %734 = vst [vmem:[%s698 + $0x110] sm:%s690] %v733
                  %v735 = vld [vmem:[%s697 + $0x168] sm:%s690]
                  %736 = vst [vmem:[%s698 + $0x120] sm:%s690] %v735
                $region88: #{critic_forward.5} parent=68 // loop_footer
                  %s696 = sadd.s32 1, %s692
                $region89: #{critic_forward.5} parent=68 // loop_footer_branch
                  %691 = sbr.rel target = $region85
                $region90: #{critic_forward.5} parent=68 // loop_exit
                  _
              $region69: #{critic_forward.5} parent=35 // pred_fallthru
                _
            $region36: #{critic_forward.5} parent=31 // pred_fallthru
              _
            // Predicated region
            $region37: #{critic_forward.5} parent=31 // pred_check
              %p151 = pneg %p147
            $region38: #{critic_forward.5} parent=31 // pred_check_branch
              %153 = sbr.rel (%p151) target = $region40
            $region39: #{critic_forward.5} parent=31 // pred_region
              %s154 = sshll.u32 1, %s143
              %s155 = ssub.s32 %s154, 1
              loop: start=0, step=1, limit=1
              $region41: #{critic_forward.5} parent=39 // loop_pre_header
                _
              $region42: #{critic_forward.5} parent=39 // loop_header
                %s157 = sphi 0, %s161
                %p158 = scmp.ge.s32.totalorder %s157, 1
                %s162 = sphi %s142, %s142
                %s163 = sphi %s134, %s134
              $region43: #{critic_forward.5} parent=39 // loop_header_branch
                %160 = sbr.rel (%p158) target = $region47
              $region44: #{critic_forward.5} parent=39 // loop_body
                %v164 = vld [vmem:[%s162] sm:%s155]
                %165 = vst [vmem:[%s163] sm:%s155] %v164
                %v166 = vld [vmem:[%s162 + $0x14] sm:%s155]
                %167 = vst [vmem:[%s163 + $0x10] sm:%s155] %v166
                %v168 = vld [vmem:[%s162 + $0x28] sm:%s155]
                %169 = vst [vmem:[%s163 + $0x20] sm:%s155] %v168
                %v170 = vld [vmem:[%s162 + $0x3c] sm:%s155]
                %171 = vst [vmem:[%s163 + $0x30] sm:%s155] %v170
                %v172 = vld [vmem:[%s162 + $0x50] sm:%s155]
                %173 = vst [vmem:[%s163 + $0x40] sm:%s155] %v172
                %v174 = vld [vmem:[%s162 + $0x64] sm:%s155]
                %175 = vst [vmem:[%s163 + $0x50] sm:%s155] %v174
                %v176 = vld [vmem:[%s162 + $0x78] sm:%s155]
                %177 = vst [vmem:[%s163 + $0x60] sm:%s155] %v176
                %v178 = vld [vmem:[%s162 + $0x8c] sm:%s155]
                %179 = vst [vmem:[%s163 + $0x70] sm:%s155] %v178
                %v180 = vld [vmem:[%s162 + $0xa0] sm:%s155]
                %181 = vst [vmem:[%s163 + $0x80] sm:%s155] %v180
                %v182 = vld [vmem:[%s162 + $0xb4] sm:%s155]
                %183 = vst [vmem:[%s163 + $0x90] sm:%s155] %v182
                %v184 = vld [vmem:[%s162 + $0xc8] sm:%s155]
                %185 = vst [vmem:[%s163 + $0xa0] sm:%s155] %v184
                %v186 = vld [vmem:[%s162 + $0xdc] sm:%s155]
                %187 = vst [vmem:[%s163 + $0xb0] sm:%s155] %v186
                %v188 = vld [vmem:[%s162 + $0xf0] sm:%s155]
                %189 = vst [vmem:[%s163 + $0xc0] sm:%s155] %v188
                %v190 = vld [vmem:[%s162 + $0x104] sm:%s155]
                %191 = vst [vmem:[%s163 + $0xd0] sm:%s155] %v190
                %v192 = vld [vmem:[%s162 + $0x118] sm:%s155]
                %193 = vst [vmem:[%s163 + $0xe0] sm:%s155] %v192
                %v194 = vld [vmem:[%s162 + $0x12c] sm:%s155]
                %195 = vst [vmem:[%s163 + $0xf0] sm:%s155] %v194
                %v196 = vld [vmem:[%s162 + $0x140] sm:%s155]
                %197 = vst [vmem:[%s163 + $0x100] sm:%s155] %v196
                %v198 = vld [vmem:[%s162 + $0x154] sm:%s155]
                %199 = vst [vmem:[%s163 + $0x110] sm:%s155] %v198
                %v200 = vld [vmem:[%s162 + $0x168] sm:%s155]
                %201 = vst [vmem:[%s163 + $0x120] sm:%s155] %v200
              $region45: #{critic_forward.5} parent=39 // loop_footer
                %s161 = sadd.s32 1, %s157
              $region46: #{critic_forward.5} parent=39 // loop_footer_branch
                %156 = sbr.rel target = $region42
              $region47: #{critic_forward.5} parent=39 // loop_exit
                _
            $region40: #{critic_forward.5} parent=31 // pred_fallthru
              _
          $region32: #{critic_forward.5} parent=27 // pred_fallthru
            _
          %737 = vnop
        $region28: #{critic_forward.5} parent=23 // pred_fallthru
          _
      $region24: #{critic_forward.5} parent=5 // pred_fallthru
        _
      %p738 = scmp.le.s32.totalorder 1, %s9
      %p739 = scmp.lt.s32.totalorder %s9, 3
      %p740 = pnand %p738, %p739
      %p741 = pneg %p740
      // Predicated region
      $region91: #{critic_forward.5} parent=5 // pred_check
        _
      $region92: #{critic_forward.5} parent=5 // pred_check_branch
        %743 = sbr.rel (%p740) target = $region94
      $region93: #{critic_forward.5} parent=5 // pred_region
        %s744 = ssub.s32 %s9, 1
        %s745 = sand.u32 %s64, 1
        %s746 = sand.u32 %s64, 1
        %s747 = smul.addr %s746, 304
        %s748 = scalar_lea.vmem [#allocation2], %s747
        // Predicated region
        $region95: #{critic_forward.5} parent=93 // pred_check
          %p749 = pneg %p77
        $region96: #{critic_forward.5} parent=93 // pred_check_branch
          %751 = sbr.rel (%p749) target = $region98
        $region97: #{critic_forward.5} parent=93 // pred_region
          _
        $region98: #{critic_forward.5} parent=93 // pred_fallthru
          _
        %p752 = pneg %p30
        %p753 = pneg %p27
        %p754 = pneg %p51
        %p755 = pneg %p48
        %s756 = sand.u32 %s64, 1
        %s757 = sand.u32 %s64, 1
        %s758 = smul.addr %s757, 304
        %s759 = scalar_lea.vmem [#allocation2], %s758
        %p760 = pneg %p77
        %p761 = pneg %p74
        %p762 = pneg %p103
        %p763 = pneg %p100
        %s764 = sand.u32 %s90, 1
        %s765 = sand.u32 %s90, 1
        %s766 = smul.addr %s765, 32
        %s767 = scalar_lea.vmem [#allocation3], %s766
        %s768 = smul.u32 4, %s14
        %s769 = ssub.s32 5, %s768
        %p770 = scmp.lt.s32.totalorder %s769, 4
        %s771 = scalar_select %p770, %s769, 4
        %s772 = smul.u32 1216, %s771
        %s773 = smul.u32 4, %s14
        %s774 = ssub.s32 5, %s773
        %p775 = scmp.lt.s32.totalorder %s774, 4
        %s776 = scalar_select %p775, %s774, 4
        %s777 = smul.u32 128, %s776
        %v779 = vld [vmem:[%s0] sm:$0xff]
        %v780 = vld [vmem:[%s0 + $0x8] sm:$0x33]
        %v781 = vld [vmem:[%s748] sm:$0xff]
        %v782 = vld [vmem:[%s748 + $0x8] sm:$0xff]
        %v783 = vld [vmem:[%s748 + $0x10] sm:$0xff]
        %v784 = vld [vmem:[%s748 + $0x18] sm:$0xff]
        %v785 = vld [vmem:[%s748 + $0x20] sm:$0xff]
        %v786 = vld [vmem:[%s748 + $0x28] sm:$0xff]
        %v787 = vld [vmem:[%s748 + $0x30] sm:$0xff]
        %v788 = vld [vmem:[%s748 + $0x38] sm:$0xff]
        %v789 = vld [vmem:[%s748 + $0x40] sm:$0xff]
        %v790 = vld [vmem:[%s748 + $0x48] sm:$0xff]
        %v791 = vld [vmem:[%s748 + $0x50] sm:$0xff]
        %v792 = vld [vmem:[%s748 + $0x58] sm:$0xff]
        %v793 = vld [vmem:[%s748 + $0x60] sm:$0xff]
        %v794 = vld [vmem:[%s748 + $0x68] sm:$0xff]
        %v795 = vld [vmem:[%s748 + $0x70] sm:$0xff]
        %v796 = vld [vmem:[%s748 + $0x78] sm:$0xff]
        %v797 = vld [vmem:[%s748 + $0x80] sm:$0xff]
        %v798 = vld [vmem:[%s748 + $0x88] sm:$0xff]
        %v799 = vld [vmem:[%s748 + $0x90] sm:$0xff]
        %v800 = vld [vmem:[%s748 + $0x98] sm:$0xff]
        %v801 = vld [vmem:[%s748 + $0xa0] sm:$0xff]
        %v802 = vld [vmem:[%s748 + $0xa8] sm:$0xff]
        %v803 = vld [vmem:[%s748 + $0xb0] sm:$0xff]
        %v804 = vld [vmem:[%s748 + $0xb8] sm:$0xff]
        %v805 = vld [vmem:[%s748 + $0xc0] sm:$0xff]
        %v806 = vld [vmem:[%s748 + $0xc8] sm:$0xff]
        %v807 = vld [vmem:[%s748 + $0xd0] sm:$0xff]
        %v808 = vld [vmem:[%s748 + $0xd8] sm:$0xff]
        %v809 = vld [vmem:[%s748 + $0xe0] sm:$0xff]
        %v810 = vld [vmem:[%s748 + $0xe8] sm:$0xff]
        %v811 = vld [vmem:[%s748 + $0xf0] sm:$0xff]
        %v812 = vld [vmem:[%s748 + $0xf8] sm:$0xff]
        %v813 = vld [vmem:[%s748 + $0x100] sm:$0xff]
        %v814 = vld [vmem:[%s748 + $0x108] sm:$0xff]
        %v815 = vld [vmem:[%s748 + $0x110] sm:$0xff]
        %v816 = vld [vmem:[%s748 + $0x118] sm:$0xff]
        %v817 = vld [vmem:[%s748 + $0x120] sm:$0x77]
        %v818 = vld [vmem:[%s748 + $0x128] sm:$0x77]
        %v819 = vld [vmem:[%s1] sm:$0xff]
        %v820 = vld [vmem:[%s1 + $0x8] sm:$0xf]
        %822 = vset.pattern.permute.xlu0 0
        %823 = vperm.xlu0 %822, %v819
        %v824 = vpop.permute.xlu0 %823
        %827 = vset.pattern.permute.xlu0 0
        %828 = vperm.xlu0 %827, %v820
        %v829 = vpop.permute.xlu0 %828
        %v833 = vunpack.c.l.b16 %v779
        %v834 = vunpack.c.h.b16 %v779
        %v835 = vunpack.c.l.b16 %v780
        %v836 = vunpack.c.h.b16 %v780
        %v837 = vpack.c.b16 %v835, %v833
        %v838 = vpack.c.b16 %v836, %v834
        %v878 = vunpack.c.l.b16 %v781
        %v879 = vunpack.c.h.b16 %v781
        %v880 = vunpack.c.l.b16 %v782
        %v881 = vunpack.c.h.b16 %v782
        %v882 = vunpack.c.l.b16 %v783
        %v883 = vunpack.c.h.b16 %v783
        %v884 = vunpack.c.l.b16 %v784
        %v885 = vunpack.c.h.b16 %v784
        %v886 = vunpack.c.l.b16 %v785
        %v887 = vunpack.c.h.b16 %v785
        %v888 = vunpack.c.l.b16 %v786
        %v889 = vunpack.c.h.b16 %v786
        %v890 = vunpack.c.l.b16 %v787
        %v891 = vunpack.c.h.b16 %v787
        %v892 = vunpack.c.l.b16 %v788
        %v893 = vunpack.c.h.b16 %v788
        %v894 = vunpack.c.l.b16 %v789
        %v895 = vunpack.c.h.b16 %v789
        %v896 = vunpack.c.l.b16 %v790
        %v897 = vunpack.c.h.b16 %v790
        %v898 = vunpack.c.l.b16 %v791
        %v899 = vunpack.c.h.b16 %v791
        %v900 = vunpack.c.l.b16 %v792
        %v901 = vunpack.c.h.b16 %v792
        %v902 = vunpack.c.l.b16 %v793
        %v903 = vunpack.c.h.b16 %v793
        %v904 = vunpack.c.l.b16 %v794
        %v905 = vunpack.c.h.b16 %v794
        %v906 = vunpack.c.l.b16 %v795
        %v907 = vunpack.c.h.b16 %v795
        %v908 = vunpack.c.l.b16 %v796
        %v909 = vunpack.c.h.b16 %v796
        %v910 = vunpack.c.l.b16 %v797
        %v911 = vunpack.c.h.b16 %v797
        %v912 = vunpack.c.l.b16 %v798
        %v913 = vunpack.c.h.b16 %v798
        %v914 = vunpack.c.l.b16 %v799
        %v915 = vunpack.c.h.b16 %v799
        %v916 = vunpack.c.l.b16 %v800
        %v917 = vunpack.c.h.b16 %v800
        %v918 = vunpack.c.l.b16 %v801
        %v919 = vunpack.c.h.b16 %v801
        %v920 = vunpack.c.l.b16 %v802
        %v921 = vunpack.c.h.b16 %v802
        %v922 = vunpack.c.l.b16 %v803
        %v923 = vunpack.c.h.b16 %v803
        %v924 = vunpack.c.l.b16 %v804
        %v925 = vunpack.c.h.b16 %v804
        %v926 = vunpack.c.l.b16 %v805
        %v927 = vunpack.c.h.b16 %v805
        %v928 = vunpack.c.l.b16 %v806
        %v929 = vunpack.c.h.b16 %v806
        %v930 = vunpack.c.l.b16 %v807
        %v931 = vunpack.c.h.b16 %v807
        %v932 = vunpack.c.l.b16 %v808
        %v933 = vunpack.c.h.b16 %v808
        %v934 = vunpack.c.l.b16 %v809
        %v935 = vunpack.c.h.b16 %v809
        %v936 = vunpack.c.l.b16 %v810
        %v937 = vunpack.c.h.b16 %v810
        %v938 = vunpack.c.l.b16 %v811
        %v939 = vunpack.c.h.b16 %v811
        %v940 = vunpack.c.l.b16 %v812
        %v941 = vunpack.c.h.b16 %v812
        %v942 = vunpack.c.l.b16 %v813
        %v943 = vunpack.c.h.b16 %v813
        %v944 = vunpack.c.l.b16 %v814
        %v945 = vunpack.c.h.b16 %v814
        %v946 = vunpack.c.l.b16 %v815
        %v947 = vunpack.c.h.b16 %v815
        %v948 = vunpack.c.l.b16 %v816
        %v949 = vunpack.c.h.b16 %v816
        %v950 = vunpack.c.l.b16 %v817
        %v951 = vunpack.c.h.b16 %v817
        %v952 = vunpack.c.l.b16 %v818
        %v953 = vunpack.c.h.b16 %v818
        %v954 = vpack.c.b16 %v882, %v878
        %v955 = vpack.c.b16 %v883, %v879
        %v956 = vpack.c.b16 %v884, %v880
        %v957 = vpack.c.b16 %v885, %v881
        %v958 = vpack.c.b16 %v890, %v886
        %v959 = vpack.c.b16 %v891, %v887
        %v960 = vpack.c.b16 %v892, %v888
        %v961 = vpack.c.b16 %v893, %v889
        %v962 = vpack.c.b16 %v898, %v894
        %v963 = vpack.c.b16 %v899, %v895
        %v964 = vpack.c.b16 %v900, %v896
        %v965 = vpack.c.b16 %v901, %v897
        %v966 = vpack.c.b16 %v906, %v902
        %v967 = vpack.c.b16 %v907, %v903
        %v968 = vpack.c.b16 %v908, %v904
        %v969 = vpack.c.b16 %v909, %v905
        %v970 = vpack.c.b16 %v914, %v910
        %v971 = vpack.c.b16 %v915, %v911
        %v972 = vpack.c.b16 %v916, %v912
        %v973 = vpack.c.b16 %v917, %v913
        %v974 = vpack.c.b16 %v922, %v918
        %v975 = vpack.c.b16 %v923, %v919
        %v976 = vpack.c.b16 %v924, %v920
        %v977 = vpack.c.b16 %v925, %v921
        %v978 = vpack.c.b16 %v930, %v926
        %v979 = vpack.c.b16 %v931, %v927
        %v980 = vpack.c.b16 %v932, %v928
        %v981 = vpack.c.b16 %v933, %v929
        %v982 = vpack.c.b16 %v938, %v934
        %v983 = vpack.c.b16 %v939, %v935
        %v984 = vpack.c.b16 %v940, %v936
        %v985 = vpack.c.b16 %v941, %v937
        %v986 = vpack.c.b16 %v946, %v942
        %v987 = vpack.c.b16 %v947, %v943
        %v988 = vpack.c.b16 %v948, %v944
        %v989 = vpack.c.b16 %v949, %v945
        %v990 = vpack.c.b16 %v950, %v950
        %v991 = vpack.c.b16 %v951, %v951
        %v992 = vpack.c.b16 %v952, %v952
        %v993 = vpack.c.b16 %v953, %v953
        %vm1030 = vcmask 179200
        %v1032 = vsel %vm1030, %v838, 0
        %vm1034 = vcmask 1042432
        %v1036 = vsel %vm1034, %v990, 0
        %v1039 = vsel %vm1034, %v991, 0
        %v1042 = vsel %vm1034, %v992, 0
        %v1045 = vsel %vm1034, %v993, 0
        %1047 = vmatprep.subr.bf16.mxu0 %v983
        %1048 = vmatpush1.bf16.msra.mxu0 %v982
        %1049 = vmatprep.subr.bf16.mxu0 %v979
        %1050 = vmatpush1.bf16.msra.mxu0 %v978
        %1051 = vmatprep.subr.bf16.mxu0 %v975
        %1052 = vmatpush1.bf16.msra.mxu0 %v974
        %1053 = vmatprep.subr.bf16.mxu0 %v971
        %1054 = vmatpush1.bf16.msra.mxu0 %v970
        %1055 = vmatprep.subr.bf16.mxu0 %v967
        %1056 = vmatpush1.bf16.msra.mxu0 %v966
        %1057 = vmatprep.subr.bf16.mxu0 %v963
        %1058 = vmatpush1.bf16.msra.mxu0 %v962
        %1059 = vmatprep.subr.bf16.mxu0 %v959
        %1060 = vmatpush1.bf16.msra.mxu0 %v958
        %1061 = vmatprep.subr.bf16.mxu0 %v955
        %1062 = vmatpush1.bf16.msra.mxu0 %v954
        %1063 = vmatprep.subr.bf16.mxu0 0
        %1064 = vmatpush2.bf16.msra.mxu0 0
        %1065 = vmatprep.subr.bf16.mxu0 0
        %1066 = vmatpush2.bf16.msra.mxu0 0
        %1067 = vmatprep.subr.bf16.mxu0 0
        %1068 = vmatpush2.bf16.msra.mxu0 0
        %1069 = vmatprep.subr.bf16.mxu0 0
        %1070 = vmatpush2.bf16.msra.mxu0 0
        %1071 = vmatprep.subr.bf16.mxu0 0
        %1072 = vmatpush2.bf16.msra.mxu0 0
        %1073 = vmatprep.subr.bf16.mxu0 0
        %1074 = vmatpush2.bf16.msra.mxu0 0
        %1075 = vmatprep.subr.bf16.mxu0 %v1039
        %1076 = vmatpush2.bf16.msra.mxu0 %v1036
        %1077 = vmatprep.subr.bf16.mxu0 %v987
        %1078 = vmatpush2.bf16.msra.mxu0 %v986
        %1079 = vmatprep.mubr.bf16.mxu0 %v1032
        %1080 = vmatmul.mubr.bf16.gmra.mxu0 %v837
        %v1081 = vpop.f32.mrf.mxu0
        %v1082 = vadd.f32 %v824, %v1081
        %v1083 = vpop.f32.mrf.mxu0
        %v1084 = vadd.f32 %v824, %v1083
        %v1085 = vpop.f32.mrf.mxu0
        %v1086 = vadd.f32 %v829, %v1085
        %v1087 = vpop.f32.mrf.mxu0
        %v1088 = vadd.f32 %v829, %v1087
        %1089 = vdwg.mxu0
        %1090 = vmatprep.subr.bf16.mxu0 %v985
        %1091 = vmatpush1.bf16.msra.mxu0 %v984
        %1092 = vmatprep.subr.bf16.mxu0 %v981
        %1093 = vmatpush1.bf16.msra.mxu0 %v980
        %1094 = vmatprep.subr.bf16.mxu0 %v977
        %1095 = vmatpush1.bf16.msra.mxu0 %v976
        %1096 = vmatprep.subr.bf16.mxu0 %v973
        %1097 = vmatpush1.bf16.msra.mxu0 %v972
        %1098 = vmatprep.subr.bf16.mxu0 %v969
        %1099 = vmatpush1.bf16.msra.mxu0 %v968
        %1100 = vmatprep.subr.bf16.mxu0 %v965
        %1101 = vmatpush1.bf16.msra.mxu0 %v964
        %1102 = vmatprep.subr.bf16.mxu0 %v961
        %1103 = vmatpush1.bf16.msra.mxu0 %v960
        %1104 = vmatprep.subr.bf16.mxu0 %v957
        %1105 = vmatpush1.bf16.msra.mxu0 %v956
        %1106 = vmatprep.subr.bf16.mxu0 0
        %1107 = vmatpush2.bf16.msra.mxu0 0
        %1108 = vmatprep.subr.bf16.mxu0 0
        %1109 = vmatpush2.bf16.msra.mxu0 0
        %1110 = vmatprep.subr.bf16.mxu0 0
        %1111 = vmatpush2.bf16.msra.mxu0 0
        %1112 = vmatprep.subr.bf16.mxu0 0
        %1113 = vmatpush2.bf16.msra.mxu0 0
        %1114 = vmatprep.subr.bf16.mxu0 0
        %1115 = vmatpush2.bf16.msra.mxu0 0
        %1116 = vmatprep.subr.bf16.mxu0 0
        %1117 = vmatpush2.bf16.msra.mxu0 0
        %1118 = vmatprep.subr.bf16.mxu0 %v1045
        %1119 = vmatpush2.bf16.msra.mxu0 %v1042
        %1120 = vmatprep.subr.bf16.mxu0 %v989
        %1121 = vmatpush2.bf16.msra.mxu0 %v988
        %1122 = vmatprep.mubr.bf16.mxu0 %v1032
        %1123 = vmatmul.mubr.bf16.gmra.mxu0 %v837
        %v1124 = vpop.f32.mrf.mxu0
        %v1125 = vadd.f32 %v824, %v1124
        %v1126 = vpop.f32.mrf.mxu0
        %v1127 = vadd.f32 %v824, %v1126
        %v1128 = vpop.f32.mrf.mxu0
        %v1129 = vadd.f32 %v829, %v1128
        %v1130 = vpop.f32.mrf.mxu0
        %v1131 = vadd.f32 %v829, %v1130
        %1132 = vdwg.mxu0
        %v1133 = vmax.f32 %v1082, 0.0
        %v1134 = vmax.f32 %v1084, 0.0
        %v1135 = vmax.f32 %v1125, 0.0
        %v1136 = vmax.f32 %v1127, 0.0
        %v1137 = vmax.f32 %v1086, 0.0
        %v1138 = vmax.f32 %v1088, 0.0
        %v1139 = vmax.f32 %v1129, 0.0
        %v1140 = vmax.f32 %v1131, 0.0
        %v1141 = vpack.c.bf16 %v1137, %v1133
        %v1142 = vpack.c.bf16 %v1138, %v1134
        %v1143 = vpack.c.bf16 %v1139, %v1135
        %v1144 = vpack.c.bf16 %v1140, %v1136
        %v1149 = vunpack.c.l.b16 %v1141
        %v1150 = vunpack.c.l.b16 %v1142
        %v1151 = vunpack.c.l.b16 %v1143
        %v1152 = vunpack.c.l.b16 %v1144
        %v1153 = vunpack.c.h.b16 %v1141
        %v1154 = vunpack.c.h.b16 %v1142
        %v1155 = vunpack.c.h.b16 %v1143
        %v1156 = vunpack.c.h.b16 %v1144
        %v1157 = vpack.c.b16 %v1150, %v1149
        %v1158 = vpack.c.b16 %v1152, %v1151
        %v1159 = vpack.c.b16 %v1154, %v1153
        %v1160 = vpack.c.b16 %v1156, %v1155
        %1165 = vst [vmem:[%s767] sm:$0xff] %v1157
        %1166 = vst [vmem:[%s767 + $0x8] sm:$0xff] %v1158
        %1167 = vst [vmem:[%s767 + $0x10] sm:$0x33] %v1159
        %1168 = vst [vmem:[%s767 + $0x18] sm:$0x33] %v1160
        %s1169 = sand.u32 %s90, 1
        %s1170 = sand.u32 %s90, 1
        %s1171 = smul.addr %s1170, 32
        %s1172 = scalar_lea.vmem [#allocation3], %s1171
        // Predicated region
        $region99: #{critic_forward.5} parent=93 // pred_check
          %p1173 = pneg %p100
        $region100: #{critic_forward.5} parent=93 // pred_check_branch
          %1175 = sbr.rel (%p1173) target = $region102
        $region101: #{critic_forward.5} parent=93 // pred_region
          %s1176 = smul.u32 4, %s14
          %s1177 = ssub.s32 5, %s1176
          %p1178 = scmp.lt.s32.totalorder %s1177, 4
          %s1179 = scalar_select %p1178, %s1177, 4
          %s1180 = smul.u32 128, %s1179
          %p1181 = scmp.ne.s32.totalorder 0, %s1180
          %s1182 = smul.addr %s1176, 4
          %s1183 = scalar_lea.vmem %s3, %s1182
          %s1184 = smul.u32 %s1179, 4
          // Predicated region
          $region103: #{critic_forward.5} parent=101 // pred_check
            %p1185 = pneg %p1181
          $region104: #{critic_forward.5} parent=101 // pred_check_branch
            %1187 = sbr.rel (%p1185) target = $region106
          $region105: #{critic_forward.5} parent=101 // pred_region
            %p1188 = scmp.lt.u32.totalorder %s1184, 8
            %p1189 = pneg %p1188
            // Predicated region
            $region107: #{critic_forward.5} parent=105 // pred_check
              _
            $region108: #{critic_forward.5} parent=105 // pred_check_branch
              %1191 = sbr.rel (%p1188) target = $region110
            $region109: #{critic_forward.5} parent=105 // pred_region
              %s1209 = sand.u32 %s1184, 7
              %p1210 = scmp.eq.s32.totalorder %s1209, 0
              // Predicated region
              $region122: #{critic_forward.5} parent=109 // pred_check
                %p1211 = pneg %p1210
              $region123: #{critic_forward.5} parent=109 // pred_check_branch
                %1213 = sbr.rel (%p1211) target = $region125
              $region124: #{critic_forward.5} parent=109 // pred_region
                %s1214 = sshrl.u32 %s1184, 3
                %s1215 = sshrl.u32 %s1214, 5
                // While loop
                $region126: #{critic_forward.5} parent=124 // loop_pre_header
                  _
                $region127: #{critic_forward.5} parent=124 // loop_header
                  %s1219 = sphi 0, %s1221
                  %p1220 = scmp.ge.s32.totalorder %s1219, %s1215
                  %s1224 = sphi 0, %s1357
                  %s1225 = sphi %s1172, %s1360
                  %s1226 = sphi %s1183, %s1361
                $region128: #{critic_forward.5} parent=124 // loop_header_branch
                  %1223 = sbr.rel (%p1220) target = $region132
                $region129: #{critic_forward.5} parent=124 // loop_body
                  %v1227 = vld [vmem:[%s1225] sm:$0xff]
                  %1228 = vst [vmem:[%s1226] sm:$0xff] %v1227
                  %v1229 = vld [vmem:[%s1225 + $0x8] sm:$0xff]
                  %1230 = vst [vmem:[%s1226 + $0x8] sm:$0xff] %v1229
                  %v1231 = vld [vmem:[%s1225 + $0x10] sm:$0xff]
                  %1232 = vst [vmem:[%s1226 + $0x10] sm:$0xff] %v1231
                  %v1233 = vld [vmem:[%s1225 + $0x18] sm:$0xff]
                  %1234 = vst [vmem:[%s1226 + $0x18] sm:$0xff] %v1233
                  %v1235 = vld [vmem:[%s1225 + $0x20] sm:$0xff]
                  %1236 = vst [vmem:[%s1226 + $0x20] sm:$0xff] %v1235
                  %v1237 = vld [vmem:[%s1225 + $0x28] sm:$0xff]
                  %1238 = vst [vmem:[%s1226 + $0x28] sm:$0xff] %v1237
                  %v1239 = vld [vmem:[%s1225 + $0x30] sm:$0xff]
                  %1240 = vst [vmem:[%s1226 + $0x30] sm:$0xff] %v1239
                  %v1241 = vld [vmem:[%s1225 + $0x38] sm:$0xff]
                  %1242 = vst [vmem:[%s1226 + $0x38] sm:$0xff] %v1241
                  %v1243 = vld [vmem:[%s1225 + $0x40] sm:$0xff]
                  %1244 = vst [vmem:[%s1226 + $0x40] sm:$0xff] %v1243
                  %v1245 = vld [vmem:[%s1225 + $0x48] sm:$0xff]
                  %1246 = vst [vmem:[%s1226 + $0x48] sm:$0xff] %v1245
                  %v1247 = vld [vmem:[%s1225 + $0x50] sm:$0xff]
                  %1248 = vst [vmem:[%s1226 + $0x50] sm:$0xff] %v1247
                  %v1249 = vld [vmem:[%s1225 + $0x58] sm:$0xff]
                  %1250 = vst [vmem:[%s1226 + $0x58] sm:$0xff] %v1249
                  %v1251 = vld [vmem:[%s1225 + $0x60] sm:$0xff]
                  %1252 = vst [vmem:[%s1226 + $0x60] sm:$0xff] %v1251
                  %v1253 = vld [vmem:[%s1225 + $0x68] sm:$0xff]
                  %1254 = vst [vmem:[%s1226 + $0x68] sm:$0xff] %v1253
                  %v1255 = vld [vmem:[%s1225 + $0x70] sm:$0xff]
                  %1256 = vst [vmem:[%s1226 + $0x70] sm:$0xff] %v1255
                  %v1257 = vld [vmem:[%s1225 + $0x78] sm:$0xff]
                  %1258 = vst [vmem:[%s1226 + $0x78] sm:$0xff] %v1257
                  %v1259 = vld [vmem:[%s1225 + $0x80] sm:$0xff]
                  %1260 = vst [vmem:[%s1226 + $0x80] sm:$0xff] %v1259
                  %v1261 = vld [vmem:[%s1225 + $0x88] sm:$0xff]
                  %1262 = vst [vmem:[%s1226 + $0x88] sm:$0xff] %v1261
                  %v1263 = vld [vmem:[%s1225 + $0x90] sm:$0xff]
                  %1264 = vst [vmem:[%s1226 + $0x90] sm:$0xff] %v1263
                  %v1265 = vld [vmem:[%s1225 + $0x98] sm:$0xff]
                  %1266 = vst [vmem:[%s1226 + $0x98] sm:$0xff] %v1265
                  %v1267 = vld [vmem:[%s1225 + $0xa0] sm:$0xff]
                  %1268 = vst [vmem:[%s1226 + $0xa0] sm:$0xff] %v1267
                  %v1269 = vld [vmem:[%s1225 + $0xa8] sm:$0xff]
                  %1270 = vst [vmem:[%s1226 + $0xa8] sm:$0xff] %v1269
                  %v1271 = vld [vmem:[%s1225 + $0xb0] sm:$0xff]
                  %1272 = vst [vmem:[%s1226 + $0xb0] sm:$0xff] %v1271
                  %v1273 = vld [vmem:[%s1225 + $0xb8] sm:$0xff]
                  %1274 = vst [vmem:[%s1226 + $0xb8] sm:$0xff] %v1273
                  %v1275 = vld [vmem:[%s1225 + $0xc0] sm:$0xff]
                  %1276 = vst [vmem:[%s1226 + $0xc0] sm:$0xff] %v1275
                  %v1277 = vld [vmem:[%s1225 + $0xc8] sm:$0xff]
                  %1278 = vst [vmem:[%s1226 + $0xc8] sm:$0xff] %v1277
                  %v1279 = vld [vmem:[%s1225 + $0xd0] sm:$0xff]
                  %1280 = vst [vmem:[%s1226 + $0xd0] sm:$0xff] %v1279
                  %v1281 = vld [vmem:[%s1225 + $0xd8] sm:$0xff]
                  %1282 = vst [vmem:[%s1226 + $0xd8] sm:$0xff] %v1281
                  %v1283 = vld [vmem:[%s1225 + $0xe0] sm:$0xff]
                  %1284 = vst [vmem:[%s1226 + $0xe0] sm:$0xff] %v1283
                  %v1285 = vld [vmem:[%s1225 + $0xe8] sm:$0xff]
                  %1286 = vst [vmem:[%s1226 + $0xe8] sm:$0xff] %v1285
                  %v1287 = vld [vmem:[%s1225 + $0xf0] sm:$0xff]
                  %1288 = vst [vmem:[%s1226 + $0xf0] sm:$0xff] %v1287
                  %v1289 = vld [vmem:[%s1225 + $0xf8] sm:$0xff]
                  %1290 = vst [vmem:[%s1226 + $0xf8] sm:$0xff] %v1289
                  %v1291 = vld [vmem:[%s1225 + $0x10] sm:$0xff]
                  %1292 = vst [vmem:[%s1226 + $0x14] sm:$0xff] %v1291
                  %v1293 = vld [vmem:[%s1225 + $0x18] sm:$0xff]
                  %1294 = vst [vmem:[%s1226 + $0x1c] sm:$0xff] %v1293
                  %v1295 = vld [vmem:[%s1225 + $0x20] sm:$0xff]
                  %1296 = vst [vmem:[%s1226 + $0x24] sm:$0xff] %v1295
                  %v1297 = vld [vmem:[%s1225 + $0x28] sm:$0xff]
                  %1298 = vst [vmem:[%s1226 + $0x2c] sm:$0xff] %v1297
                  %v1299 = vld [vmem:[%s1225 + $0x30] sm:$0xff]
                  %1300 = vst [vmem:[%s1226 + $0x34] sm:$0xff] %v1299
                  %v1301 = vld [vmem:[%s1225 + $0x38] sm:$0xff]
                  %1302 = vst [vmem:[%s1226 + $0x3c] sm:$0xff] %v1301
                  %v1303 = vld [vmem:[%s1225 + $0x40] sm:$0xff]
                  %1304 = vst [vmem:[%s1226 + $0x44] sm:$0xff] %v1303
                  %v1305 = vld [vmem:[%s1225 + $0x48] sm:$0xff]
                  %1306 = vst [vmem:[%s1226 + $0x4c] sm:$0xff] %v1305
                  %v1307 = vld [vmem:[%s1225 + $0x50] sm:$0xff]
                  %1308 = vst [vmem:[%s1226 + $0x54] sm:$0xff] %v1307
                  %v1309 = vld [vmem:[%s1225 + $0x58] sm:$0xff]
                  %1310 = vst [vmem:[%s1226 + $0x5c] sm:$0xff] %v1309
                  %v1311 = vld [vmem:[%s1225 + $0x60] sm:$0xff]
                  %1312 = vst [vmem:[%s1226 + $0x64] sm:$0xff] %v1311
                  %v1313 = vld [vmem:[%s1225 + $0x68] sm:$0xff]
                  %1314 = vst [vmem:[%s1226 + $0x6c] sm:$0xff] %v1313
                  %v1315 = vld [vmem:[%s1225 + $0x70] sm:$0xff]
                  %1316 = vst [vmem:[%s1226 + $0x74] sm:$0xff] %v1315
                  %v1317 = vld [vmem:[%s1225 + $0x78] sm:$0xff]
                  %1318 = vst [vmem:[%s1226 + $0x7c] sm:$0xff] %v1317
                  %v1319 = vld [vmem:[%s1225 + $0x80] sm:$0xff]
                  %1320 = vst [vmem:[%s1226 + $0x84] sm:$0xff] %v1319
                  %v1321 = vld [vmem:[%s1225 + $0x88] sm:$0xff]
                  %1322 = vst [vmem:[%s1226 + $0x8c] sm:$0xff] %v1321
                  %v1323 = vld [vmem:[%s1225 + $0x90] sm:$0xff]
                  %1324 = vst [vmem:[%s1226 + $0x94] sm:$0xff] %v1323
                  %v1325 = vld [vmem:[%s1225 + $0x98] sm:$0xff]
                  %1326 = vst [vmem:[%s1226 + $0x9c] sm:$0xff] %v1325
                  %v1327 = vld [vmem:[%s1225 + $0xa0] sm:$0xff]
                  %1328 = vst [vmem:[%s1226 + $0xa4] sm:$0xff] %v1327
                  %v1329 = vld [vmem:[%s1225 + $0xa8] sm:$0xff]
                  %1330 = vst [vmem:[%s1226 + $0xac] sm:$0xff] %v1329
                  %v1331 = vld [vmem:[%s1225 + $0xb0] sm:$0xff]
                  %1332 = vst [vmem:[%s1226 + $0xb4] sm:$0xff] %v1331
                  %v1333 = vld [vmem:[%s1225 + $0xb8] sm:$0xff]
                  %1334 = vst [vmem:[%s1226 + $0xbc] sm:$0xff] %v1333
                  %v1335 = vld [vmem:[%s1225 + $0xc0] sm:$0xff]
                  %1336 = vst [vmem:[%s1226 + $0xc4] sm:$0xff] %v1335
                  %v1337 = vld [vmem:[%s1225 + $0xc8] sm:$0xff]
                  %1338 = vst [vmem:[%s1226 + $0xcc] sm:$0xff] %v1337
                  %v1339 = vld [vmem:[%s1225 + $0xd0] sm:$0xff]
                  %1340 = vst [vmem:[%s1226 + $0xd4] sm:$0xff] %v1339
                  %v1341 = vld [vmem:[%s1225 + $0xd8] sm:$0xff]
                  %1342 = vst [vmem:[%s1226 + $0xdc] sm:$0xff] %v1341
                  %v1343 = vld [vmem:[%s1225 + $0xe0] sm:$0xff]
                  %1344 = vst [vmem:[%s1226 + $0xe4] sm:$0xff] %v1343
                  %v1345 = vld [vmem:[%s1225 + $0xe8] sm:$0xff]
                  %1346 = vst [vmem:[%s1226 + $0xec] sm:$0xff] %v1345
                  %v1347 = vld [vmem:[%s1225 + $0xf0] sm:$0xff]
                  %1348 = vst [vmem:[%s1226 + $0xf4] sm:$0xff] %v1347
                  %v1349 = vld [vmem:[%s1225 + $0xf8] sm:$0xff]
                  %1350 = vst [vmem:[%s1226 + $0xfc] sm:$0xff] %v1349
                  %v1351 = vld [vmem:[%s1225 + $0x100] sm:$0xff]
                  %1352 = vst [vmem:[%s1226 + $0x104] sm:$0xff] %v1351
                  %v1353 = vld [vmem:[%s1225 + $0x108] sm:$0xff]
                  %1354 = vst [vmem:[%s1226 + $0x10c] sm:$0xff] %v1353
                  %s1355 = sadd.s32 1, %s1224
                  %p1356 = scmp.ge.s32.totalorder %s1355, %s1215
                  %s1357 = scalar_select %p1356, 0, %s1355
                  %s1358 = smul.u32 %s1357, 256
                  %s1359 = smul.u32 %s1357, 256
                  %s1360 = scalar_lea.vmem %s1172, %s1358 [#allocation3]
                  %s1361 = scalar_lea.vmem %s1183, %s1359
                $region130: #{critic_forward.5} parent=124 // loop_footer
                  %s1221 = sadd.s32 %s1219, 1
                $region131: #{critic_forward.5} parent=124 // loop_footer_branch
                  %1218 = sbr.rel target = $region127
                $region132: #{critic_forward.5} parent=124 // loop_exit
                  _
                %s1362 = sshrl.u32 %s1214, 5
                %s1363 = sand.u32 %s1214, 31
                %s1364 = smul.u32 %s1362, 32
                %s1365 = smul.u32 128, %s1364
                %s1366 = sshra.s32 %s1365, 4
                %s1367 = scalar_lea.vmem %s1172, %s1366 [#allocation3]
                %s1368 = smul.u32 128, %s1364
                %s1369 = sshra.s32 %s1368, 4
                %s1370 = scalar_lea.vmem %s1183, %s1369
                // While loop
                $region133: #{critic_forward.5} parent=124 // loop_pre_header
                  _
                $region134: #{critic_forward.5} parent=124 // loop_header
                  %s1374 = sphi 0, %s1376
                  %p1375 = scmp.ge.s32.totalorder %s1374, %s1363
                  %s1379 = sphi 0, %s1388
                  %s1380 = sphi %s1367, %s1391
                  %s1381 = sphi %s1370, %s1392
                $region135: #{critic_forward.5} parent=124 // loop_header_branch
                  %1378 = sbr.rel (%p1375) target = $region139
                $region136: #{critic_forward.5} parent=124 // loop_body
                  %v1382 = vld [vmem:[%s1380] sm:$0xff]
                  %1383 = vst [vmem:[%s1381] sm:$0xff] %v1382
                  %v1384 = vld [vmem:[%s1380 + $0x10] sm:$0xff]
                  %1385 = vst [vmem:[%s1381 + $0x14] sm:$0xff] %v1384
                  %s1386 = sadd.s32 1, %s1379
                  %p1387 = scmp.ge.s32.totalorder %s1386, %s1363
                  %s1388 = scalar_select %p1387, 0, %s1386
                  %s1389 = smul.u32 %s1388, 8
                  %s1390 = smul.u32 %s1388, 8
                  %s1391 = scalar_lea.vmem %s1367, %s1389 [#allocation3]
                  %s1392 = scalar_lea.vmem %s1370, %s1390
                $region137: #{critic_forward.5} parent=124 // loop_footer
                  %s1376 = sadd.s32 %s1374, 1
                $region138: #{critic_forward.5} parent=124 // loop_footer_branch
                  %1373 = sbr.rel target = $region134
                $region139: #{critic_forward.5} parent=124 // loop_exit
                  _
              $region125: #{critic_forward.5} parent=109 // pred_fallthru
                _
              %p1393 = pneg %p1210
              // Predicated region
              $region140: #{critic_forward.5} parent=109 // pred_check
                _
              $region141: #{critic_forward.5} parent=109 // pred_check_branch
                %1395 = sbr.rel (%p1210) target = $region143
              $region142: #{critic_forward.5} parent=109 // pred_region
                %s1396 = sand.u32 %s1184, 7
                %s1397 = ssub.s32 %s1184, %s1396
                %s1398 = scalar_lea.vmem %s1172, %s1397 [#allocation3]
                %s1399 = ssub.s32 %s1184, %s1396
                %s1400 = scalar_lea.vmem %s1183, %s1399
                %s1401 = sshrl.u32 %s1184, 3
                %s1402 = sshrl.u32 %s1401, 5
                // While loop
                $region144: #{critic_forward.5} parent=142 // loop_pre_header
                  _
                $region145: #{critic_forward.5} parent=142 // loop_header
                  %s1406 = sphi 0, %s1408
                  %p1407 = scmp.ge.s32.totalorder %s1406, %s1402
                  %s1411 = sphi 0, %s1544
                  %s1412 = sphi %s1172, %s1547
                  %s1413 = sphi %s1183, %s1548
                $region146: #{critic_forward.5} parent=142 // loop_header_branch
                  %1410 = sbr.rel (%p1407) target = $region150
                $region147: #{critic_forward.5} parent=142 // loop_body
                  %v1414 = vld [vmem:[%s1412] sm:$0xff]
                  %1415 = vst [vmem:[%s1413] sm:$0xff] %v1414
                  %v1416 = vld [vmem:[%s1412 + $0x8] sm:$0xff]
                  %1417 = vst [vmem:[%s1413 + $0x8] sm:$0xff] %v1416
                  %v1418 = vld [vmem:[%s1412 + $0x10] sm:$0xff]
                  %1419 = vst [vmem:[%s1413 + $0x10] sm:$0xff] %v1418
                  %v1420 = vld [vmem:[%s1412 + $0x18] sm:$0xff]
                  %1421 = vst [vmem:[%s1413 + $0x18] sm:$0xff] %v1420
                  %v1422 = vld [vmem:[%s1412 + $0x20] sm:$0xff]
                  %1423 = vst [vmem:[%s1413 + $0x20] sm:$0xff] %v1422
                  %v1424 = vld [vmem:[%s1412 + $0x28] sm:$0xff]
                  %1425 = vst [vmem:[%s1413 + $0x28] sm:$0xff] %v1424
                  %v1426 = vld [vmem:[%s1412 + $0x30] sm:$0xff]
                  %1427 = vst [vmem:[%s1413 + $0x30] sm:$0xff] %v1426
                  %v1428 = vld [vmem:[%s1412 + $0x38] sm:$0xff]
                  %1429 = vst [vmem:[%s1413 + $0x38] sm:$0xff] %v1428
                  %v1430 = vld [vmem:[%s1412 + $0x40] sm:$0xff]
                  %1431 = vst [vmem:[%s1413 + $0x40] sm:$0xff] %v1430
                  %v1432 = vld [vmem:[%s1412 + $0x48] sm:$0xff]
                  %1433 = vst [vmem:[%s1413 + $0x48] sm:$0xff] %v1432
                  %v1434 = vld [vmem:[%s1412 + $0x50] sm:$0xff]
                  %1435 = vst [vmem:[%s1413 + $0x50] sm:$0xff] %v1434
                  %v1436 = vld [vmem:[%s1412 + $0x58] sm:$0xff]
                  %1437 = vst [vmem:[%s1413 + $0x58] sm:$0xff] %v1436
                  %v1438 = vld [vmem:[%s1412 + $0x60] sm:$0xff]
                  %1439 = vst [vmem:[%s1413 + $0x60] sm:$0xff] %v1438
                  %v1440 = vld [vmem:[%s1412 + $0x68] sm:$0xff]
                  %1441 = vst [vmem:[%s1413 + $0x68] sm:$0xff] %v1440
                  %v1442 = vld [vmem:[%s1412 + $0x70] sm:$0xff]
                  %1443 = vst [vmem:[%s1413 + $0x70] sm:$0xff] %v1442
                  %v1444 = vld [vmem:[%s1412 + $0x78] sm:$0xff]
                  %1445 = vst [vmem:[%s1413 + $0x78] sm:$0xff] %v1444
                  %v1446 = vld [vmem:[%s1412 + $0x80] sm:$0xff]
                  %1447 = vst [vmem:[%s1413 + $0x80] sm:$0xff] %v1446
                  %v1448 = vld [vmem:[%s1412 + $0x88] sm:$0xff]
                  %1449 = vst [vmem:[%s1413 + $0x88] sm:$0xff] %v1448
                  %v1450 = vld [vmem:[%s1412 + $0x90] sm:$0xff]
                  %1451 = vst [vmem:[%s1413 + $0x90] sm:$0xff] %v1450
                  %v1452 = vld [vmem:[%s1412 + $0x98] sm:$0xff]
                  %1453 = vst [vmem:[%s1413 + $0x98] sm:$0xff] %v1452
                  %v1454 = vld [vmem:[%s1412 + $0xa0] sm:$0xff]
                  %1455 = vst [vmem:[%s1413 + $0xa0] sm:$0xff] %v1454
                  %v1456 = vld [vmem:[%s1412 + $0xa8] sm:$0xff]
                  %1457 = vst [vmem:[%s1413 + $0xa8] sm:$0xff] %v1456
                  %v1458 = vld [vmem:[%s1412 + $0xb0] sm:$0xff]
                  %1459 = vst [vmem:[%s1413 + $0xb0] sm:$0xff] %v1458
                  %v1460 = vld [vmem:[%s1412 + $0xb8] sm:$0xff]
                  %1461 = vst [vmem:[%s1413 + $0xb8] sm:$0xff] %v1460
                  %v1462 = vld [vmem:[%s1412 + $0xc0] sm:$0xff]
                  %1463 = vst [vmem:[%s1413 + $0xc0] sm:$0xff] %v1462
                  %v1464 = vld [vmem:[%s1412 + $0xc8] sm:$0xff]
                  %1465 = vst [vmem:[%s1413 + $0xc8] sm:$0xff] %v1464
                  %v1466 = vld [vmem:[%s1412 + $0xd0] sm:$0xff]
                  %1467 = vst [vmem:[%s1413 + $0xd0] sm:$0xff] %v1466
                  %v1468 = vld [vmem:[%s1412 + $0xd8] sm:$0xff]
                  %1469 = vst [vmem:[%s1413 + $0xd8] sm:$0xff] %v1468
                  %v1470 = vld [vmem:[%s1412 + $0xe0] sm:$0xff]
                  %1471 = vst [vmem:[%s1413 + $0xe0] sm:$0xff] %v1470
                  %v1472 = vld [vmem:[%s1412 + $0xe8] sm:$0xff]
                  %1473 = vst [vmem:[%s1413 + $0xe8] sm:$0xff] %v1472
                  %v1474 = vld [vmem:[%s1412 + $0xf0] sm:$0xff]
                  %1475 = vst [vmem:[%s1413 + $0xf0] sm:$0xff] %v1474
                  %v1476 = vld [vmem:[%s1412 + $0xf8] sm:$0xff]
                  %1477 = vst [vmem:[%s1413 + $0xf8] sm:$0xff] %v1476
                  %v1478 = vld [vmem:[%s1412 + $0x10] sm:$0xff]
                  %1479 = vst [vmem:[%s1413 + $0x14] sm:$0xff] %v1478
                  %v1480 = vld [vmem:[%s1412 + $0x18] sm:$0xff]
                  %1481 = vst [vmem:[%s1413 + $0x1c] sm:$0xff] %v1480
                  %v1482 = vld [vmem:[%s1412 + $0x20] sm:$0xff]
                  %1483 = vst [vmem:[%s1413 + $0x24] sm:$0xff] %v1482
                  %v1484 = vld [vmem:[%s1412 + $0x28] sm:$0xff]
                  %1485 = vst [vmem:[%s1413 + $0x2c] sm:$0xff] %v1484
                  %v1486 = vld [vmem:[%s1412 + $0x30] sm:$0xff]
                  %1487 = vst [vmem:[%s1413 + $0x34] sm:$0xff] %v1486
                  %v1488 = vld [vmem:[%s1412 + $0x38] sm:$0xff]
                  %1489 = vst [vmem:[%s1413 + $0x3c] sm:$0xff] %v1488
                  %v1490 = vld [vmem:[%s1412 + $0x40] sm:$0xff]
                  %1491 = vst [vmem:[%s1413 + $0x44] sm:$0xff] %v1490
                  %v1492 = vld [vmem:[%s1412 + $0x48] sm:$0xff]
                  %1493 = vst [vmem:[%s1413 + $0x4c] sm:$0xff] %v1492
                  %v1494 = vld [vmem:[%s1412 + $0x50] sm:$0xff]
                  %1495 = vst [vmem:[%s1413 + $0x54] sm:$0xff] %v1494
                  %v1496 = vld [vmem:[%s1412 + $0x58] sm:$0xff]
                  %1497 = vst [vmem:[%s1413 + $0x5c] sm:$0xff] %v1496
                  %v1498 = vld [vmem:[%s1412 + $0x60] sm:$0xff]
                  %1499 = vst [vmem:[%s1413 + $0x64] sm:$0xff] %v1498
                  %v1500 = vld [vmem:[%s1412 + $0x68] sm:$0xff]
                  %1501 = vst [vmem:[%s1413 + $0x6c] sm:$0xff] %v1500
                  %v1502 = vld [vmem:[%s1412 + $0x70] sm:$0xff]
                  %1503 = vst [vmem:[%s1413 + $0x74] sm:$0xff] %v1502
                  %v1504 = vld [vmem:[%s1412 + $0x78] sm:$0xff]
                  %1505 = vst [vmem:[%s1413 + $0x7c] sm:$0xff] %v1504
                  %v1506 = vld [vmem:[%s1412 + $0x80] sm:$0xff]
                  %1507 = vst [vmem:[%s1413 + $0x84] sm:$0xff] %v1506
                  %v1508 = vld [vmem:[%s1412 + $0x88] sm:$0xff]
                  %1509 = vst [vmem:[%s1413 + $0x8c] sm:$0xff] %v1508
                  %v1510 = vld [vmem:[%s1412 + $0x90] sm:$0xff]
                  %1511 = vst [vmem:[%s1413 + $0x94] sm:$0xff] %v1510
                  %v1512 = vld [vmem:[%s1412 + $0x98] sm:$0xff]
                  %1513 = vst [vmem:[%s1413 + $0x9c] sm:$0xff] %v1512
                  %v1514 = vld [vmem:[%s1412 + $0xa0] sm:$0xff]
                  %1515 = vst [vmem:[%s1413 + $0xa4] sm:$0xff] %v1514
                  %v1516 = vld [vmem:[%s1412 + $0xa8] sm:$0xff]
                  %1517 = vst [vmem:[%s1413 + $0xac] sm:$0xff] %v1516
                  %v1518 = vld [vmem:[%s1412 + $0xb0] sm:$0xff]
                  %1519 = vst [vmem:[%s1413 + $0xb4] sm:$0xff] %v1518
                  %v1520 = vld [vmem:[%s1412 + $0xb8] sm:$0xff]
                  %1521 = vst [vmem:[%s1413 + $0xbc] sm:$0xff] %v1520
                  %v1522 = vld [vmem:[%s1412 + $0xc0] sm:$0xff]
                  %1523 = vst [vmem:[%s1413 + $0xc4] sm:$0xff] %v1522
                  %v1524 = vld [vmem:[%s1412 + $0xc8] sm:$0xff]
                  %1525 = vst [vmem:[%s1413 + $0xcc] sm:$0xff] %v1524
                  %v1526 = vld [vmem:[%s1412 + $0xd0] sm:$0xff]
                  %1527 = vst [vmem:[%s1413 + $0xd4] sm:$0xff] %v1526
                  %v1528 = vld [vmem:[%s1412 + $0xd8] sm:$0xff]
                  %1529 = vst [vmem:[%s1413 + $0xdc] sm:$0xff] %v1528
                  %v1530 = vld [vmem:[%s1412 + $0xe0] sm:$0xff]
                  %1531 = vst [vmem:[%s1413 + $0xe4] sm:$0xff] %v1530
                  %v1532 = vld [vmem:[%s1412 + $0xe8] sm:$0xff]
                  %1533 = vst [vmem:[%s1413 + $0xec] sm:$0xff] %v1532
                  %v1534 = vld [vmem:[%s1412 + $0xf0] sm:$0xff]
                  %1535 = vst [vmem:[%s1413 + $0xf4] sm:$0xff] %v1534
                  %v1536 = vld [vmem:[%s1412 + $0xf8] sm:$0xff]
                  %1537 = vst [vmem:[%s1413 + $0xfc] sm:$0xff] %v1536
                  %v1538 = vld [vmem:[%s1412 + $0x100] sm:$0xff]
                  %1539 = vst [vmem:[%s1413 + $0x104] sm:$0xff] %v1538
                  %v1540 = vld [vmem:[%s1412 + $0x108] sm:$0xff]
                  %1541 = vst [vmem:[%s1413 + $0x10c] sm:$0xff] %v1540
                  %s1542 = sadd.s32 1, %s1411
                  %p1543 = scmp.ge.s32.totalorder %s1542, %s1402
                  %s1544 = scalar_select %p1543, 0, %s1542
                  %s1545 = smul.u32 %s1544, 256
                  %s1546 = smul.u32 %s1544, 256
                  %s1547 = scalar_lea.vmem %s1172, %s1545 [#allocation3]
                  %s1548 = scalar_lea.vmem %s1183, %s1546
                $region148: #{critic_forward.5} parent=142 // loop_footer
                  %s1408 = sadd.s32 %s1406, 1
                $region149: #{critic_forward.5} parent=142 // loop_footer_branch
                  %1405 = sbr.rel target = $region145
                $region150: #{critic_forward.5} parent=142 // loop_exit
                  _
                %s1549 = sshrl.u32 %s1401, 5
                %s1550 = sand.u32 %s1401, 31
                %s1551 = smul.u32 %s1549, 32
                %s1552 = smul.u32 128, %s1551
                %s1553 = sshra.s32 %s1552, 4
                %s1554 = scalar_lea.vmem %s1172, %s1553 [#allocation3]
                %s1555 = smul.u32 128, %s1551
                %s1556 = sshra.s32 %s1555, 4
                %s1557 = scalar_lea.vmem %s1183, %s1556
                // While loop
                $region151: #{critic_forward.5} parent=142 // loop_pre_header
                  _
                $region152: #{critic_forward.5} parent=142 // loop_header
                  %s1561 = sphi 0, %s1563
                  %p1562 = scmp.ge.s32.totalorder %s1561, %s1550
                  %s1566 = sphi 0, %s1575
                  %s1567 = sphi %s1554, %s1578
                  %s1568 = sphi %s1557, %s1579
                $region153: #{critic_forward.5} parent=142 // loop_header_branch
                  %1565 = sbr.rel (%p1562) target = $region157
                $region154: #{critic_forward.5} parent=142 // loop_body
                  %v1569 = vld [vmem:[%s1567] sm:$0xff]
                  %1570 = vst [vmem:[%s1568] sm:$0xff] %v1569
                  %v1571 = vld [vmem:[%s1567 + $0x10] sm:$0xff]
                  %1572 = vst [vmem:[%s1568 + $0x14] sm:$0xff] %v1571
                  %s1573 = sadd.s32 1, %s1566
                  %p1574 = scmp.ge.s32.totalorder %s1573, %s1550
                  %s1575 = scalar_select %p1574, 0, %s1573
                  %s1576 = smul.u32 %s1575, 8
                  %s1577 = smul.u32 %s1575, 8
                  %s1578 = scalar_lea.vmem %s1554, %s1576 [#allocation3]
                  %s1579 = scalar_lea.vmem %s1557, %s1577
                $region155: #{critic_forward.5} parent=142 // loop_footer
                  %s1563 = sadd.s32 %s1561, 1
                $region156: #{critic_forward.5} parent=142 // loop_footer_branch
                  %1560 = sbr.rel target = $region152
                $region157: #{critic_forward.5} parent=142 // loop_exit
                  _
                %s1580 = sshll.u32 1, %s1396
                %s1581 = ssub.s32 %s1580, 1
                loop: start=0, step=1, limit=1
                $region158: #{critic_forward.5} parent=142 // loop_pre_header
                  _
                $region159: #{critic_forward.5} parent=142 // loop_header
                  %s1583 = sphi 0, %s1587
                  %p1584 = scmp.ge.s32.totalorder %s1583, 1
                  %s1588 = sphi %s1398, %s1398
                  %s1589 = sphi %s1400, %s1400
                $region160: #{critic_forward.5} parent=142 // loop_header_branch
                  %1586 = sbr.rel (%p1584) target = $region164
                $region161: #{critic_forward.5} parent=142 // loop_body
                  %v1590 = vld [vmem:[%s1588] sm:%s1581]
                  %1591 = vst [vmem:[%s1589] sm:%s1581] %v1590
                  %v1592 = vld [vmem:[%s1588 + $0x10] sm:%s1581]
                  %1593 = vst [vmem:[%s1589 + $0x14] sm:%s1581] %v1592
                $region162: #{critic_forward.5} parent=142 // loop_footer
                  %s1587 = sadd.s32 1, %s1583
                $region163: #{critic_forward.5} parent=142 // loop_footer_branch
                  %1582 = sbr.rel target = $region159
                $region164: #{critic_forward.5} parent=142 // loop_exit
                  _
              $region143: #{critic_forward.5} parent=109 // pred_fallthru
                _
            $region110: #{critic_forward.5} parent=105 // pred_fallthru
              _
            // Predicated region
            $region111: #{critic_forward.5} parent=105 // pred_check
              %p1192 = pneg %p1188
            $region112: #{critic_forward.5} parent=105 // pred_check_branch
              %1194 = sbr.rel (%p1192) target = $region114
            $region113: #{critic_forward.5} parent=105 // pred_region
              %s1195 = sshll.u32 1, %s1184
              %s1196 = ssub.s32 %s1195, 1
              loop: start=0, step=1, limit=1
              $region115: #{critic_forward.5} parent=113 // loop_pre_header
                _
              $region116: #{critic_forward.5} parent=113 // loop_header
                %s1198 = sphi 0, %s1202
                %p1199 = scmp.ge.s32.totalorder %s1198, 1
                %s1203 = sphi %s1172, %s1172
                %s1204 = sphi %s1183, %s1183
              $region117: #{critic_forward.5} parent=113 // loop_header_branch
                %1201 = sbr.rel (%p1199) target = $region121
              $region118: #{critic_forward.5} parent=113 // loop_body
                %v1205 = vld [vmem:[%s1203] sm:%s1196]
                %1206 = vst [vmem:[%s1204] sm:%s1196] %v1205
                %v1207 = vld [vmem:[%s1203 + $0x10] sm:%s1196]
                %1208 = vst [vmem:[%s1204 + $0x14] sm:%s1196] %v1207
              $region119: #{critic_forward.5} parent=113 // loop_footer
                %s1202 = sadd.s32 1, %s1198
              $region120: #{critic_forward.5} parent=113 // loop_footer_branch
                %1197 = sbr.rel target = $region116
              $region121: #{critic_forward.5} parent=113 // loop_exit
                _
            $region114: #{critic_forward.5} parent=105 // pred_fallthru
              _
          $region106: #{critic_forward.5} parent=101 // pred_fallthru
            _
          %1594 = vnop
        $region102: #{critic_forward.5} parent=93 // pred_fallthru
          _
      $region94: #{critic_forward.5} parent=5 // pred_fallthru
        _
      %p1595 = scmp.le.s32.totalorder 2, %s9
      // Predicated region
      $region165: #{critic_forward.5} parent=5 // pred_check
        %p1596 = pneg %p1595
      $region166: #{critic_forward.5} parent=5 // pred_check_branch
        %1598 = sbr.rel (%p1596) target = $region168
      $region167: #{critic_forward.5} parent=5 // pred_region
        %s1599 = ssub.s32 %s9, 2
        // Predicated region
        $region169: #{critic_forward.5} parent=167 // pred_check
          %p1600 = pneg %p106
        $region170: #{critic_forward.5} parent=167 // pred_check_branch
          %1602 = sbr.rel (%p1600) target = $region172
        $region171: #{critic_forward.5} parent=167 // pred_region
          %s1603 = sand.u32 %s91, 1
          %s1604 = sand.u32 %s91, 1
          %s1605 = smul.addr %s1604, 32
          %s1606 = scalar_lea.vmem [#allocation3], %s1605
        $region172: #{critic_forward.5} parent=167 // pred_fallthru
          _
      $region168: #{critic_forward.5} parent=5 // pred_fallthru
        _
    $region6: #{critic_forward.5} parent=1 // loop_footer
      %s13 = sadd.s32 1, %s9
    $region7: #{critic_forward.5} parent=1 // loop_footer_branch
      %8 = sbr.rel target = $region3
    $region8: #{critic_forward.5} parent=1 // loop_exit
      _

// kernel: critic_forward.6
$region0: #{critic_forward.6}
  #allocation0 [shape = 'u32[]', space=smem, size = 0x4, offset = 0x4, fixed_abs, tag = 'smem constant byte address 0x4 - core index']
  #allocation1 [shape = 'u32[144,128]{1,0:T(1,128)}', space=vmem, size = 0x12000, scoped, tag = 'internal scratch']
  %s0 = inlined_call_operand.vmem [shape: bf16[24,108], index: 0, kind: input, shape index: {}]
  %s1 = inlined_call_operand.vmem [shape: f32[24,1], index: 1, kind: input, shape index: {}]
  %s2 = inlined_call_operand.vmem [shape: bf16[108,128], index: 2, kind: input, shape index: {}]
  %s3 = inlined_call_operand.vmem [shape: bf16[24,128], index: 3, kind: output, shape index: {}]
  %s4 = sld [smem:[#allocation0]]
  $region22: #{critic_forward.6} parent=0
    _
  %s6 = ssub.s32 1, %s4
  %s7 = scalar_select 0, %s6, %s4
  // Predicated region
  $region2: #{critic_forward.6} parent=0 // pred_check
    _
  $region3: #{critic_forward.6} parent=0 // pred_check_branch
    %9 = sbr.rel (0) target = $region5
  $region4: #{critic_forward.6} parent=0 // pred_region
    _
  $region5: #{critic_forward.6} parent=0 // pred_fallthru
    _
  // Predicated region
  $region6: #{critic_forward.6} parent=0 // pred_check
    _
  $region7: #{critic_forward.6} parent=0 // pred_check_branch
    %11 = sbr.rel (0) target = $region9
  $region8: #{critic_forward.6} parent=0 // pred_region
    _
  $region9: #{critic_forward.6} parent=0 // pred_fallthru
    _
  // Predicated region
  $region10: #{critic_forward.6} parent=0 // pred_check
    _
  $region11: #{critic_forward.6} parent=0 // pred_check_branch
    %13 = sbr.rel (0) target = $region13
  $region12: #{critic_forward.6} parent=0 // pred_region
    _
  $region13: #{critic_forward.6} parent=0 // pred_fallthru
    _
  %v15 = vld [vmem:[%s0] sm:$0xf]
  %v16 = vld [vmem:[%s0 + $0x4] sm:$0xf]
  %v17 = vld [vmem:[%s0 + $0x8] sm:$0xf]
  %v18 = vld [vmem:[%s2] sm:$0xf]
  %v19 = vld [vmem:[%s2 + $0x4] sm:$0xf]
  %v20 = vld [vmem:[%s2 + $0x8] sm:$0xf]
  %v21 = vld [vmem:[%s2 + $0xc] sm:$0xf]
  %v22 = vld [vmem:[%s2 + $0x10] sm:$0xf]
  %v23 = vld [vmem:[%s2 + $0x14] sm:$0xf]
  %v24 = vld [vmem:[%s2 + $0x18] sm:$0xf]
  %v25 = vld [vmem:[%s2 + $0x1c] sm:$0xf]
  %v26 = vld [vmem:[%s2 + $0x20] sm:$0xf]
  %v27 = vld [vmem:[%s2 + $0x24] sm:$0xf]
  %v28 = vld [vmem:[%s2 + $0x28] sm:$0xf]
  %v29 = vld [vmem:[%s2 + $0x2c] sm:$0xf]
  %v30 = vld [vmem:[%s2 + $0x30] sm:$0xf]
  %v31 = vld [vmem:[%s2 + $0x34] sm:$0x3]
  %v32 = vld [vmem:[%s1] sm:$0xff]
  %v33 = vld [vmem:[%s1 + $0x8] sm:$0xff]
  %v34 = vld [vmem:[%s1 + $0x10] sm:$0xff]
  %36 = vset.pattern.permute.xlu0 0
  %37 = vperm.xlu0 %36, %v32
  %v38 = vpop.permute.xlu0 %37
  %41 = vset.pattern.permute.xlu0 0
  %42 = vperm.xlu0 %41, %v33
  %v43 = vpop.permute.xlu0 %42
  %46 = vset.pattern.permute.xlu0 0
  %47 = vperm.xlu0 %46, %v34
  %v48 = vpop.permute.xlu0 %47
  %v53 = vunpack.c.l.b16 %v15
  %v54 = vunpack.c.l.b16 %v16
  %v55 = vunpack.c.l.b16 %v17
  %v56 = vpack.c.b16 %v54, %v53
  %v57 = vpack.c.b16 %v55, %v55
  %v72 = vunpack.c.l.b16 %v18
  %v73 = vunpack.c.l.b16 %v19
  %v74 = vunpack.c.l.b16 %v20
  %v75 = vunpack.c.l.b16 %v21
  %v76 = vunpack.c.l.b16 %v22
  %v77 = vunpack.c.l.b16 %v23
  %v78 = vunpack.c.l.b16 %v24
  %v79 = vunpack.c.l.b16 %v25
  %v80 = vunpack.c.l.b16 %v26
  %v81 = vunpack.c.l.b16 %v27
  %v82 = vunpack.c.l.b16 %v28
  %v83 = vunpack.c.l.b16 %v29
  %v84 = vunpack.c.l.b16 %v30
  %v85 = vunpack.c.l.b16 %v31
  %v86 = vpack.c.b16 %v73, %v72
  %v87 = vpack.c.b16 %v75, %v74
  %v88 = vpack.c.b16 %v77, %v76
  %v89 = vpack.c.b16 %v79, %v78
  %v90 = vpack.c.b16 %v81, %v80
  %v91 = vpack.c.b16 %v83, %v82
  %v92 = vpack.c.b16 %v85, %v84
  %vm99 = vcmask 883712
  %v101 = vsel %vm99, %v56, 0
  %v104 = vsel %vm99, %v57, 0
  %vm106 = vcmask 1045504
  %v108 = vsel %vm106, %v92, 0
  %110 = vmatprep.subr.bf16.mxu0 0
  %111 = vmatpush1.bf16.msra.mxu0 0
  %112 = vmatprep.subr.bf16.mxu0 0
  %113 = vmatpush1.bf16.msra.mxu0 %v108
  %114 = vmatprep.subr.bf16.mxu0 0
  %115 = vmatpush1.bf16.msra.mxu0 %v91
  %116 = vmatprep.subr.bf16.mxu0 0
  %117 = vmatpush1.bf16.msra.mxu0 %v90
  %118 = vmatprep.subr.bf16.mxu0 0
  %119 = vmatpush1.bf16.msra.mxu0 %v89
  %120 = vmatprep.subr.bf16.mxu0 0
  %121 = vmatpush1.bf16.msra.mxu0 %v88
  %122 = vmatprep.subr.bf16.mxu0 0
  %123 = vmatpush1.bf16.msra.mxu0 %v87
  %124 = vmatprep.subr.bf16.mxu0 0
  %125 = vmatpush1.bf16.msra.mxu0 %v86
  %126 = vmatprep.subr.bf16.mxu0 0
  %127 = vmatpush2.bf16.msra.mxu0 0
  %128 = vmatprep.subr.bf16.mxu0 0
  %129 = vmatpush2.bf16.msra.mxu0 0
  %130 = vmatprep.subr.bf16.mxu0 0
  %131 = vmatpush2.bf16.msra.mxu0 0
  %132 = vmatprep.subr.bf16.mxu0 0
  %133 = vmatpush2.bf16.msra.mxu0 0
  %134 = vmatprep.subr.bf16.mxu0 0
  %135 = vmatpush2.bf16.msra.mxu0 0
  %136 = vmatprep.subr.bf16.mxu0 0
  %137 = vmatpush2.bf16.msra.mxu0 0
  %138 = vmatprep.subr.bf16.mxu0 0
  %139 = vmatpush2.bf16.msra.mxu0 0
  %140 = vmatprep.subr.bf16.mxu0 0
  %141 = vmatpush2.bf16.msra.mxu0 0
  %142 = vmatprep.mubr.bf16.mxu0 0
  %143 = vmatmul.mubr.bf16.gmra.mxu0 %v101
  %v144 = vpop.f32.mrf.mxu0
  %v145 = vadd.f32 %v38, %v144
  %v146 = vpop.f32.mrf.mxu0
  %v147 = vpop.f32.mrf.mxu0
  %v148 = vadd.f32 %v43, %v147
  %v149 = vpop.f32.mrf.mxu0
  %150 = vmatprep.mubr.bf16.mxu0 0
  %151 = vmatmul.mubr.bf16.gmra.mxu0 %v104
  %v152 = vpop.f32.mrf.mxu0
  %v153 = vadd.f32 %v48, %v152
  %v154 = vpop.f32.mrf.mxu0
  %v155 = vpop.f32.mrf.mxu0
  %v156 = vpop.f32.mrf.mxu0
  %157 = vdwg.mxu0
  %v158 = vmax.f32 %v145, 0.0
  %v159 = vmax.f32 %v148, 0.0
  %v160 = vmax.f32 %v153, 0.0
  %v161 = vpack.c.bf16 %v159, %v158
  %v162 = vpack.c.bf16 %v160, %v160
  %v165 = vunpack.c.l.b16 %v161
  %v166 = vunpack.c.h.b16 %v161
  %v167 = vunpack.c.l.b16 %v162
  %v168 = vpack.c.b16 %v165, %v165
  %v169 = vpack.c.b16 %v166, %v166
  %v170 = vpack.c.b16 %v167, %v167
  %174 = vst [vmem:[%s3] sm:$0xf] %v168
  %175 = vst [vmem:[%s3 + $0x4] sm:$0xf] %v169
  %176 = vst [vmem:[%s3 + $0x8] sm:$0xf] %v170
  // Predicated region
  $region14: #{critic_forward.6} parent=0 // pred_check
    _
  $region15: #{critic_forward.6} parent=0 // pred_check_branch
    %178 = sbr.rel (0) target = $region17
  $region16: #{critic_forward.6} parent=0 // pred_region
    _
  $region17: #{critic_forward.6} parent=0 // pred_fallthru
    _
  // Predicated region
  $region18: #{critic_forward.6} parent=0 // pred_check
    _
  $region19: #{critic_forward.6} parent=0 // pred_check_branch
    %180 = sbr.rel (0) target = $region21
  $region20: #{critic_forward.6} parent=0 // pred_region
    _
  $region21: #{critic_forward.6} parent=0 // pred_fallthru
    _

// kernel: critic_forward.7
$region0: #{critic_forward.7}
  #allocation0 [shape = 'u32[]', space=smem, size = 0x4, offset = 0x4, fixed_abs, tag = 'smem constant byte address 0x4 - core index']
  #allocation1 [shape = 'u32[144,128]{1,0:T(1,128)}', space=vmem, size = 0x12000, scoped, tag = 'internal scratch']
  #allocation2 [shape = 'f32[1,1]{1,0:T(1,128)S(1)}', space=vmem, size = 0x200, scoped, tag = 'scoped memory for critic_forward.7']
  %s0 = inlined_call_operand.vmem [shape: bf16[2,1536], index: 0, kind: input, shape index: {}]
  %s1 = inlined_call_operand.vmem [shape: bf16[2,4], index: 1, kind: input, shape index: {}]
  %s2 = inlined_call_operand.vmem [shape: bf16[1536,128], index: 2, kind: input, shape index: {}]
  %s3 = inlined_call_operand.vmem [shape: bf16[4,128], index: 3, kind: input, shape index: {}]
  %s4 = inlined_call_operand.vmem [shape: f32[1,128], index: 4, kind: input, shape index: {}]
  %s5 = inlined_call_operand.vmem [shape: bf16[128,128], index: 5, kind: input, shape index: {}]
  %s6 = inlined_call_operand.vmem [shape: f32[1,128], index: 6, kind: input, shape index: {}]
  %s7 = inlined_call_operand.vmem [shape: bf16[128,1], index: 7, kind: input, shape index: {}]
  %s8 = inlined_call_operand.<no memory space> [shape: f32[1,1], index: 8, kind: input, shape index: {}]
  %s9 = inlined_call_operand.vmem [shape: f32[2,1], index: 9, kind: output, shape index: {}]
  %s10 = sld [smem:[#allocation0]]
  $region46: #{critic_forward.7} parent=0
    _
  %s12 = ssub.s32 1, %s10
  %s13 = scalar_select 0, %s12, %s10
  %v14 = vstv %s8
  %15 = vst [vmem:[#allocation2] sm:$0x1] %v14
  // Predicated region
  $region2: #{critic_forward.7} parent=0 // pred_check
    _
  $region3: #{critic_forward.7} parent=0 // pred_check_branch
    %17 = sbr.rel (0) target = $region5
  $region4: #{critic_forward.7} parent=0 // pred_region
    _
  $region5: #{critic_forward.7} parent=0 // pred_fallthru
    _
  // Predicated region
  $region6: #{critic_forward.7} parent=0 // pred_check
    _
  $region7: #{critic_forward.7} parent=0 // pred_check_branch
    %19 = sbr.rel (0) target = $region9
  $region8: #{critic_forward.7} parent=0 // pred_region
    _
  $region9: #{critic_forward.7} parent=0 // pred_fallthru
    _
  // Predicated region
  $region10: #{critic_forward.7} parent=0 // pred_check
    _
  $region11: #{critic_forward.7} parent=0 // pred_check_branch
    %21 = sbr.rel (0) target = $region13
  $region12: #{critic_forward.7} parent=0 // pred_region
    _
  $region13: #{critic_forward.7} parent=0 // pred_fallthru
    _
  // Predicated region
  $region14: #{critic_forward.7} parent=0 // pred_check
    _
  $region15: #{critic_forward.7} parent=0 // pred_check_branch
    %23 = sbr.rel (0) target = $region17
  $region16: #{critic_forward.7} parent=0 // pred_region
    _
  $region17: #{critic_forward.7} parent=0 // pred_fallthru
    _
  // Predicated region
  $region18: #{critic_forward.7} parent=0 // pred_check
    _
  $region19: #{critic_forward.7} parent=0 // pred_check_branch
    %25 = sbr.rel (0) target = $region21
  $region20: #{critic_forward.7} parent=0 // pred_region
    _
  $region21: #{critic_forward.7} parent=0 // pred_fallthru
    _
  // Predicated region
  $region22: #{critic_forward.7} parent=0 // pred_check
    _
  $region23: #{critic_forward.7} parent=0 // pred_check_branch
    %27 = sbr.rel (0) target = $region25
  $region24: #{critic_forward.7} parent=0 // pred_region
    _
  $region25: #{critic_forward.7} parent=0 // pred_fallthru
    _
  // Predicated region
  $region26: #{critic_forward.7} parent=0 // pred_check
    _
  $region27: #{critic_forward.7} parent=0 // pred_check_branch
    %29 = sbr.rel (0) target = $region29
  $region28: #{critic_forward.7} parent=0 // pred_region
    _
  $region29: #{critic_forward.7} parent=0 // pred_fallthru
    _
  // Predicated region
  $region30: #{critic_forward.7} parent=0 // pred_check
    _
  $region31: #{critic_forward.7} parent=0 // pred_check_branch
    %31 = sbr.rel (0) target = $region33
  $region32: #{critic_forward.7} parent=0 // pred_region
    _
  $region33: #{critic_forward.7} parent=0 // pred_fallthru
    _
  // Predicated region
  $region34: #{critic_forward.7} parent=0 // pred_check
    _
  $region35: #{critic_forward.7} parent=0 // pred_check_branch
    %33 = sbr.rel (0) target = $region37
  $region36: #{critic_forward.7} parent=0 // pred_region
    _
  $region37: #{critic_forward.7} parent=0 // pred_fallthru
    _
  %v35 = vld [vmem:[%s0] sm:$0xff]
  %v36 = vld [vmem:[%s0 + $0x8] sm:$0xf]
  %v37 = vld [vmem:[%s2] sm:$0xf]
  %v38 = vld [vmem:[%s2 + $0x4] sm:$0xf]
  %v39 = vld [vmem:[%s2 + $0x8] sm:$0xf]
  %v40 = vld [vmem:[%s2 + $0xc] sm:$0xf]
  %v41 = vld [vmem:[%s2 + $0x10] sm:$0xf]
  %v42 = vld [vmem:[%s2 + $0x14] sm:$0xf]
  %v43 = vld [vmem:[%s2 + $0x18] sm:$0xf]
  %v44 = vld [vmem:[%s2 + $0x1c] sm:$0xf]
  %v45 = vld [vmem:[%s2 + $0x20] sm:$0xf]
  %v46 = vld [vmem:[%s2 + $0x24] sm:$0xf]
  %v47 = vld [vmem:[%s2 + $0x28] sm:$0xf]
  %v48 = vld [vmem:[%s2 + $0x2c] sm:$0xf]
  %v49 = vld [vmem:[%s2 + $0x30] sm:$0xf]
  %v50 = vld [vmem:[%s2 + $0x34] sm:$0xf]
  %v51 = vld [vmem:[%s2 + $0x38] sm:$0xf]
  %v52 = vld [vmem:[%s2 + $0x3c] sm:$0xf]
  %v53 = vld [vmem:[%s2 + $0x40] sm:$0xf]
  %v54 = vld [vmem:[%s2 + $0x44] sm:$0xf]
  %v55 = vld [vmem:[%s2 + $0x48] sm:$0xf]
  %v56 = vld [vmem:[%s2 + $0x4c] sm:$0xf]
  %v57 = vld [vmem:[%s2 + $0x50] sm:$0xf]
  %v58 = vld [vmem:[%s2 + $0x54] sm:$0xf]
  %v59 = vld [vmem:[%s2 + $0x58] sm:$0xf]
  %v60 = vld [vmem:[%s2 + $0x5c] sm:$0xf]
  %v61 = vld [vmem:[%s2 + $0x60] sm:$0xf]
  %v62 = vld [vmem:[%s2 + $0x64] sm:$0xf]
  %v63 = vld [vmem:[%s2 + $0x68] sm:$0xf]
  %v64 = vld [vmem:[%s2 + $0x6c] sm:$0xf]
  %v65 = vld [vmem:[%s2 + $0x70] sm:$0xf]
  %v66 = vld [vmem:[%s2 + $0x74] sm:$0xf]
  %v67 = vld [vmem:[%s2 + $0x78] sm:$0xf]
  %v68 = vld [vmem:[%s2 + $0x7c] sm:$0xf]
  %v69 = vld [vmem:[%s2 + $0x80] sm:$0xf]
  %v70 = vld [vmem:[%s2 + $0x84] sm:$0xf]
  %v71 = vld [vmem:[%s2 + $0x88] sm:$0xf]
  %v72 = vld [vmem:[%s2 + $0x8c] sm:$0xf]
  %v73 = vld [vmem:[%s2 + $0x90] sm:$0xf]
  %v74 = vld [vmem:[%s2 + $0x94] sm:$0xf]
  %v75 = vld [vmem:[%s2 + $0x98] sm:$0xf]
  %v76 = vld [vmem:[%s2 + $0x9c] sm:$0xf]
  %v77 = vld [vmem:[%s2 + $0xa0] sm:$0xf]
  %v78 = vld [vmem:[%s2 + $0xa4] sm:$0xf]
  %v79 = vld [vmem:[%s2 + $0xa8] sm:$0xf]
  %v80 = vld [vmem:[%s2 + $0xac] sm:$0xf]
  %v81 = vld [vmem:[%s2 + $0xb0] sm:$0xf]
  %v82 = vld [vmem:[%s2 + $0xb4] sm:$0xf]
  %v83 = vld [vmem:[%s2 + $0xb8] sm:$0xf]
  %v84 = vld [vmem:[%s2 + $0xbc] sm:$0xf]
  %v85 = vld [vmem:[%s2 + $0xc0] sm:$0xf]
  %v86 = vld [vmem:[%s2 + $0xc4] sm:$0xf]
  %v87 = vld [vmem:[%s2 + $0xc8] sm:$0xf]
  %v88 = vld [vmem:[%s2 + $0xcc] sm:$0xf]
  %v89 = vld [vmem:[%s2 + $0xd0] sm:$0xf]
  %v90 = vld [vmem:[%s2 + $0xd4] sm:$0xf]
  %v91 = vld [vmem:[%s2 + $0xd8] sm:$0xf]
  %v92 = vld [vmem:[%s2 + $0xdc] sm:$0xf]
  %v93 = vld [vmem:[%s2 + $0xe0] sm:$0xf]
  %v94 = vld [vmem:[%s2 + $0xe4] sm:$0xf]
  %v95 = vld [vmem:[%s2 + $0xe8] sm:$0xf]
  %v96 = vld [vmem:[%s2 + $0xec] sm:$0xf]
  %v97 = vld [vmem:[%s2 + $0xf0] sm:$0xf]
  %v98 = vld [vmem:[%s2 + $0xf4] sm:$0xf]
  %v99 = vld [vmem:[%s2 + $0xf8] sm:$0xf]
  %v100 = vld [vmem:[%s2 + $0xfc] sm:$0xf]
  %v101 = vld [vmem:[%s2 + $0x100] sm:$0xf]
  %v102 = vld [vmem:[%s2 + $0x104] sm:$0xf]
  %v103 = vld [vmem:[%s2 + $0x108] sm:$0xf]
  %v104 = vld [vmem:[%s2 + $0x10c] sm:$0xf]
  %v105 = vld [vmem:[%s2 + $0x110] sm:$0xf]
  %v106 = vld [vmem:[%s2 + $0x114] sm:$0xf]
  %v107 = vld [vmem:[%s2 + $0x118] sm:$0xf]
  %v108 = vld [vmem:[%s2 + $0x11c] sm:$0xf]
  %v109 = vld [vmem:[%s2 + $0x120] sm:$0xf]
  %v110 = vld [vmem:[%s2 + $0x124] sm:$0xf]
  %v111 = vld [vmem:[%s2 + $0x128] sm:$0xf]
  %v112 = vld [vmem:[%s2 + $0x12c] sm:$0xf]
  %v113 = vld [vmem:[%s2 + $0x130] sm:$0xf]
  %v114 = vld [vmem:[%s2 + $0x134] sm:$0xf]
  %v115 = vld [vmem:[%s2 + $0x138] sm:$0xf]
  %v116 = vld [vmem:[%s2 + $0x13c] sm:$0xf]
  %v117 = vld [vmem:[%s2 + $0x140] sm:$0xf]
  %v118 = vld [vmem:[%s2 + $0x144] sm:$0xf]
  %v119 = vld [vmem:[%s2 + $0x148] sm:$0xf]
  %v120 = vld [vmem:[%s2 + $0x14c] sm:$0xf]
  %v121 = vld [vmem:[%s2 + $0x150] sm:$0xf]
  %v122 = vld [vmem:[%s2 + $0x154] sm:$0xf]
  %v123 = vld [vmem:[%s2 + $0x158] sm:$0xf]
  %v124 = vld [vmem:[%s2 + $0x15c] sm:$0xf]
  %v125 = vld [vmem:[%s2 + $0x160] sm:$0xf]
  %v126 = vld [vmem:[%s2 + $0x164] sm:$0xf]
  %v127 = vld [vmem:[%s2 + $0x168] sm:$0xf]
  %v128 = vld [vmem:[%s2 + $0x16c] sm:$0xf]
  %v129 = vld [vmem:[%s2 + $0x170] sm:$0xf]
  %v130 = vld [vmem:[%s2 + $0x174] sm:$0xf]
  %v131 = vld [vmem:[%s2 + $0x178] sm:$0xf]
  %v132 = vld [vmem:[%s2 + $0x17c] sm:$0xf]
  %v133 = vld [vmem:[%s2 + $0x180] sm:$0xf]
  %v134 = vld [vmem:[%s2 + $0x184] sm:$0xf]
  %v135 = vld [vmem:[%s2 + $0x188] sm:$0xf]
  %v136 = vld [vmem:[%s2 + $0x18c] sm:$0xf]
  %v137 = vld [vmem:[%s2 + $0x190] sm:$0xf]
  %v138 = vld [vmem:[%s2 + $0x194] sm:$0xf]
  %v139 = vld [vmem:[%s2 + $0x198] sm:$0xf]
  %v140 = vld [vmem:[%s2 + $0x19c] sm:$0xf]
  %v141 = vld [vmem:[%s2 + $0x1a0] sm:$0xf]
  %v142 = vld [vmem:[%s2 + $0x1a4] sm:$0xf]
  %v143 = vld [vmem:[%s2 + $0x1a8] sm:$0xf]
  %v144 = vld [vmem:[%s2 + $0x1ac] sm:$0xf]
  %v145 = vld [vmem:[%s2 + $0x1b0] sm:$0xf]
  %v146 = vld [vmem:[%s2 + $0x1b4] sm:$0xf]
  %v147 = vld [vmem:[%s2 + $0x1b8] sm:$0xf]
  %v148 = vld [vmem:[%s2 + $0x1bc] sm:$0xf]
  %v149 = vld [vmem:[%s2 + $0x1c0] sm:$0xf]
  %v150 = vld [vmem:[%s2 + $0x1c4] sm:$0xf]
  %v151 = vld [vmem:[%s2 + $0x1c8] sm:$0xf]
  %v152 = vld [vmem:[%s2 + $0x1cc] sm:$0xf]
  %v153 = vld [vmem:[%s2 + $0x1d0] sm:$0xf]
  %v154 = vld [vmem:[%s2 + $0x1d4] sm:$0xf]
  %v155 = vld [vmem:[%s2 + $0x1d8] sm:$0xf]
  %v156 = vld [vmem:[%s2 + $0x1dc] sm:$0xf]
  %v157 = vld [vmem:[%s2 + $0x1e0] sm:$0xf]
  %v158 = vld [vmem:[%s2 + $0x1e4] sm:$0xf]
  %v159 = vld [vmem:[%s2 + $0x1e8] sm:$0xf]
  %v160 = vld [vmem:[%s2 + $0x1ec] sm:$0xf]
  %v161 = vld [vmem:[%s2 + $0x1f0] sm:$0xf]
  %v162 = vld [vmem:[%s2 + $0x1f4] sm:$0xf]
  %v163 = vld [vmem:[%s2 + $0x1f8] sm:$0xf]
  %v164 = vld [vmem:[%s2 + $0x1fc] sm:$0xf]
  %v165 = vld [vmem:[%s2 + $0x200] sm:$0xf]
  %v166 = vld [vmem:[%s2 + $0x204] sm:$0xf]
  %v167 = vld [vmem:[%s2 + $0x208] sm:$0xf]
  %v168 = vld [vmem:[%s2 + $0x20c] sm:$0xf]
  %v169 = vld [vmem:[%s2 + $0x210] sm:$0xf]
  %v170 = vld [vmem:[%s2 + $0x214] sm:$0xf]
  %v171 = vld [vmem:[%s2 + $0x218] sm:$0xf]
  %v172 = vld [vmem:[%s2 + $0x21c] sm:$0xf]
  %v173 = vld [vmem:[%s2 + $0x220] sm:$0xf]
  %v174 = vld [vmem:[%s2 + $0x224] sm:$0xf]
  %v175 = vld [vmem:[%s2 + $0x228] sm:$0xf]
  %v176 = vld [vmem:[%s2 + $0x22c] sm:$0xf]
  %v177 = vld [vmem:[%s2 + $0x230] sm:$0xf]
  %v178 = vld [vmem:[%s2 + $0x234] sm:$0xf]
  %v179 = vld [vmem:[%s2 + $0x238] sm:$0xf]
  %v180 = vld [vmem:[%s2 + $0x23c] sm:$0xf]
  %v181 = vld [vmem:[%s2 + $0x240] sm:$0xf]
  %v182 = vld [vmem:[%s2 + $0x244] sm:$0xf]
  %v183 = vld [vmem:[%s2 + $0x248] sm:$0xf]
  %v184 = vld [vmem:[%s2 + $0x24c] sm:$0xf]
  %v185 = vld [vmem:[%s2 + $0x250] sm:$0xf]
  %v186 = vld [vmem:[%s2 + $0x254] sm:$0xf]
  %v187 = vld [vmem:[%s2 + $0x258] sm:$0xf]
  %v188 = vld [vmem:[%s2 + $0x25c] sm:$0xf]
  %v189 = vld [vmem:[%s2 + $0x260] sm:$0xf]
  %v190 = vld [vmem:[%s2 + $0x264] sm:$0xf]
  %v191 = vld [vmem:[%s2 + $0x268] sm:$0xf]
  %v192 = vld [vmem:[%s2 + $0x26c] sm:$0xf]
  %v193 = vld [vmem:[%s2 + $0x270] sm:$0xf]
  %v194 = vld [vmem:[%s2 + $0x274] sm:$0xf]
  %v195 = vld [vmem:[%s2 + $0x278] sm:$0xf]
  %v196 = vld [vmem:[%s2 + $0x27c] sm:$0xf]
  %v197 = vld [vmem:[%s2 + $0x280] sm:$0xf]
  %v198 = vld [vmem:[%s2 + $0x284] sm:$0xf]
  %v199 = vld [vmem:[%s2 + $0x288] sm:$0xf]
  %v200 = vld [vmem:[%s2 + $0x28c] sm:$0xf]
  %v201 = vld [vmem:[%s2 + $0x290] sm:$0xf]
  %v202 = vld [vmem:[%s2 + $0x294] sm:$0xf]
  %v203 = vld [vmem:[%s2 + $0x298] sm:$0xf]
  %v204 = vld [vmem:[%s2 + $0x29c] sm:$0xf]
  %v205 = vld [vmem:[%s2 + $0x2a0] sm:$0xf]
  %v206 = vld [vmem:[%s2 + $0x2a4] sm:$0xf]
  %v207 = vld [vmem:[%s2 + $0x2a8] sm:$0xf]
  %v208 = vld [vmem:[%s2 + $0x2ac] sm:$0xf]
  %v209 = vld [vmem:[%s2 + $0x2b0] sm:$0xf]
  %v210 = vld [vmem:[%s2 + $0x2b4] sm:$0xf]
  %v211 = vld [vmem:[%s2 + $0x2b8] sm:$0xf]
  %v212 = vld [vmem:[%s2 + $0x2bc] sm:$0xf]
  %v213 = vld [vmem:[%s2 + $0x2c0] sm:$0xf]
  %v214 = vld [vmem:[%s2 + $0x2c4] sm:$0xf]
  %v215 = vld [vmem:[%s2 + $0x2c8] sm:$0xf]
  %v216 = vld [vmem:[%s2 + $0x2cc] sm:$0xf]
  %v217 = vld [vmem:[%s2 + $0x2d0] sm:$0xf]
  %v218 = vld [vmem:[%s2 + $0x2d4] sm:$0xf]
  %v219 = vld [vmem:[%s2 + $0x2d8] sm:$0xf]
  %v220 = vld [vmem:[%s2 + $0x2dc] sm:$0xf]
  %v221 = vld [vmem:[%s2 + $0x2e0] sm:$0xf]
  %v222 = vld [vmem:[%s2 + $0x2e4] sm:$0xf]
  %v223 = vld [vmem:[%s2 + $0x2e8] sm:$0xf]
  %v224 = vld [vmem:[%s2 + $0x2ec] sm:$0xf]
  %v225 = vld [vmem:[%s2 + $0x2f0] sm:$0xf]
  %v226 = vld [vmem:[%s2 + $0x2f4] sm:$0xf]
  %v227 = vld [vmem:[%s2 + $0x2f8] sm:$0xf]
  %v228 = vld [vmem:[%s2 + $0x2fc] sm:$0xf]
  %v229 = vld [vmem:[%s1] sm:$0x1]
  %v230 = vld [vmem:[%s3] sm:$0x3]
  %vm231 = vcmask 31744
  %v233 = vsel %vm231, %v229, 0
  %vm235 = vcmask 1041408
  %v237 = vsel %vm235, %v230, 0
  %239 = vmatprep.subr.bf16.mxu0 0
  %240 = vmatpush1.bf16.msra.mxu0 0
  %241 = vmatprep.subr.bf16.mxu0 0
  %242 = vmatpush1.bf16.msra.mxu0 0
  %243 = vmatprep.subr.bf16.mxu0 0
  %244 = vmatpush1.bf16.msra.mxu0 0
  %245 = vmatprep.subr.bf16.mxu0 0
  %246 = vmatpush1.bf16.msra.mxu0 0
  %247 = vmatprep.subr.bf16.mxu0 0
  %248 = vmatpush1.bf16.msra.mxu0 0
  %249 = vmatprep.subr.bf16.mxu0 0
  %250 = vmatpush1.bf16.msra.mxu0 0
  %251 = vmatprep.subr.bf16.mxu0 0
  %252 = vmatpush1.bf16.msra.mxu0 0
  %253 = vmatprep.subr.bf16.mxu0 0
  %254 = vmatpush1.bf16.msra.mxu0 %v237
  %255 = vmatprep.subr.bf16.mxu0 0
  %256 = vmatpush2.bf16.msra.mxu0 0
  %257 = vmatprep.subr.bf16.mxu0 0
  %258 = vmatpush2.bf16.msra.mxu0 0
  %259 = vmatprep.subr.bf16.mxu0 0
  %260 = vmatpush2.bf16.msra.mxu0 0
  %261 = vmatprep.subr.bf16.mxu0 0
  %262 = vmatpush2.bf16.msra.mxu0 0
  %263 = vmatprep.subr.bf16.mxu0 0
  %264 = vmatpush2.bf16.msra.mxu0 0
  %265 = vmatprep.subr.bf16.mxu0 0
  %266 = vmatpush2.bf16.msra.mxu0 0
  %267 = vmatprep.subr.bf16.mxu0 0
  %268 = vmatpush2.bf16.msra.mxu0 0
  %269 = vmatprep.subr.bf16.mxu0 0
  %270 = vmatpush2.bf16.msra.mxu0 0
  %271 = vmatprep.mubr.bf16.mxu0 0
  %272 = vmatmul.mubr.bf16.gmra.mxu0 %v233
  %v273 = vpop.f32.mrf.mxu0
  %v274 = vadd.f32 0.0, %v273
  %v275 = vpop.f32.mrf.mxu0
  %v276 = vpop.f32.mrf.mxu0
  %v277 = vpop.f32.mrf.mxu0
  %278 = vdwg.mxu0
  %v281 = vcombine.high %v35, %v35
  %v283 = vunpack.c.l.s4 1966171168
  %v284 = vunpack.c.0.s8 %v283
  %v285 = vlaneseq
  %v286 = vshrl.u32 %v285, 7
  %v287 = vsub.s32 %v284, %v286
  %v288 = vrot.slane %v35, %v287
  %v290 = vunpack.c.l.s4 1966171168
  %v291 = vunpack.c.0.s8 %v290
  %v292 = vlaneseq
  %v293 = vshrl.u32 %v292, 7
  %v294 = vsub.s32 %v291, %v293
  %v295 = vrot.slane %v281, %v294
  %v296 = vcombine.high %v288, %v288
  %v297 = vcombine.high %v295, %v295
  %v299 = vunpack.c.l.s4 1966171168
  %v300 = vunpack.c.0.s8 %v299
  %v301 = vlaneseq
  %v302 = vshrl.u32 %v301, 7
  %v303 = vsub.s32 %v300, %v302
  %v304 = vrot.slane %v288, %v303
  %v306 = vunpack.c.l.s4 1966171168
  %v307 = vunpack.c.0.s8 %v306
  %v308 = vlaneseq
  %v309 = vshrl.u32 %v308, 7
  %v310 = vsub.s32 %v307, %v309
  %v311 = vrot.slane %v295, %v310
  %v313 = vunpack.c.l.s4 1966171168
  %v314 = vunpack.c.0.s8 %v313
  %v315 = vlaneseq
  %v316 = vshrl.u32 %v315, 7
  %v317 = vsub.s32 %v314, %v316
  %v318 = vrot.slane %v296, %v317
  %v320 = vunpack.c.l.s4 1966171168
  %v321 = vunpack.c.0.s8 %v320
  %v322 = vlaneseq
  %v323 = vshrl.u32 %v322, 7
  %v324 = vsub.s32 %v321, %v323
  %v325 = vrot.slane %v297, %v324
  %v326 = vcombine.high %v304, %v304
  %v327 = vcombine.high %v311, %v311
  %v328 = vcombine.high %v318, %v318
  %v329 = vcombine.high %v325, %v325
  %v331 = vunpack.c.l.s4 1966171168
  %v332 = vunpack.c.0.s8 %v331
  %v333 = vlaneseq
  %v334 = vshrl.u32 %v333, 7
  %v335 = vsub.s32 %v332, %v334
  %v336 = vrot.slane %v36, %v335
  %v337 = vcombine.high %v336, %v336
  %v339 = vunpack.c.l.s4 1966171168
  %v340 = vunpack.c.0.s8 %v339
  %v341 = vlaneseq
  %v342 = vshrl.u32 %v341, 7
  %v343 = vsub.s32 %v340, %v342
  %v344 = vrot.slane %v336, %v343
  %v346 = vunpack.c.l.s4 1966171168
  %v347 = vunpack.c.0.s8 %v346
  %v348 = vlaneseq
  %v349 = vshrl.u32 %v348, 7
  %v350 = vsub.s32 %v347, %v349
  %v351 = vrot.slane %v337, %v350
  %v352 = vcombine.high %v344, %v344
  %v353 = vcombine.high %v351, %v351
  %v558 = vunpack.c.l.b16 %v37
  %v559 = vunpack.c.l.b16 %v38
  %v560 = vunpack.c.l.b16 %v39
  %v561 = vunpack.c.l.b16 %v40
  %v562 = vunpack.c.l.b16 %v41
  %v563 = vunpack.c.l.b16 %v42
  %v564 = vunpack.c.l.b16 %v43
  %v565 = vunpack.c.l.b16 %v44
  %v566 = vunpack.c.l.b16 %v45
  %v567 = vunpack.c.l.b16 %v46
  %v568 = vunpack.c.l.b16 %v47
  %v569 = vunpack.c.l.b16 %v48
  %v570 = vunpack.c.l.b16 %v49
  %v571 = vunpack.c.l.b16 %v50
  %v572 = vunpack.c.l.b16 %v51
  %v573 = vunpack.c.l.b16 %v52
  %v574 = vunpack.c.l.b16 %v53
  %v575 = vunpack.c.l.b16 %v54
  %v576 = vunpack.c.l.b16 %v55
  %v577 = vunpack.c.l.b16 %v56
  %v578 = vunpack.c.l.b16 %v57
  %v579 = vunpack.c.l.b16 %v58
  %v580 = vunpack.c.l.b16 %v59
  %v581 = vunpack.c.l.b16 %v60
  %v582 = vunpack.c.l.b16 %v61
  %v583 = vunpack.c.l.b16 %v62
  %v584 = vunpack.c.l.b16 %v63
  %v585 = vunpack.c.l.b16 %v64
  %v586 = vunpack.c.l.b16 %v65
  %v587 = vunpack.c.l.b16 %v66
  %v588 = vunpack.c.l.b16 %v67
  %v589 = vunpack.c.l.b16 %v68
  %v590 = vunpack.c.l.b16 %v69
  %v591 = vunpack.c.l.b16 %v70
  %v592 = vunpack.c.l.b16 %v71
  %v593 = vunpack.c.l.b16 %v72
  %v594 = vunpack.c.l.b16 %v73
  %v595 = vunpack.c.l.b16 %v74
  %v596 = vunpack.c.l.b16 %v75
  %v597 = vunpack.c.l.b16 %v76
  %v598 = vunpack.c.l.b16 %v77
  %v599 = vunpack.c.l.b16 %v78
  %v600 = vunpack.c.l.b16 %v79
  %v601 = vunpack.c.l.b16 %v80
  %v602 = vunpack.c.l.b16 %v81
  %v603 = vunpack.c.l.b16 %v82
  %v604 = vunpack.c.l.b16 %v83
  %v605 = vunpack.c.l.b16 %v84
  %v606 = vunpack.c.l.b16 %v85
  %v607 = vunpack.c.l.b16 %v86
  %v608 = vunpack.c.l.b16 %v87
  %v609 = vunpack.c.l.b16 %v88
  %v610 = vunpack.c.l.b16 %v89
  %v611 = vunpack.c.l.b16 %v90
  %v612 = vunpack.c.l.b16 %v91
  %v613 = vunpack.c.l.b16 %v92
  %v614 = vunpack.c.l.b16 %v93
  %v615 = vunpack.c.l.b16 %v94
  %v616 = vunpack.c.l.b16 %v95
  %v617 = vunpack.c.l.b16 %v96
  %v618 = vunpack.c.l.b16 %v97
  %v619 = vunpack.c.l.b16 %v98
  %v620 = vunpack.c.l.b16 %v99
  %v621 = vunpack.c.l.b16 %v100
  %v622 = vunpack.c.l.b16 %v101
  %v623 = vunpack.c.l.b16 %v102
  %v624 = vunpack.c.l.b16 %v103
  %v625 = vunpack.c.l.b16 %v104
  %v626 = vunpack.c.l.b16 %v105
  %v627 = vunpack.c.l.b16 %v106
  %v628 = vunpack.c.l.b16 %v107
  %v629 = vunpack.c.l.b16 %v108
  %v630 = vunpack.c.l.b16 %v109
  %v631 = vunpack.c.l.b16 %v110
  %v632 = vunpack.c.l.b16 %v111
  %v633 = vunpack.c.l.b16 %v112
  %v634 = vunpack.c.l.b16 %v113
  %v635 = vunpack.c.l.b16 %v114
  %v636 = vunpack.c.l.b16 %v115
  %v637 = vunpack.c.l.b16 %v116
  %v638 = vunpack.c.l.b16 %v117
  %v639 = vunpack.c.l.b16 %v118
  %v640 = vunpack.c.l.b16 %v119
  %v641 = vunpack.c.l.b16 %v120
  %v642 = vunpack.c.l.b16 %v121
  %v643 = vunpack.c.l.b16 %v122
  %v644 = vunpack.c.l.b16 %v123
  %v645 = vunpack.c.l.b16 %v124
  %v646 = vunpack.c.l.b16 %v125
  %v647 = vunpack.c.l.b16 %v126
  %v648 = vunpack.c.l.b16 %v127
  %v649 = vunpack.c.l.b16 %v128
  %v650 = vunpack.c.l.b16 %v129
  %v651 = vunpack.c.l.b16 %v130
  %v652 = vunpack.c.l.b16 %v131
  %v653 = vunpack.c.l.b16 %v132
  %v654 = vunpack.c.l.b16 %v133
  %v655 = vunpack.c.l.b16 %v134
  %v656 = vunpack.c.l.b16 %v135
  %v657 = vunpack.c.l.b16 %v136
  %v658 = vunpack.c.l.b16 %v137
  %v659 = vunpack.c.l.b16 %v138
  %v660 = vunpack.c.l.b16 %v139
  %v661 = vunpack.c.l.b16 %v140
  %v662 = vunpack.c.l.b16 %v141
  %v663 = vunpack.c.l.b16 %v142
  %v664 = vunpack.c.l.b16 %v143
  %v665 = vunpack.c.l.b16 %v144
  %v666 = vunpack.c.l.b16 %v145
  %v667 = vunpack.c.l.b16 %v146
  %v668 = vunpack.c.l.b16 %v147
  %v669 = vunpack.c.l.b16 %v148
  %v670 = vunpack.c.l.b16 %v149
  %v671 = vunpack.c.l.b16 %v150
  %v672 = vunpack.c.l.b16 %v151
  %v673 = vunpack.c.l.b16 %v152
  %v674 = vunpack.c.l.b16 %v153
  %v675 = vunpack.c.l.b16 %v154
  %v676 = vunpack.c.l.b16 %v155
  %v677 = vunpack.c.l.b16 %v156
  %v678 = vunpack.c.l.b16 %v157
  %v679 = vunpack.c.l.b16 %v158
  %v680 = vunpack.c.l.b16 %v159
  %v681 = vunpack.c.l.b16 %v160
  %v682 = vunpack.c.l.b16 %v161
  %v683 = vunpack.c.l.b16 %v162
  %v684 = vunpack.c.l.b16 %v163
  %v685 = vunpack.c.l.b16 %v164
  %v686 = vunpack.c.l.b16 %v165
  %v687 = vunpack.c.l.b16 %v166
  %v688 = vunpack.c.l.b16 %v167
  %v689 = vunpack.c.l.b16 %v168
  %v690 = vunpack.c.l.b16 %v169
  %v691 = vunpack.c.l.b16 %v170
  %v692 = vunpack.c.l.b16 %v171
  %v693 = vunpack.c.l.b16 %v172
  %v694 = vunpack.c.l.b16 %v173
  %v695 = vunpack.c.l.b16 %v174
  %v696 = vunpack.c.l.b16 %v175
  %v697 = vunpack.c.l.b16 %v176
  %v698 = vunpack.c.l.b16 %v177
  %v699 = vunpack.c.l.b16 %v178
  %v700 = vunpack.c.l.b16 %v179
  %v701 = vunpack.c.l.b16 %v180
  %v702 = vunpack.c.l.b16 %v181
  %v703 = vunpack.c.l.b16 %v182
  %v704 = vunpack.c.l.b16 %v183
  %v705 = vunpack.c.l.b16 %v184
  %v706 = vunpack.c.l.b16 %v185
  %v707 = vunpack.c.l.b16 %v186
  %v708 = vunpack.c.l.b16 %v187
  %v709 = vunpack.c.l.b16 %v188
  %v710 = vunpack.c.l.b16 %v189
  %v711 = vunpack.c.l.b16 %v190
  %v712 = vunpack.c.l.b16 %v191
  %v713 = vunpack.c.l.b16 %v192
  %v714 = vunpack.c.l.b16 %v193
  %v715 = vunpack.c.l.b16 %v194
  %v716 = vunpack.c.l.b16 %v195
  %v717 = vunpack.c.l.b16 %v196
  %v718 = vunpack.c.l.b16 %v197
  %v719 = vunpack.c.l.b16 %v198
  %v720 = vunpack.c.l.b16 %v199
  %v721 = vunpack.c.l.b16 %v200
  %v722 = vunpack.c.l.b16 %v201
  %v723 = vunpack.c.l.b16 %v202
  %v724 = vunpack.c.l.b16 %v203
  %v725 = vunpack.c.l.b16 %v204
  %v726 = vunpack.c.l.b16 %v205
  %v727 = vunpack.c.l.b16 %v206
  %v728 = vunpack.c.l.b16 %v207
  %v729 = vunpack.c.l.b16 %v208
  %v730 = vunpack.c.l.b16 %v209
  %v731 = vunpack.c.l.b16 %v210
  %v732 = vunpack.c.l.b16 %v211
  %v733 = vunpack.c.l.b16 %v212
  %v734 = vunpack.c.l.b16 %v213
  %v735 = vunpack.c.l.b16 %v214
  %v736 = vunpack.c.l.b16 %v215
  %v737 = vunpack.c.l.b16 %v216
  %v738 = vunpack.c.l.b16 %v217
  %v739 = vunpack.c.l.b16 %v218
  %v740 = vunpack.c.l.b16 %v219
  %v741 = vunpack.c.l.b16 %v220
  %v742 = vunpack.c.l.b16 %v221
  %v743 = vunpack.c.l.b16 %v222
  %v744 = vunpack.c.l.b16 %v223
  %v745 = vunpack.c.l.b16 %v224
  %v746 = vunpack.c.l.b16 %v225
  %v747 = vunpack.c.l.b16 %v226
  %v748 = vunpack.c.l.b16 %v227
  %v749 = vunpack.c.l.b16 %v228
  %v750 = vpack.c.b16 %v559, %v558
  %v751 = vpack.c.b16 %v561, %v560
  %v752 = vpack.c.b16 %v563, %v562
  %v753 = vpack.c.b16 %v565, %v564
  %v754 = vpack.c.b16 %v567, %v566
  %v755 = vpack.c.b16 %v569, %v568
  %v756 = vpack.c.b16 %v571, %v570
  %v757 = vpack.c.b16 %v573, %v572
  %v758 = vpack.c.b16 %v575, %v574
  %v759 = vpack.c.b16 %v577, %v576
  %v760 = vpack.c.b16 %v579, %v578
  %v761 = vpack.c.b16 %v581, %v580
  %v762 = vpack.c.b16 %v583, %v582
  %v763 = vpack.c.b16 %v585, %v584
  %v764 = vpack.c.b16 %v587, %v586
  %v765 = vpack.c.b16 %v589, %v588
  %v766 = vpack.c.b16 %v591, %v590
  %v767 = vpack.c.b16 %v593, %v592
  %v768 = vpack.c.b16 %v595, %v594
  %v769 = vpack.c.b16 %v597, %v596
  %v770 = vpack.c.b16 %v599, %v598
  %v771 = vpack.c.b16 %v601, %v600
  %v772 = vpack.c.b16 %v603, %v602
  %v773 = vpack.c.b16 %v605, %v604
  %v774 = vpack.c.b16 %v607, %v606
  %v775 = vpack.c.b16 %v609, %v608
  %v776 = vpack.c.b16 %v611, %v610
  %v777 = vpack.c.b16 %v613, %v612
  %v778 = vpack.c.b16 %v615, %v614
  %v779 = vpack.c.b16 %v617, %v616
  %v780 = vpack.c.b16 %v619, %v618
  %v781 = vpack.c.b16 %v621, %v620
  %v782 = vpack.c.b16 %v623, %v622
  %v783 = vpack.c.b16 %v625, %v624
  %v784 = vpack.c.b16 %v627, %v626
  %v785 = vpack.c.b16 %v629, %v628
  %v786 = vpack.c.b16 %v631, %v630
  %v787 = vpack.c.b16 %v633, %v632
  %v788 = vpack.c.b16 %v635, %v634
  %v789 = vpack.c.b16 %v637, %v636
  %v790 = vpack.c.b16 %v639, %v638
  %v791 = vpack.c.b16 %v641, %v640
  %v792 = vpack.c.b16 %v643, %v642
  %v793 = vpack.c.b16 %v645, %v644
  %v794 = vpack.c.b16 %v647, %v646
  %v795 = vpack.c.b16 %v649, %v648
  %v796 = vpack.c.b16 %v651, %v650
  %v797 = vpack.c.b16 %v653, %v652
  %v798 = vpack.c.b16 %v655, %v654
  %v799 = vpack.c.b16 %v657, %v656
  %v800 = vpack.c.b16 %v659, %v658
  %v801 = vpack.c.b16 %v661, %v660
  %v802 = vpack.c.b16 %v663, %v662
  %v803 = vpack.c.b16 %v665, %v664
  %v804 = vpack.c.b16 %v667, %v666
  %v805 = vpack.c.b16 %v669, %v668
  %v806 = vpack.c.b16 %v671, %v670
  %v807 = vpack.c.b16 %v673, %v672
  %v808 = vpack.c.b16 %v675, %v674
  %v809 = vpack.c.b16 %v677, %v676
  %v810 = vpack.c.b16 %v679, %v678
  %v811 = vpack.c.b16 %v681, %v680
  %v812 = vpack.c.b16 %v683, %v682
  %v813 = vpack.c.b16 %v685, %v684
  %v814 = vpack.c.b16 %v687, %v686
  %v815 = vpack.c.b16 %v689, %v688
  %v816 = vpack.c.b16 %v691, %v690
  %v817 = vpack.c.b16 %v693, %v692
  %v818 = vpack.c.b16 %v695, %v694
  %v819 = vpack.c.b16 %v697, %v696
  %v820 = vpack.c.b16 %v699, %v698
  %v821 = vpack.c.b16 %v701, %v700
  %v822 = vpack.c.b16 %v703, %v702
  %v823 = vpack.c.b16 %v705, %v704
  %v824 = vpack.c.b16 %v707, %v706
  %v825 = vpack.c.b16 %v709, %v708
  %v826 = vpack.c.b16 %v711, %v710
  %v827 = vpack.c.b16 %v713, %v712
  %v828 = vpack.c.b16 %v715, %v714
  %v829 = vpack.c.b16 %v717, %v716
  %v830 = vpack.c.b16 %v719, %v718
  %v831 = vpack.c.b16 %v721, %v720
  %v832 = vpack.c.b16 %v723, %v722
  %v833 = vpack.c.b16 %v725, %v724
  %v834 = vpack.c.b16 %v727, %v726
  %v835 = vpack.c.b16 %v729, %v728
  %v836 = vpack.c.b16 %v731, %v730
  %v837 = vpack.c.b16 %v733, %v732
  %v838 = vpack.c.b16 %v735, %v734
  %v839 = vpack.c.b16 %v737, %v736
  %v840 = vpack.c.b16 %v739, %v738
  %v841 = vpack.c.b16 %v741, %v740
  %v842 = vpack.c.b16 %v743, %v742
  %v843 = vpack.c.b16 %v745, %v744
  %v844 = vpack.c.b16 %v747, %v746
  %v845 = vpack.c.b16 %v749, %v748
  %942 = vmatprep.subr.bf16.mxu0 0
  %943 = vmatpush1.bf16.msra.mxu0 %v757
  %944 = vmatprep.subr.bf16.mxu0 0
  %945 = vmatpush1.bf16.msra.mxu0 %v756
  %946 = vmatprep.subr.bf16.mxu0 0
  %947 = vmatpush1.bf16.msra.mxu0 %v755
  %948 = vmatprep.subr.bf16.mxu0 0
  %949 = vmatpush1.bf16.msra.mxu0 %v754
  %950 = vmatprep.subr.bf16.mxu0 0
  %951 = vmatpush1.bf16.msra.mxu0 %v753
  %952 = vmatprep.subr.bf16.mxu0 0
  %953 = vmatpush1.bf16.msra.mxu0 %v752
  %954 = vmatprep.subr.bf16.mxu0 0
  %955 = vmatpush1.bf16.msra.mxu0 %v751
  %956 = vmatprep.subr.bf16.mxu0 0
  %957 = vmatpush1.bf16.msra.mxu0 %v750
  %958 = vmatprep.subr.bf16.mxu0 0
  %959 = vmatpush2.bf16.msra.mxu0 %v765
  %960 = vmatprep.subr.bf16.mxu0 0
  %961 = vmatpush2.bf16.msra.mxu0 %v764
  %962 = vmatprep.subr.bf16.mxu0 0
  %963 = vmatpush2.bf16.msra.mxu0 %v763
  %964 = vmatprep.subr.bf16.mxu0 0
  %965 = vmatpush2.bf16.msra.mxu0 %v762
  %966 = vmatprep.subr.bf16.mxu0 0
  %967 = vmatpush2.bf16.msra.mxu0 %v761
  %968 = vmatprep.subr.bf16.mxu0 0
  %969 = vmatpush2.bf16.msra.mxu0 %v760
  %970 = vmatprep.subr.bf16.mxu0 0
  %971 = vmatpush2.bf16.msra.mxu0 %v759
  %972 = vmatprep.subr.bf16.mxu0 0
  %973 = vmatpush2.bf16.msra.mxu0 %v758
  %974 = vmatprep.mubr.bf16.mxu0 %v318
  %975 = vmatmul.mubr.bf16.gmra.mxu0 %v304
  %v976 = vpop.f32.mrf.mxu0
  %v977 = vadd.f32 %v274, %v976
  %v978 = vpop.f32.mrf.mxu0
  %v979 = vpop.f32.mrf.mxu0
  %v980 = vpop.f32.mrf.mxu0
  %981 = vdwg.mxu0
  %982 = vmatprep.subr.bf16.mxu0 0
  %983 = vmatpush1.bf16.msra.mxu0 %v773
  %984 = vmatprep.subr.bf16.mxu0 0
  %985 = vmatpush1.bf16.msra.mxu0 %v772
  %986 = vmatprep.subr.bf16.mxu0 0
  %987 = vmatpush1.bf16.msra.mxu0 %v771
  %988 = vmatprep.subr.bf16.mxu0 0
  %989 = vmatpush1.bf16.msra.mxu0 %v770
  %990 = vmatprep.subr.bf16.mxu0 0
  %991 = vmatpush1.bf16.msra.mxu0 %v769
  %992 = vmatprep.subr.bf16.mxu0 0
  %993 = vmatpush1.bf16.msra.mxu0 %v768
  %994 = vmatprep.subr.bf16.mxu0 0
  %995 = vmatpush1.bf16.msra.mxu0 %v767
  %996 = vmatprep.subr.bf16.mxu0 0
  %997 = vmatpush1.bf16.msra.mxu0 %v766
  %998 = vmatprep.subr.bf16.mxu0 0
  %999 = vmatpush2.bf16.msra.mxu0 %v781
  %1000 = vmatprep.subr.bf16.mxu0 0
  %1001 = vmatpush2.bf16.msra.mxu0 %v780
  %1002 = vmatprep.subr.bf16.mxu0 0
  %1003 = vmatpush2.bf16.msra.mxu0 %v779
  %1004 = vmatprep.subr.bf16.mxu0 0
  %1005 = vmatpush2.bf16.msra.mxu0 %v778
  %1006 = vmatprep.subr.bf16.mxu0 0
  %1007 = vmatpush2.bf16.msra.mxu0 %v777
  %1008 = vmatprep.subr.bf16.mxu0 0
  %1009 = vmatpush2.bf16.msra.mxu0 %v776
  %1010 = vmatprep.subr.bf16.mxu0 0
  %1011 = vmatpush2.bf16.msra.mxu0 %v775
  %1012 = vmatprep.subr.bf16.mxu0 0
  %1013 = vmatpush2.bf16.msra.mxu0 %v774
  %1014 = vmatprep.mubr.bf16.mxu0 %v328
  %1015 = vmatmul.mubr.bf16.gmra.mxu0 %v326
  %v1016 = vpop.f32.mrf.mxu0
  %v1017 = vadd.f32 %v977, %v1016
  %v1018 = vpop.f32.mrf.mxu0
  %v1019 = vpop.f32.mrf.mxu0
  %v1020 = vpop.f32.mrf.mxu0
  %1021 = vdwg.mxu0
  %1022 = vmatprep.subr.bf16.mxu0 0
  %1023 = vmatpush1.bf16.msra.mxu0 %v789
  %1024 = vmatprep.subr.bf16.mxu0 0
  %1025 = vmatpush1.bf16.msra.mxu0 %v788
  %1026 = vmatprep.subr.bf16.mxu0 0
  %1027 = vmatpush1.bf16.msra.mxu0 %v787
  %1028 = vmatprep.subr.bf16.mxu0 0
  %1029 = vmatpush1.bf16.msra.mxu0 %v786
  %1030 = vmatprep.subr.bf16.mxu0 0
  %1031 = vmatpush1.bf16.msra.mxu0 %v785
  %1032 = vmatprep.subr.bf16.mxu0 0
  %1033 = vmatpush1.bf16.msra.mxu0 %v784
  %1034 = vmatprep.subr.bf16.mxu0 0
  %1035 = vmatpush1.bf16.msra.mxu0 %v783
  %1036 = vmatprep.subr.bf16.mxu0 0
  %1037 = vmatpush1.bf16.msra.mxu0 %v782
  %1038 = vmatprep.subr.bf16.mxu0 0
  %1039 = vmatpush2.bf16.msra.mxu0 %v797
  %1040 = vmatprep.subr.bf16.mxu0 0
  %1041 = vmatpush2.bf16.msra.mxu0 %v796
  %1042 = vmatprep.subr.bf16.mxu0 0
  %1043 = vmatpush2.bf16.msra.mxu0 %v795
  %1044 = vmatprep.subr.bf16.mxu0 0
  %1045 = vmatpush2.bf16.msra.mxu0 %v794
  %1046 = vmatprep.subr.bf16.mxu0 0
  %1047 = vmatpush2.bf16.msra.mxu0 %v793
  %1048 = vmatprep.subr.bf16.mxu0 0
  %1049 = vmatpush2.bf16.msra.mxu0 %v792
  %1050 = vmatprep.subr.bf16.mxu0 0
  %1051 = vmatpush2.bf16.msra.mxu0 %v791
  %1052 = vmatprep.subr.bf16.mxu0 0
  %1053 = vmatpush2.bf16.msra.mxu0 %v790
  %1054 = vmatprep.mubr.bf16.mxu0 %v325
  %1055 = vmatmul.mubr.bf16.gmra.mxu0 %v311
  %v1056 = vpop.f32.mrf.mxu0
  %v1057 = vadd.f32 %v1017, %v1056
  %v1058 = vpop.f32.mrf.mxu0
  %v1059 = vpop.f32.mrf.mxu0
  %v1060 = vpop.f32.mrf.mxu0
  %1061 = vdwg.mxu0
  %1062 = vmatprep.subr.bf16.mxu0 0
  %1063 = vmatpush1.bf16.msra.mxu0 %v805
  %1064 = vmatprep.subr.bf16.mxu0 0
  %1065 = vmatpush1.bf16.msra.mxu0 %v804
  %1066 = vmatprep.subr.bf16.mxu0 0
  %1067 = vmatpush1.bf16.msra.mxu0 %v803
  %1068 = vmatprep.subr.bf16.mxu0 0
  %1069 = vmatpush1.bf16.msra.mxu0 %v802
  %1070 = vmatprep.subr.bf16.mxu0 0
  %1071 = vmatpush1.bf16.msra.mxu0 %v801
  %1072 = vmatprep.subr.bf16.mxu0 0
  %1073 = vmatpush1.bf16.msra.mxu0 %v800
  %1074 = vmatprep.subr.bf16.mxu0 0
  %1075 = vmatpush1.bf16.msra.mxu0 %v799
  %1076 = vmatprep.subr.bf16.mxu0 0
  %1077 = vmatpush1.bf16.msra.mxu0 %v798
  %1078 = vmatprep.subr.bf16.mxu0 0
  %1079 = vmatpush2.bf16.msra.mxu0 %v813
  %1080 = vmatprep.subr.bf16.mxu0 0
  %1081 = vmatpush2.bf16.msra.mxu0 %v812
  %1082 = vmatprep.subr.bf16.mxu0 0
  %1083 = vmatpush2.bf16.msra.mxu0 %v811
  %1084 = vmatprep.subr.bf16.mxu0 0
  %1085 = vmatpush2.bf16.msra.mxu0 %v810
  %1086 = vmatprep.subr.bf16.mxu0 0
  %1087 = vmatpush2.bf16.msra.mxu0 %v809
  %1088 = vmatprep.subr.bf16.mxu0 0
  %1089 = vmatpush2.bf16.msra.mxu0 %v808
  %1090 = vmatprep.subr.bf16.mxu0 0
  %1091 = vmatpush2.bf16.msra.mxu0 %v807
  %1092 = vmatprep.subr.bf16.mxu0 0
  %1093 = vmatpush2.bf16.msra.mxu0 %v806
  %1094 = vmatprep.mubr.bf16.mxu0 %v329
  %1095 = vmatmul.mubr.bf16.gmra.mxu0 %v327
  %v1096 = vpop.f32.mrf.mxu0
  %v1097 = vadd.f32 %v1057, %v1096
  %v1098 = vpop.f32.mrf.mxu0
  %v1099 = vpop.f32.mrf.mxu0
  %v1100 = vpop.f32.mrf.mxu0
  %1101 = vdwg.mxu0
  %1102 = vmatprep.subr.bf16.mxu0 0
  %1103 = vmatpush1.bf16.msra.mxu0 %v821
  %1104 = vmatprep.subr.bf16.mxu0 0
  %1105 = vmatpush1.bf16.msra.mxu0 %v820
  %1106 = vmatprep.subr.bf16.mxu0 0
  %1107 = vmatpush1.bf16.msra.mxu0 %v819
  %1108 = vmatprep.subr.bf16.mxu0 0
  %1109 = vmatpush1.bf16.msra.mxu0 %v818
  %1110 = vmatprep.subr.bf16.mxu0 0
  %1111 = vmatpush1.bf16.msra.mxu0 %v817
  %1112 = vmatprep.subr.bf16.mxu0 0
  %1113 = vmatpush1.bf16.msra.mxu0 %v816
  %1114 = vmatprep.subr.bf16.mxu0 0
  %1115 = vmatpush1.bf16.msra.mxu0 %v815
  %1116 = vmatprep.subr.bf16.mxu0 0
  %1117 = vmatpush1.bf16.msra.mxu0 %v814
  %1118 = vmatprep.subr.bf16.mxu0 0
  %1119 = vmatpush2.bf16.msra.mxu0 %v829
  %1120 = vmatprep.subr.bf16.mxu0 0
  %1121 = vmatpush2.bf16.msra.mxu0 %v828
  %1122 = vmatprep.subr.bf16.mxu0 0
  %1123 = vmatpush2.bf16.msra.mxu0 %v827
  %1124 = vmatprep.subr.bf16.mxu0 0
  %1125 = vmatpush2.bf16.msra.mxu0 %v826
  %1126 = vmatprep.subr.bf16.mxu0 0
  %1127 = vmatpush2.bf16.msra.mxu0 %v825
  %1128 = vmatprep.subr.bf16.mxu0 0
  %1129 = vmatpush2.bf16.msra.mxu0 %v824
  %1130 = vmatprep.subr.bf16.mxu0 0
  %1131 = vmatpush2.bf16.msra.mxu0 %v823
  %1132 = vmatprep.subr.bf16.mxu0 0
  %1133 = vmatpush2.bf16.msra.mxu0 %v822
  %1134 = vmatprep.mubr.bf16.mxu0 %v351
  %1135 = vmatmul.mubr.bf16.gmra.mxu0 %v344
  %v1136 = vpop.f32.mrf.mxu0
  %v1137 = vadd.f32 %v1097, %v1136
  %v1138 = vpop.f32.mrf.mxu0
  %v1139 = vpop.f32.mrf.mxu0
  %v1140 = vpop.f32.mrf.mxu0
  %1141 = vdwg.mxu0
  %1142 = vmatprep.subr.bf16.mxu0 0
  %1143 = vmatpush1.bf16.msra.mxu0 %v837
  %1144 = vmatprep.subr.bf16.mxu0 0
  %1145 = vmatpush1.bf16.msra.mxu0 %v836
  %1146 = vmatprep.subr.bf16.mxu0 0
  %1147 = vmatpush1.bf16.msra.mxu0 %v835
  %1148 = vmatprep.subr.bf16.mxu0 0
  %1149 = vmatpush1.bf16.msra.mxu0 %v834
  %1150 = vmatprep.subr.bf16.mxu0 0
  %1151 = vmatpush1.bf16.msra.mxu0 %v833
  %1152 = vmatprep.subr.bf16.mxu0 0
  %1153 = vmatpush1.bf16.msra.mxu0 %v832
  %1154 = vmatprep.subr.bf16.mxu0 0
  %1155 = vmatpush1.bf16.msra.mxu0 %v831
  %1156 = vmatprep.subr.bf16.mxu0 0
  %1157 = vmatpush1.bf16.msra.mxu0 %v830
  %1158 = vmatprep.subr.bf16.mxu0 0
  %1159 = vmatpush2.bf16.msra.mxu0 %v845
  %1160 = vmatprep.subr.bf16.mxu0 0
  %1161 = vmatpush2.bf16.msra.mxu0 %v844
  %1162 = vmatprep.subr.bf16.mxu0 0
  %1163 = vmatpush2.bf16.msra.mxu0 %v843
  %1164 = vmatprep.subr.bf16.mxu0 0
  %1165 = vmatpush2.bf16.msra.mxu0 %v842
  %1166 = vmatprep.subr.bf16.mxu0 0
  %1167 = vmatpush2.bf16.msra.mxu0 %v841
  %1168 = vmatprep.subr.bf16.mxu0 0
  %1169 = vmatpush2.bf16.msra.mxu0 %v840
  %1170 = vmatprep.subr.bf16.mxu0 0
  %1171 = vmatpush2.bf16.msra.mxu0 %v839
  %1172 = vmatprep.subr.bf16.mxu0 0
  %1173 = vmatpush2.bf16.msra.mxu0 %v838
  %1174 = vmatprep.mubr.bf16.mxu0 %v353
  %1175 = vmatmul.mubr.bf16.gmra.mxu0 %v352
  %v1176 = vpop.f32.mrf.mxu0
  %v1177 = vadd.f32 %v1137, %v1176
  %v1178 = vpop.f32.mrf.mxu0
  %v1179 = vpop.f32.mrf.mxu0
  %v1180 = vpop.f32.mrf.mxu0
  %1181 = vdwg.mxu0
  %v1182 = vld [vmem:[%s4] sm:$0x1]
  %v1184 = vlaneseq
  %v1185 = vshrl.u32 %v1184, 7
  %v1186 = vsub.s32 0, %v1185
  %v1187 = vrot.slane %v1182, %v1186
  %v1189 = vadd.f32 %v1177, %v1187
  %v1190 = vmax.f32 %v1189, 0.0
  %v1191 = vpack.c.bf16 %v1190, %v1190
  %v1192 = vld [vmem:[%s5] sm:$0xf]
  %v1193 = vld [vmem:[%s5 + $0x4] sm:$0xf]
  %v1194 = vld [vmem:[%s5 + $0x8] sm:$0xf]
  %v1195 = vld [vmem:[%s5 + $0xc] sm:$0xf]
  %v1196 = vld [vmem:[%s5 + $0x10] sm:$0xf]
  %v1197 = vld [vmem:[%s5 + $0x14] sm:$0xf]
  %v1198 = vld [vmem:[%s5 + $0x18] sm:$0xf]
  %v1199 = vld [vmem:[%s5 + $0x1c] sm:$0xf]
  %v1200 = vld [vmem:[%s5 + $0x20] sm:$0xf]
  %v1201 = vld [vmem:[%s5 + $0x24] sm:$0xf]
  %v1202 = vld [vmem:[%s5 + $0x28] sm:$0xf]
  %v1203 = vld [vmem:[%s5 + $0x2c] sm:$0xf]
  %v1204 = vld [vmem:[%s5 + $0x30] sm:$0xf]
  %v1205 = vld [vmem:[%s5 + $0x34] sm:$0xf]
  %v1206 = vld [vmem:[%s5 + $0x38] sm:$0xf]
  %v1207 = vld [vmem:[%s5 + $0x3c] sm:$0xf]
  %v1208 = vld [vmem:[%s6] sm:$0x1]
  %v1210 = vlaneseq
  %v1211 = vshrl.u32 %v1210, 7
  %v1212 = vsub.s32 0, %v1211
  %v1213 = vrot.slane %v1208, %v1212
  %v1231 = vunpack.c.l.b16 %v1192
  %v1232 = vunpack.c.l.b16 %v1193
  %v1233 = vunpack.c.l.b16 %v1194
  %v1234 = vunpack.c.l.b16 %v1195
  %v1235 = vunpack.c.l.b16 %v1196
  %v1236 = vunpack.c.l.b16 %v1197
  %v1237 = vunpack.c.l.b16 %v1198
  %v1238 = vunpack.c.l.b16 %v1199
  %v1239 = vunpack.c.l.b16 %v1200
  %v1240 = vunpack.c.l.b16 %v1201
  %v1241 = vunpack.c.l.b16 %v1202
  %v1242 = vunpack.c.l.b16 %v1203
  %v1243 = vunpack.c.l.b16 %v1204
  %v1244 = vunpack.c.l.b16 %v1205
  %v1245 = vunpack.c.l.b16 %v1206
  %v1246 = vunpack.c.l.b16 %v1207
  %v1247 = vpack.c.b16 %v1232, %v1231
  %v1248 = vpack.c.b16 %v1234, %v1233
  %v1249 = vpack.c.b16 %v1236, %v1235
  %v1250 = vpack.c.b16 %v1238, %v1237
  %v1251 = vpack.c.b16 %v1240, %v1239
  %v1252 = vpack.c.b16 %v1242, %v1241
  %v1253 = vpack.c.b16 %v1244, %v1243
  %v1254 = vpack.c.b16 %v1246, %v1245
  %1263 = vmatprep.subr.bf16.mxu0 0
  %1264 = vmatpush1.bf16.msra.mxu0 %v1254
  %1265 = vmatprep.subr.bf16.mxu0 0
  %1266 = vmatpush1.bf16.msra.mxu0 %v1253
  %1267 = vmatprep.subr.bf16.mxu0 0
  %1268 = vmatpush1.bf16.msra.mxu0 %v1252
  %1269 = vmatprep.subr.bf16.mxu0 0
  %1270 = vmatpush1.bf16.msra.mxu0 %v1251
  %1271 = vmatprep.subr.bf16.mxu0 0
  %1272 = vmatpush1.bf16.msra.mxu0 %v1250
  %1273 = vmatprep.subr.bf16.mxu0 0
  %1274 = vmatpush1.bf16.msra.mxu0 %v1249
  %1275 = vmatprep.subr.bf16.mxu0 0
  %1276 = vmatpush1.bf16.msra.mxu0 %v1248
  %1277 = vmatprep.subr.bf16.mxu0 0
  %1278 = vmatpush1.bf16.msra.mxu0 %v1247
  %1279 = vmatprep.subr.bf16.mxu0 0
  %1280 = vmatpush2.bf16.msra.mxu0 0
  %1281 = vmatprep.subr.bf16.mxu0 0
  %1282 = vmatpush2.bf16.msra.mxu0 0
  %1283 = vmatprep.subr.bf16.mxu0 0
  %1284 = vmatpush2.bf16.msra.mxu0 0
  %1285 = vmatprep.subr.bf16.mxu0 0
  %1286 = vmatpush2.bf16.msra.mxu0 0
  %1287 = vmatprep.subr.bf16.mxu0 0
  %1288 = vmatpush2.bf16.msra.mxu0 0
  %1289 = vmatprep.subr.bf16.mxu0 0
  %1290 = vmatpush2.bf16.msra.mxu0 0
  %1291 = vmatprep.subr.bf16.mxu0 0
  %1292 = vmatpush2.bf16.msra.mxu0 0
  %1293 = vmatprep.subr.bf16.mxu0 0
  %1294 = vmatpush2.bf16.msra.mxu0 0
  %1295 = vmatprep.mubr.bf16.mxu0 0
  %1296 = vmatmul.mubr.bf16.gmra.mxu0 %v1191
  %v1297 = vpop.f32.mrf.mxu0
  %v1298 = vadd.f32 %v1213, %v1297
  %v1299 = vpop.f32.mrf.mxu0
  %v1300 = vpop.f32.mrf.mxu0
  %v1301 = vpop.f32.mrf.mxu0
  %1302 = vdwg.mxu0
  %v1303 = vmax.f32 %v1298, 0.0
  %v1304 = vpack.c.bf16 %v1303, %v1303
  %v1305 = vld [vmem:[%s7] sm:$0xf]
  %v1306 = vld [vmem:[%s7 + $0x4] sm:$0xf]
  %v1307 = vld [vmem:[%s7 + $0x8] sm:$0xf]
  %v1308 = vld [vmem:[%s7 + $0xc] sm:$0xf]
  %v1309 = vld [vmem:[%s7 + $0x10] sm:$0xf]
  %v1310 = vld [vmem:[%s7 + $0x14] sm:$0xf]
  %v1311 = vld [vmem:[%s7 + $0x18] sm:$0xf]
  %v1312 = vld [vmem:[%s7 + $0x1c] sm:$0xf]
  %v1313 = vld [vmem:[%s7 + $0x20] sm:$0xf]
  %v1314 = vld [vmem:[%s7 + $0x24] sm:$0xf]
  %v1315 = vld [vmem:[%s7 + $0x28] sm:$0xf]
  %v1316 = vld [vmem:[%s7 + $0x2c] sm:$0xf]
  %v1317 = vld [vmem:[%s7 + $0x30] sm:$0xf]
  %v1318 = vld [vmem:[%s7 + $0x34] sm:$0xf]
  %v1319 = vld [vmem:[%s7 + $0x38] sm:$0xf]
  %v1320 = vld [vmem:[%s7 + $0x3c] sm:$0xf]
  %v1321 = vld [vmem:[#allocation2] sm:$0x1]
  %v1323 = vlaneseq
  %v1324 = vshrl.u32 %v1323, 7
  %v1325 = vsub.s32 0, %v1324
  %v1326 = vrot.slane %v1321, %v1325
  %v1344 = vunpack.c.l.b16 %v1305
  %v1345 = vunpack.c.l.b16 %v1306
  %v1346 = vunpack.c.l.b16 %v1307
  %v1347 = vunpack.c.l.b16 %v1308
  %v1348 = vunpack.c.l.b16 %v1309
  %v1349 = vunpack.c.l.b16 %v1310
  %v1350 = vunpack.c.l.b16 %v1311
  %v1351 = vunpack.c.l.b16 %v1312
  %v1352 = vunpack.c.l.b16 %v1313
  %v1353 = vunpack.c.l.b16 %v1314
  %v1354 = vunpack.c.l.b16 %v1315
  %v1355 = vunpack.c.l.b16 %v1316
  %v1356 = vunpack.c.l.b16 %v1317
  %v1357 = vunpack.c.l.b16 %v1318
  %v1358 = vunpack.c.l.b16 %v1319
  %v1359 = vunpack.c.l.b16 %v1320
  %v1360 = vpack.c.b16 %v1345, %v1344
  %v1361 = vpack.c.b16 %v1347, %v1346
  %v1362 = vpack.c.b16 %v1349, %v1348
  %v1363 = vpack.c.b16 %v1351, %v1350
  %v1364 = vpack.c.b16 %v1353, %v1352
  %v1365 = vpack.c.b16 %v1355, %v1354
  %v1366 = vpack.c.b16 %v1357, %v1356
  %v1367 = vpack.c.b16 %v1359, %v1358
  %1376 = vmatprep.subr.bf16.mxu0 0
  %1377 = vmatpush1.bf16.msra.mxu0 %v1367
  %1378 = vmatprep.subr.bf16.mxu0 0
  %1379 = vmatpush1.bf16.msra.mxu0 %v1366
  %1380 = vmatprep.subr.bf16.mxu0 0
  %1381 = vmatpush1.bf16.msra.mxu0 %v1365
  %1382 = vmatprep.subr.bf16.mxu0 0
  %1383 = vmatpush1.bf16.msra.mxu0 %v1364
  %1384 = vmatprep.subr.bf16.mxu0 0
  %1385 = vmatpush1.bf16.msra.mxu0 %v1363
  %1386 = vmatprep.subr.bf16.mxu0 0
  %1387 = vmatpush1.bf16.msra.mxu0 %v1362
  %1388 = vmatprep.subr.bf16.mxu0 0
  %1389 = vmatpush1.bf16.msra.mxu0 %v1361
  %1390 = vmatprep.subr.bf16.mxu0 0
  %1391 = vmatpush1.bf16.msra.mxu0 %v1360
  %1392 = vmatprep.subr.bf16.mxu0 0
  %1393 = vmatpush2.bf16.msra.mxu0 0
  %1394 = vmatprep.subr.bf16.mxu0 0
  %1395 = vmatpush2.bf16.msra.mxu0 0
  %1396 = vmatprep.subr.bf16.mxu0 0
  %1397 = vmatpush2.bf16.msra.mxu0 0
  %1398 = vmatprep.subr.bf16.mxu0 0
  %1399 = vmatpush2.bf16.msra.mxu0 0
  %1400 = vmatprep.subr.bf16.mxu0 0
  %1401 = vmatpush2.bf16.msra.mxu0 0
  %1402 = vmatprep.subr.bf16.mxu0 0
  %1403 = vmatpush2.bf16.msra.mxu0 0
  %1404 = vmatprep.subr.bf16.mxu0 0
  %1405 = vmatpush2.bf16.msra.mxu0 0
  %1406 = vmatprep.subr.bf16.mxu0 0
  %1407 = vmatpush2.bf16.msra.mxu0 0
  %1408 = vmatprep.mubr.bf16.mxu0 0
  %1409 = vmatmul.mubr.bf16.gmra.mxu0 %v1304
  %v1410 = vpop.f32.mrf.mxu0
  %v1411 = vadd.f32 %v1326, %v1410
  %v1412 = vpop.f32.mrf.mxu0
  %v1413 = vpop.f32.mrf.mxu0
  %v1414 = vpop.f32.mrf.mxu0
  %1415 = vdwg.mxu0
  %vm1416 = vcmask 1024
  %1417 = vst.msk [vmem:[%s9] sm:$0x3] %vm1416, %v1411
  // Predicated region
  $region38: #{critic_forward.7} parent=0 // pred_check
    _
  $region39: #{critic_forward.7} parent=0 // pred_check_branch
    %1419 = sbr.rel (0) target = $region41
  $region40: #{critic_forward.7} parent=0 // pred_region
    _
  $region41: #{critic_forward.7} parent=0 // pred_fallthru
    _
  // Predicated region
  $region42: #{critic_forward.7} parent=0 // pred_check
    _
  $region43: #{critic_forward.7} parent=0 // pred_check_branch
    %1421 = sbr.rel (0) target = $region45
  $region44: #{critic_forward.7} parent=0 // pred_region
    _
  $region45: #{critic_forward.7} parent=0 // pred_fallthru
    _

</llo_original>
